<compile_context>
chip_gen: v6e
topology: v6e:2x2x1
jax: 0.10.0
libtpu: 0.0.40
codegen_flags: <defaults>
</compile_context>

<pallas_src>
import functools

import jax
import jax.numpy as jnp
from jax import lax
from jax.experimental import pallas as pl
from jax.experimental.pallas import tpu as pltpu


# ----------------------------------------------------------------------------
# Pallas kernel: B images per grid step, everything lane-dense & MXU-resident.
# ----------------------------------------------------------------------------
def _depthwise_block_kernel(
    x_ref,      # (B*H,  W*Cin)        bf16  unpadded lane-dense input rows
    rs_ref,     # (3, B*Ho, B*H)       bf16  row selection per 3x3 row (pad+stride baked in)
    w_ref,      # (3, W*Cin, Wo*Cout)  bf16  depthwise(+BN) x pointwise(+BN) folded weights
    b_ref,      # (1, Wo*Cout)         f32   folded bias (dw BN bias pushed through the 1x1)
    sew1_ref,   # (Wo*Cout, Ch)        bf16  SE reduce FC (channel-sum folded in)
    seb1_ref,   # (1, Ch)              f32
    sew2_ref,   # (Ch, Wo*Cout)        bf16  SE expand FC (lane tiling folded in)
    seb2_ref,   # (1, Wo*Cout)         f32
    prow_ref,   # (B, B*Ho)            bf16  per-image row pooling
    pexp_ref,   # (B*Ho, B)            bf16  per-image row broadcast (unused when B == 1)
    out_ref,    # (B*Ho, Wo*Cout)      f32
    *, bsz, out_h, out_w,
):
    x = x_ref[...]

    # ---- depthwise 3x3 (+BN, act=None) -> pointwise 1x1 (+BN): 2x3 MXU matmuls.
    # Row tap i (incl. zero padding and row stride) is selected by rs[i] on the
    # MXU; column taps, column padding, column stride and the 1x1 weights are
    # baked into w[i]: no VPU MAC loop, no lane-shifted slices, no strided
    # sublane reads.
    z = None
    for i in range(3):
        rows = jnp.dot(rs_ref[i], x,
                       preferred_element_type=jnp.float32).astype(jnp.bfloat16)
        zi = jnp.dot(rows, w_ref[i], preferred_element_type=jnp.float32)
        z = zi if z is None else z + zi
    # TODO(synk): ConvBnAct's default activation assumed to be ReLU (its
    # definition is not shown in the reference snippet).
    z = jnp.maximum(z + b_ref[...], 0.0)                         # (B*Ho, Wo*Cout) f32

    # ---- SE block: GAP -> FC -> ReLU -> FC -> sigmoid -> channel scale.
    # TODO(synk): SEBlock definition not shown; standard squeeze-excitation
    # with reduction ratio 4 assumed.
    zb = z.astype(jnp.bfloat16)
    rowsum = jnp.dot(prow_ref[...], zb,
                     preferred_element_type=jnp.float32)         # (B, Wo*Cout)
    hid = jnp.maximum(
        jnp.dot(rowsum.astype(jnp.bfloat16), sew1_ref[...],
                preferred_element_type=jnp.float32) * (1.0 / (out_h * out_w))
        + seb1_ref[...], 0.0)                                    # (B, Ch)
    srow = jax.nn.sigmoid(
        jnp.dot(hid.astype(jnp.bfloat16), sew2_ref[...],
                preferred_element_type=jnp.float32) + seb2_ref[...])  # (B, Wo*Cout)
    if bsz == 1:
        scale = srow                                             # broadcasts over rows
    else:
        scale = jnp.dot(pexp_ref[...], srow.astype(jnp.bfloat16),
                        preferred_element_type=jnp.float32)      # (B*Ho, Wo*Cout)
    out_ref[...] = z * scale                                     # lane-dense store


# ----------------------------------------------------------------------------
# Parameter construction (deterministic, inference-mode BN folded)
# ----------------------------------------------------------------------------
def make_params(key, in_c, out_c, se_reduction=4):
    ks = jax.random.split(key, 12)
    eps = 1e-5

    # depthwise conv (groups=in_c): one 3x3 filter per channel
    dw_w = jax.random.normal(ks[0], (3, 3, in_c), jnp.float32) * 0.2
    dw_gamma = 1.0 + 0.1 * jax.random.normal(ks[1], (in_c,), jnp.float32)
    dw_beta = 0.1 * jax.random.normal(ks[2], (in_c,), jnp.float32)
    dw_mean = 0.1 * jax.random.normal(ks[3], (in_c,), jnp.float32)
    dw_var = jnp.abs(jax.random.normal(ks[4], (in_c,), jnp.float32)) + 0.5
    dw_scale = dw_gamma / jnp.sqrt(dw_var + eps)
    dw_w_f = dw_w * dw_scale                                # (3,3,Cin), BN scale folded
    dw_b_f = (dw_beta - dw_mean * dw_scale).reshape(1, in_c)

    # pointwise 1x1 conv weight (stored as (in_c, out_c) for x @ W)
    pw_w = jax.random.normal(ks[5], (in_c, out_c), jnp.float32) * 0.2
    pw_gamma = 1.0 + 0.1 * jax.random.normal(ks[6], (out_c,), jnp.float32)
    pw_beta = 0.1 * jax.random.normal(ks[7], (out_c,), jnp.float32)
    pw_mean = 0.1 * jax.random.normal(ks[8], (out_c,), jnp.float32)
    pw_var = jnp.abs(jax.random.normal(ks[9], (out_c,), jnp.float32)) + 0.5
    pw_scale = pw_gamma / jnp.sqrt(pw_var + eps)
    pw_w_f = pw_w * pw_scale[None, :]
    pw_b_f = (pw_beta - pw_mean * pw_scale).reshape(1, out_c)

    hidden = max(1, out_c // se_reduction)
    se_w1 = jax.random.normal(ks[10], (out_c, hidden), jnp.float32) * 0.3
    se_b1 = jnp.zeros((1, hidden), jnp.float32)
    se_w2 = jax.random.normal(ks[11], (hidden, out_c), jnp.float32) * 0.3
    se_b2 = jnp.zeros((1, out_c), jnp.float32)

    return dict(dw_w=dw_w_f, dw_b=dw_b_f, pw_w=pw_w_f, pw_b=pw_b_f,
                se_w1=se_w1, se_b1=se_b1, se_w2=se_w2, se_b2=se_b2)


# ----------------------------------------------------------------------------
# Batching / constant construction
# ----------------------------------------------------------------------------
def _choose_imgs_per_step(n, out_h, target_rows=256):
    """Images per grid step: grow M = B*Ho toward the MXU height while keeping
    >= 2 grid steps so v7x's two TensorCores both get work."""
    best = 1
    for b in range(1, n + 1):
        if n % b:
            continue
        if n // b < min(2, n):          # keep >= 2 parallel grid steps
            continue
        if b * out_h <= target_rows:
            best = b
    return best


def _prep_operands(params, *, stride, h, w, bsz):
    """Small one-off constants that make the kernel lane-dense and MXU-only.

    NOTE: W_i is (W*Cin, Wo*Cout) -- an O(W^2) footprint.  Fine at these toy
    sizes (~50 KiB total) but for real shapes (e.g. 56x56, C=64->128) switch to
    a dense (Cin, Cout) weight with a (Ho*Wo, Cin) activation layout / W-tiling.
    TODO(synk): dense-weight formulation for large spatial extents.
    """
    c_in, c_out = params["pw_w"].shape
    pad = 1                                     # autopad(3, 1, 1) == 1
    out_h = (h + 2 * pad - 3) // stride + 1
    out_w = (w + 2 * pad - 3) // stride + 1

    dw = params["dw_w"]                         # (3, 3, Cin), BN scale folded
    pw = params["pw_w"]                         # (Cin, Cout), BN scale folded

    # Fused depthwise x pointwise weight, one matrix per 3x3 kernel row i:
    #   W_i[wcol*Cin + ci, ow*Cout + co] = dw[i, j, ci] * pw[ci, co]
    # with j = wcol - (ow*stride - pad); taps that fall in the zero padding are
    # simply absent, so no jnp.pad of the input is needed.
    wcol = jnp.arange(w)
    ow = jnp.arange(out_w)
    j = wcol[:, None] - (ow[None, :] * stride - pad)            # (W, Wo)
    valid = ((j >= 0) & (j < 3)).astype(jnp.float32)
    jc = jnp.clip(j, 0, 2)
    w_rows = []
    for i in range(3):
        tap = dw[i][jc] * valid[..., None]                      # (W, Wo, Cin)
        wi = jnp.einsum("woc,cd->wcod", tap, pw)                # (W, Cin, Wo, Cout)
        w_rows.append(wi.reshape(w * c_in, out_w * c_out))
    wmat = jnp.stack(w_rows).astype(jnp.bfloat16)               # (3, W*Cin, Wo*Cout)

    # Row-selection matrices (one per kernel row i), block-diagonal over the
    # images of one grid step; they implement the zero padding and the row
    # stride on the (otherwise idle) MXU instead of shifted/strided sublane reads.
    oh = jnp.arange(out_h)
    rs_rows = []
    for i in range(3):
        r = oh * stride + i - pad                               # source row (unpadded)
        ok = ((r >= 0) & (r < h)).astype(jnp.float32)
        ri = jnp.zeros((out_h, h), jnp.float32).at[oh, jnp.clip(r, 0, h - 1)].set(ok)
        rs_rows.append(jnp.kron(jnp.eye(bsz, dtype=jnp.float32), ri))
    rs = jnp.stack(rs_rows).astype(jnp.bfloat16)                # (3, B*Ho, B*H)

    # Depthwise BN bias folds linearly into the pointwise bias (act=None between).
    bias = params["pw_b"] + params["dw_b"] @ pw                 # (1, Cout)
    bias = jnp.tile(bias, (1, out_w))                           # (1, Wo*Cout) f32

    # SE constants: fold the lane-wise channel-sum / channel-broadcast matrices
    # straight into the SE FC weights (ReLU/sigmoid commute with the tiling).
    cred = jnp.tile(jnp.eye(c_out, dtype=jnp.float32), (out_w, 1))   # (Wo*Cout, Cout)
    cexp = jnp.tile(jnp.eye(c_out, dtype=jnp.float32), (1, out_w))   # (Cout, Wo*Cout)
    sew1 = (cred @ params["se_w1"]).astype(jnp.bfloat16)             # (Wo*Cout, Ch)
    seb1 = params["se_b1"]                                           # (1, Ch) f32
    sew2 = (params["se_w2"] @ cexp).astype(jnp.bfloat16)             # (Ch, Wo*Cout)
    seb2 = jnp.tile(params["se_b2"], (1, out_w))                     # (1, Wo*Cout) f32

    # Per-image global-average-pool / broadcast over the rows of one grid step.
    prow = jnp.kron(jnp.eye(bsz, dtype=jnp.float32),
                    jnp.ones((1, out_h), jnp.float32)).astype(jnp.bfloat16)  # (B, B*Ho)
    pexp = jnp.kron(jnp.eye(bsz, dtype=jnp.float32),
                    jnp.ones((out_h, 1), jnp.float32)).astype(jnp.bfloat16)  # (B*Ho, B)

    return rs, wmat, bias, sew1, seb1, sew2, seb2, prow, pexp, out_h, out_w


# ----------------------------------------------------------------------------
# NHWC core (no pad / transpose glue) + thin NCHW adapter
# ----------------------------------------------------------------------------
@functools.partial(jax.jit, static_argnames=("stride", "single_buffer_consts"))
def depthwise_forward_nhwc(x_nhwc, params, stride=1, single_buffer_consts=True):
    n, h, w, c_in = x_nhwc.shape
    c_out = params["pw_w"].shape[1]
    pad = 1
    out_h = (h + 2 * pad - 3) // stride + 1

    bsz = _choose_imgs_per_step(n, out_h)
    steps = n // bsz

    (rs, wmat, bias, sew1, seb1, sew2, seb2, prow, pexp,
     out_h, out_w) = _prep_operands(params, stride=stride, h=h, w=w, bsz=bsz)

    # bf16 input halves the per-step DMA bytes; the dim merge is a free reshape.
    x_slab = x_nhwc.astype(jnp.bfloat16).reshape(n * h, w * c_in)

    kernel = functools.partial(_depthwise_block_kernel, bsz=bsz,
                               out_h=out_h, out_w=out_w)

    def const_spec(arr):
        nd = arr.ndim
        imap = lambda g, _nd=nd: (0,) * _nd
        if single_buffer_consts:
            # fetched once (constant index map) -> one VMEM buffer is enough
            return pl.BlockSpec(arr.shape, imap, pipeline_mode=pl.Buffered(1))
        return pl.BlockSpec(arr.shape, imap)

    consts = (rs, wmat, bias, sew1, seb1, sew2, seb2, prow, pexp)

    grid_spec = pltpu.PrefetchScalarGridSpec(
        num_scalar_prefetch=0,
        grid=(steps,),
        in_specs=[pl.BlockSpec((bsz * h, w * c_in), lambda g: (g, 0))]
                + [const_spec(c) for c in consts],
        # Wo*Cout == 128 here; keep it a multiple of 128 for non-toy shapes so
        # stores stay unmasked lane-dense vst's.
        out_specs=pl.BlockSpec((bsz * out_h, out_w * c_out), lambda g: (g, 0)),
    )

    out_slab = pl.pallas_call(
        kernel,
        out_shape=jax.ShapeDtypeStruct((n * out_h, out_w * c_out), jnp.float32),
        grid_spec=grid_spec,
        compiler_params=pltpu.CompilerParams(
            # batch axis split across TensorCores on v7x (no-op on v5e/v6e)
            dimension_semantics=("parallel",),
            # per-step working set is << 1 MiB here; 32 MiB keeps headroom
            # under v7x's 64 MiB physical VMEM as well as v5e/v6e's 128 MiB.
            vmem_limit_bytes=32 * 1024 * 1024,
        ),
    )(x_slab, *consts)

    return out_slab.reshape(n, out_h, out_w, c_out)


def depthwise_forward(x_nchw, params, stride=1, single_buffer_consts=True):
    """NCHW adapter kept only for parity with the PyTorch module convention.
    TODO(synk): in an NHWC pipeline call depthwise_forward_nhwc directly and
    these two transpose HBM passes disappear."""
    x_nhwc = jnp.transpose(x_nchw, (0, 2, 3, 1))
    out = depthwise_forward_nhwc(x_nhwc, params, stride=stride,
                                 single_buffer_consts=single_buffer_consts)
    return jnp.transpose(out, (0, 3, 1, 2))


# ----------------------------------------------------------------------------
# Pure-JAX f32 reference of the same (BN-folded) forward pass.
# ----------------------------------------------------------------------------
def depthwise_reference(x_nchw, params, stride=1):
    c_in = x_nchw.shape[1]
    c_out = params["pw_w"].shape[1]
    x = jnp.transpose(x_nchw, (0, 2, 3, 1))
    y = lax.conv_general_dilated(
        x, params["dw_w"][:, :, None, :], window_strides=(stride, stride),
        padding=((1, 1), (1, 1)), dimension_numbers=("NHWC", "HWIO", "NHWC"),
        feature_group_count=c_in) + params["dw_b"].reshape(1, 1, 1, c_in)
    p = jnp.einsum("nhwc,cd->nhwd", y, params["pw_w"]) \
        + params["pw_b"].reshape(1, 1, 1, c_out)
    p = jnp.maximum(p, 0.0)
    pooled = p.mean(axis=(1, 2))
    hid = jnp.maximum(pooled @ params["se_w1"] + params["se_b1"], 0.0)
    s = jax.nn.sigmoid(hid @ params["se_w2"] + params["se_b2"])
    out = p * s[:, None, None, :]
    return jnp.transpose(out, (0, 3, 1, 2))


if __name__ == "__main__":
    key = jax.random.PRNGKey(0)
    k_x, k_p = jax.random.split(key)

    N, IN_C, OUT_C, H, W = 2, 4, 8, 16, 16
    x = jax.random.normal(k_x, (N, IN_C, H, W), jnp.float32)
    params = make_params(k_p, IN_C, OUT_C)

    try:
        out = depthwise_forward(x, params, stride=1, single_buffer_consts=True)
        jax.block_until_ready(out)
    except Exception:
        # pipeline_mode=pl.Buffered(1) single-buffering of the constants is a
        # newer Pallas feature; fall back to default double buffering if the
        # installed JAX does not support it.
        out = depthwise_forward(x, params, stride=1, single_buffer_consts=False)
        jax.block_until_ready(out)

    assert out.shape == (N, OUT_C, H, W), out.shape

    # bf16 MXU operands + folded weights: expect ~1e-2-scale agreement with the
    # pure-f32 XLA reference.
    ref = depthwise_reference(x, params, stride=1)
    err = float(jnp.max(jnp.abs(out - ref)))
    ref_scale = float(jnp.max(jnp.abs(ref)))
    assert err <= 0.05 * ref_scale + 0.05, (err, ref_scale)

    print("KERNEL_OK")
</pallas_src>

<mosaic_0001>
module attributes {stable_mosaic.version = 11 : i64} {
  func.func @_depthwise_block_kernel(%arg0: i32, %arg1: memref<16x64xbf16, #tpu.memory_space<vmem>>, %arg2: memref<3x16x16xbf16, #tpu.memory_space<vmem>>, %arg3: memref<3x64x128xbf16, #tpu.memory_space<vmem>>, %arg4: memref<1x128xf32, #tpu.memory_space<vmem>>, %arg5: memref<128x2xbf16, #tpu.memory_space<vmem>>, %arg6: memref<1x2xf32, #tpu.memory_space<vmem>>, %arg7: memref<2x128xbf16, #tpu.memory_space<vmem>>, %arg8: memref<1x128xf32, #tpu.memory_space<vmem>>, %arg9: memref<1x16xbf16, #tpu.memory_space<vmem>>, %arg10: memref<16x1xbf16, #tpu.memory_space<vmem>>, %arg11: memref<16x128xf32, #tpu.memory_space<vmem>>) attributes {dimension_semantics = [#tpu.dimension_semantics<parallel>], iteration_bounds = array<i64: 2>, scalar_prefetch = 0 : i64, scratch_operands = 0 : i64, tpu.core_type = #tpu.core_type<tc>, window_params = [{transform_indices = @transform_0, window_bounds = array<i64: 16, 64>}, {pipeline_mode = #tpu.pipeline_mode<synchronous>, transform_indices = @transform_1, window_bounds = array<i64: 3, 16, 16>}, {pipeline_mode = #tpu.pipeline_mode<synchronous>, transform_indices = @transform_2, window_bounds = array<i64: 3, 64, 128>}, {pipeline_mode = #tpu.pipeline_mode<synchronous>, transform_indices = @transform_3, window_bounds = array<i64: 1, 128>}, {pipeline_mode = #tpu.pipeline_mode<synchronous>, transform_indices = @transform_4, window_bounds = array<i64: 128, 2>}, {pipeline_mode = #tpu.pipeline_mode<synchronous>, transform_indices = @transform_5, window_bounds = array<i64: 1, 2>}, {pipeline_mode = #tpu.pipeline_mode<synchronous>, transform_indices = @transform_6, window_bounds = array<i64: 2, 128>}, {pipeline_mode = #tpu.pipeline_mode<synchronous>, transform_indices = @transform_7, window_bounds = array<i64: 1, 128>}, {pipeline_mode = #tpu.pipeline_mode<synchronous>, transform_indices = @transform_8, window_bounds = array<i64: 1, 16>}, {pipeline_mode = #tpu.pipeline_mode<synchronous>, transform_indices = @transform_9, window_bounds = array<i64: 16, 1>}, {transform_indices = @transform_10, window_bounds = array<i64: 16, 128>}]} {
    %c0 = arith.constant 0 : index
    %c0_0 = arith.constant 0 : index
    %0 = vector.load %arg1[%c0, %c0_0] : memref<16x64xbf16, #tpu.memory_space<vmem>>, vector<16x64xbf16>
    %c0_1 = arith.constant 0 : index
    %c0_2 = arith.constant 0 : index
    %c0_3 = arith.constant 0 : index
    %1 = vector.load %arg2[%c0_1, %c0_2, %c0_3] : memref<3x16x16xbf16, #tpu.memory_space<vmem>>, vector<1x16x16xbf16>
    %2 = vector.shape_cast %1 : vector<1x16x16xbf16> to vector<16x16xbf16>
    %cst = arith.constant dense<0.000000e+00> : vector<16x64xf32>
    %3 = tpu.matmul %2, %0, %cst {dimension_numbers = #tpu.dot_dimension_numbers<[1], [0], [0], [1], [0, 0, 1, 1], [], []>} : vector<16x16xbf16>, vector<16x64xbf16>, vector<16x64xf32> -> vector<16x64xf32>
    %4 = arith.truncf %3 : vector<16x64xf32> to vector<16x64xbf16>
    %c0_4 = arith.constant 0 : index
    %c0_5 = arith.constant 0 : index
    %c0_6 = arith.constant 0 : index
    %5 = vector.load %arg3[%c0_4, %c0_5, %c0_6] : memref<3x64x128xbf16, #tpu.memory_space<vmem>>, vector<1x64x128xbf16>
    %6 = vector.shape_cast %5 : vector<1x64x128xbf16> to vector<64x128xbf16>
    %cst_7 = arith.constant dense<0.000000e+00> : vector<16x128xf32>
    %7 = tpu.matmul %4, %6, %cst_7 {dimension_numbers = #tpu.dot_dimension_numbers<[1], [0], [0], [1], [0, 0, 1, 1], [], []>} : vector<16x64xbf16>, vector<64x128xbf16>, vector<16x128xf32> -> vector<16x128xf32>
    %c1 = arith.constant 1 : index
    %c0_8 = arith.constant 0 : index
    %c0_9 = arith.constant 0 : index
    %8 = vector.load %arg2[%c1, %c0_8, %c0_9] : memref<3x16x16xbf16, #tpu.memory_space<vmem>>, vector<1x16x16xbf16>
    %9 = vector.shape_cast %8 : vector<1x16x16xbf16> to vector<16x16xbf16>
    %cst_10 = arith.constant dense<0.000000e+00> : vector<16x64xf32>
    %10 = tpu.matmul %9, %0, %cst_10 {dimension_numbers = #tpu.dot_dimension_numbers<[1], [0], [0], [1], [0, 0, 1, 1], [], []>} : vector<16x16xbf16>, vector<16x64xbf16>, vector<16x64xf32> -> vector<16x64xf32>
    %11 = arith.truncf %10 : vector<16x64xf32> to vector<16x64xbf16>
    %c1_11 = arith.constant 1 : index
    %c0_12 = arith.constant 0 : index
    %c0_13 = arith.constant 0 : index
    %12 = vector.load %arg3[%c1_11, %c0_12, %c0_13] : memref<3x64x128xbf16, #tpu.memory_space<vmem>>, vector<1x64x128xbf16>
    %13 = vector.shape_cast %12 : vector<1x64x128xbf16> to vector<64x128xbf16>
    %cst_14 = arith.constant dense<0.000000e+00> : vector<16x128xf32>
    %14 = tpu.matmul %11, %13, %cst_14 {dimension_numbers = #tpu.dot_dimension_numbers<[1], [0], [0], [1], [0, 0, 1, 1], [], []>} : vector<16x64xbf16>, vector<64x128xbf16>, vector<16x128xf32> -> vector<16x128xf32>
    %15 = arith.addf %7, %14 : vector<16x128xf32>
    %c2 = arith.constant 2 : index
    %c0_15 = arith.constant 0 : index
    %c0_16 = arith.constant 0 : index
    %16 = vector.load %arg2[%c2, %c0_15, %c0_16] : memref<3x16x16xbf16, #tpu.memory_space<vmem>>, vector<1x16x16xbf16>
    %17 = vector.shape_cast %16 : vector<1x16x16xbf16> to vector<16x16xbf16>
    %cst_17 = arith.constant dense<0.000000e+00> : vector<16x64xf32>
    %18 = tpu.matmul %17, %0, %cst_17 {dimension_numbers = #tpu.dot_dimension_numbers<[1], [0], [0], [1], [0, 0, 1, 1], [], []>} : vector<16x16xbf16>, vector<16x64xbf16>, vector<16x64xf32> -> vector<16x64xf32>
    %19 = arith.truncf %18 : vector<16x64xf32> to vector<16x64xbf16>
    %c2_18 = arith.constant 2 : index
    %c0_19 = arith.constant 0 : index
    %c0_20 = arith.constant 0 : index
    %20 = vector.load %arg3[%c2_18, %c0_19, %c0_20] : memref<3x64x128xbf16, #tpu.memory_space<vmem>>, vector<1x64x128xbf16>
    %21 = vector.shape_cast %20 : vector<1x64x128xbf16> to vector<64x128xbf16>
    %cst_21 = arith.constant dense<0.000000e+00> : vector<16x128xf32>
    %22 = tpu.matmul %19, %21, %cst_21 {dimension_numbers = #tpu.dot_dimension_numbers<[1], [0], [0], [1], [0, 0, 1, 1], [], []>} : vector<16x64xbf16>, vector<64x128xbf16>, vector<16x128xf32> -> vector<16x128xf32>
    %23 = arith.addf %15, %22 : vector<16x128xf32>
    %c0_22 = arith.constant 0 : index
    %c0_23 = arith.constant 0 : index
    %24 = vector.load %arg4[%c0_22, %c0_23] : memref<1x128xf32, #tpu.memory_space<vmem>>, vector<1x128xf32>
    %25 = vector.broadcast %24 : vector<1x128xf32> to vector<16x128xf32>
    %26 = arith.addf %23, %25 : vector<16x128xf32>
    %cst_24 = arith.constant 0.000000e+00 : f32
    %27 = vector.broadcast %cst_24 : f32 to vector<16x128xf32>
    %28 = arith.maximumf %26, %27 : vector<16x128xf32>
    %29 = arith.truncf %28 : vector<16x128xf32> to vector<16x128xbf16>
    %c0_25 = arith.constant 0 : index
    %c0_26 = arith.constant 0 : index
    %30 = vector.load %arg9[%c0_25, %c0_26] : memref<1x16xbf16, #tpu.memory_space<vmem>>, vector<1x16xbf16>
    %cst_27 = arith.constant dense<0.000000e+00> : vector<1x128xf32>
    %31 = tpu.matmul %30, %29, %cst_27 {dimension_numbers = #tpu.dot_dimension_numbers<[1], [0], [0], [1], [0, 0, 1, 1], [], []>} : vector<1x16xbf16>, vector<16x128xbf16>, vector<1x128xf32> -> vector<1x128xf32>
    %32 = arith.truncf %31 : vector<1x128xf32> to vector<1x128xbf16>
    %c0_28 = arith.constant 0 : index
    %c0_29 = arith.constant 0 : index
    %33 = vector.load %arg5[%c0_28, %c0_29] : memref<128x2xbf16, #tpu.memory_space<vmem>>, vector<128x2xbf16>
    %cst_30 = arith.constant dense<0.000000e+00> : vector<1x2xf32>
    %34 = tpu.matmul %32, %33, %cst_30 {dimension_numbers = #tpu.dot_dimension_numbers<[1], [0], [0], [1], [0, 0, 1, 1], [], []>} : vector<1x128xbf16>, vector<128x2xbf16>, vector<1x2xf32> -> vector<1x2xf32>
    %cst_31 = arith.constant 3.906250e-03 : f32
    %35 = vector.broadcast %cst_31 : f32 to vector<1x2xf32>
    %36 = arith.mulf %34, %35 : vector<1x2xf32>
    %c0_32 = arith.constant 0 : index
    %c0_33 = arith.constant 0 : index
    %37 = vector.load %arg6[%c0_32, %c0_33] : memref<1x2xf32, #tpu.memory_space<vmem>>, vector<1x2xf32>
    %38 = arith.addf %36, %37 : vector<1x2xf32>
    %cst_34 = arith.constant 0.000000e+00 : f32
    %39 = vector.broadcast %cst_34 : f32 to vector<1x2xf32>
    %40 = arith.maximumf %38, %39 : vector<1x2xf32>
    %41 = arith.truncf %40 : vector<1x2xf32> to vector<1x2xbf16>
    %c0_35 = arith.constant 0 : index
    %c0_36 = arith.constant 0 : index
    %42 = vector.load %arg7[%c0_35, %c0_36] : memref<2x128xbf16, #tpu.memory_space<vmem>>, vector<2x128xbf16>
    %cst_37 = arith.constant dense<0.000000e+00> : vector<1x128xf32>
    %43 = tpu.matmul %41, %42, %cst_37 {dimension_numbers = #tpu.dot_dimension_numbers<[1], [0], [0], [1], [0, 0, 1, 1], [], []>} : vector<1x2xbf16>, vector<2x128xbf16>, vector<1x128xf32> -> vector<1x128xf32>
    %c0_38 = arith.constant 0 : index
    %c0_39 = arith.constant 0 : index
    %44 = vector.load %arg8[%c0_38, %c0_39] : memref<1x128xf32, #tpu.memory_space<vmem>>, vector<1x128xf32>
    %45 = arith.addf %43, %44 : vector<1x128xf32>
    %46 = arith.negf %45 : vector<1x128xf32>
    %47 = math.exp %46 : vector<1x128xf32>
    %cst_40 = arith.constant 1.000000e+00 : f32
    %48 = vector.broadcast %cst_40 : f32 to vector<1x128xf32>
    %49 = arith.addf %48, %47 : vector<1x128xf32>
    %50 = arith.divf %48, %49 : vector<1x128xf32>
    %51 = vector.broadcast %50 : vector<1x128xf32> to vector<16x128xf32>
    %52 = arith.mulf %28, %51 : vector<16x128xf32>
    %c0_41 = arith.constant 0 : index
    %c0_42 = arith.constant 0 : index
    %53 = vector.load %arg11[%c0_41, %c0_42] : memref<16x128xf32, #tpu.memory_space<vmem>>, vector<16x128xf32>
    tpu.vector_store %arg11[%c0_41, %c0_42], %52 {strides = array<i32>} : memref<16x128xf32, #tpu.memory_space<vmem>>, vector<16x128xf32>,
    return
  }
  func.func @transform_0(%arg0: i32) -> (i32, i32) {
    %c0_i32 = arith.constant 0 : i32
    %c0_i32_0 = arith.constant 0 : i32
    return %arg0, %c0_i32 : i32, i32
  }
  func.func @transform_1(%arg0: i32) -> (i32, i32, i32) {
    %c0_i32 = arith.constant 0 : i32
    %c0_i32_0 = arith.constant 0 : i32
    %c0_i32_1 = arith.constant 0 : i32
    %c0_i32_2 = arith.constant 0 : i32
    return %c0_i32, %c0_i32_0, %c0_i32_1 : i32, i32, i32
  }
  func.func @transform_2(%arg0: i32) -> (i32, i32, i32) {
    %c0_i32 = arith.constant 0 : i32
    %c0_i32_0 = arith.constant 0 : i32
    %c0_i32_1 = arith.constant 0 : i32
    %c0_i32_2 = arith.constant 0 : i32
    return %c0_i32, %c0_i32_0, %c0_i32_1 : i32, i32, i32
  }
  func.func @transform_3(%arg0: i32) -> (i32, i32) {
    %c0_i32 = arith.constant 0 : i32
    %c0_i32_0 = arith.constant 0 : i32
    %c0_i32_1 = arith.constant 0 : i32
    return %c0_i32, %c0_i32_0 : i32, i32
  }
  func.func @transform_4(%arg0: i32) -> (i32, i32) {
    %c0_i32 = arith.constant 0 : i32
    %c0_i32_0 = arith.constant 0 : i32
    %c0_i32_1 = arith.constant 0 : i32
    return %c0_i32, %c0_i32_0 : i32, i32
  }
  func.func @transform_5(%arg0: i32) -> (i32, i32) {
    %c0_i32 = arith.constant 0 : i32
    %c0_i32_0 = arith.constant 0 : i32
    %c0_i32_1 = arith.constant 0 : i32
    return %c0_i32, %c0_i32_0 : i32, i32
  }
  func.func @transform_6(%arg0: i32) -> (i32, i32) {
    %c0_i32 = arith.constant 0 : i32
    %c0_i32_0 = arith.constant 0 : i32
    %c0_i32_1 = arith.constant 0 : i32
    return %c0_i32, %c0_i32_0 : i32, i32
  }
  func.func @transform_7(%arg0: i32) -> (i32, i32) {
    %c0_i32 = arith.constant 0 : i32
    %c0_i32_0 = arith.constant 0 : i32
    %c0_i32_1 = arith.constant 0 : i32
    return %c0_i32, %c0_i32_0 : i32, i32
  }
  func.func @transform_8(%arg0: i32) -> (i32, i32) {
    %c0_i32 = arith.constant 0 : i32
    %c0_i32_0 = arith.constant 0 : i32
    %c0_i32_1 = arith.constant 0 : i32
    return %c0_i32, %c0_i32_0 : i32, i32
  }
  func.func @transform_9(%arg0: i32) -> (i32, i32) {
    %c0_i32 = arith.constant 0 : i32
    %c0_i32_0 = arith.constant 0 : i32
    %c0_i32_1 = arith.constant 0 : i32
    return %c0_i32, %c0_i32_0 : i32, i32
  }
  func.func @transform_10(%arg0: i32) -> (i32, i32) {
    %c0_i32 = arith.constant 0 : i32
    %c0_i32_0 = arith.constant 0 : i32
    return %arg0, %c0_i32 : i32, i32
  }
}

module attributes {stable_mosaic.version = 11 : i64} {
  func.func @_depthwise_block_kernel(%arg0: i32, %arg1: memref<16x64xbf16, #tpu.memory_space<vmem>>, %arg2: memref<3x16x16xbf16, #tpu.memory_space<vmem>>, %arg3: memref<3x64x128xbf16, #tpu.memory_space<vmem>>, %arg4: memref<1x128xf32, #tpu.memory_space<vmem>>, %arg5: memref<128x2xbf16, #tpu.memory_space<vmem>>, %arg6: memref<1x2xf32, #tpu.memory_space<vmem>>, %arg7: memref<2x128xbf16, #tpu.memory_space<vmem>>, %arg8: memref<1x128xf32, #tpu.memory_space<vmem>>, %arg9: memref<1x16xbf16, #tpu.memory_space<vmem>>, %arg10: memref<16x1xbf16, #tpu.memory_space<vmem>>, %arg11: memref<16x128xf32, #tpu.memory_space<vmem>>) attributes {dimension_semantics = [#tpu.dimension_semantics<parallel>], iteration_bounds = array<i64: 2>, scalar_prefetch = 0 : i64, scratch_operands = 0 : i64, tpu.core_type = #tpu.core_type<tc>, window_params = [{transform_indices = @transform_0, window_bounds = array<i64: 16, 64>}, {pipeline_mode = #tpu.pipeline_mode<synchronous>, transform_indices = @transform_1, window_bounds = array<i64: 3, 16, 16>}, {pipeline_mode = #tpu.pipeline_mode<synchronous>, transform_indices = @transform_2, window_bounds = array<i64: 3, 64, 128>}, {pipeline_mode = #tpu.pipeline_mode<synchronous>, transform_indices = @transform_3, window_bounds = array<i64: 1, 128>}, {pipeline_mode = #tpu.pipeline_mode<synchronous>, transform_indices = @transform_4, window_bounds = array<i64: 128, 2>}, {pipeline_mode = #tpu.pipeline_mode<synchronous>, transform_indices = @transform_5, window_bounds = array<i64: 1, 2>}, {pipeline_mode = #tpu.pipeline_mode<synchronous>, transform_indices = @transform_6, window_bounds = array<i64: 2, 128>}, {pipeline_mode = #tpu.pipeline_mode<synchronous>, transform_indices = @transform_7, window_bounds = array<i64: 1, 128>}, {pipeline_mode = #tpu.pipeline_mode<synchronous>, transform_indices = @transform_8, window_bounds = array<i64: 1, 16>}, {pipeline_mode = #tpu.pipeline_mode<synchronous>, transform_indices = @transform_9, window_bounds = array<i64: 16, 1>}, {transform_indices = @transform_10, window_bounds = array<i64: 16, 128>}]} {
    %c0 = arith.constant 0 : index
    %c0_0 = arith.constant 0 : index
    %0 = vector.load %arg1[%c0, %c0_0] : memref<16x64xbf16, #tpu.memory_space<vmem>>, vector<16x64xbf16>
    %c0_1 = arith.constant 0 : index
    %c0_2 = arith.constant 0 : index
    %c0_3 = arith.constant 0 : index
    %1 = vector.load %arg2[%c0_1, %c0_2, %c0_3] : memref<3x16x16xbf16, #tpu.memory_space<vmem>>, vector<1x16x16xbf16>
    %2 = vector.shape_cast %1 : vector<1x16x16xbf16> to vector<16x16xbf16>
    %cst = arith.constant dense<0.000000e+00> : vector<16x64xf32>
    %3 = tpu.matmul %2, %0, %cst {dimension_numbers = #tpu.dot_dimension_numbers<[1], [0], [0], [1], [0, 0, 1, 1], [], []>} : vector<16x16xbf16>, vector<16x64xbf16>, vector<16x64xf32> -> vector<16x64xf32>
    %4 = arith.truncf %3 : vector<16x64xf32> to vector<16x64xbf16>
    %c0_4 = arith.constant 0 : index
    %c0_5 = arith.constant 0 : index
    %c0_6 = arith.constant 0 : index
    %5 = vector.load %arg3[%c0_4, %c0_5, %c0_6] : memref<3x64x128xbf16, #tpu.memory_space<vmem>>, vector<1x64x128xbf16>
    %6 = vector.shape_cast %5 : vector<1x64x128xbf16> to vector<64x128xbf16>
    %cst_7 = arith.constant dense<0.000000e+00> : vector<16x128xf32>
    %7 = tpu.matmul %4, %6, %cst_7 {dimension_numbers = #tpu.dot_dimension_numbers<[1], [0], [0], [1], [0, 0, 1, 1], [], []>} : vector<16x64xbf16>, vector<64x128xbf16>, vector<16x128xf32> -> vector<16x128xf32>
    %c1 = arith.constant 1 : index
    %c0_8 = arith.constant 0 : index
    %c0_9 = arith.constant 0 : index
    %8 = vector.load %arg2[%c1, %c0_8, %c0_9] : memref<3x16x16xbf16, #tpu.memory_space<vmem>>, vector<1x16x16xbf16>
    %9 = vector.shape_cast %8 : vector<1x16x16xbf16> to vector<16x16xbf16>
    %cst_10 = arith.constant dense<0.000000e+00> : vector<16x64xf32>
    %10 = tpu.matmul %9, %0, %cst_10 {dimension_numbers = #tpu.dot_dimension_numbers<[1], [0], [0], [1], [0, 0, 1, 1], [], []>} : vector<16x16xbf16>, vector<16x64xbf16>, vector<16x64xf32> -> vector<16x64xf32>
    %11 = arith.truncf %10 : vector<16x64xf32> to vector<16x64xbf16>
    %c1_11 = arith.constant 1 : index
    %c0_12 = arith.constant 0 : index
    %c0_13 = arith.constant 0 : index
    %12 = vector.load %arg3[%c1_11, %c0_12, %c0_13] : memref<3x64x128xbf16, #tpu.memory_space<vmem>>, vector<1x64x128xbf16>
    %13 = vector.shape_cast %12 : vector<1x64x128xbf16> to vector<64x128xbf16>
    %cst_14 = arith.constant dense<0.000000e+00> : vector<16x128xf32>
    %14 = tpu.matmul %11, %13, %cst_14 {dimension_numbers = #tpu.dot_dimension_numbers<[1], [0], [0], [1], [0, 0, 1, 1], [], []>} : vector<16x64xbf16>, vector<64x128xbf16>, vector<16x128xf32> -> vector<16x128xf32>
    %15 = arith.addf %7, %14 : vector<16x128xf32>
    %c2 = arith.constant 2 : index
    %c0_15 = arith.constant 0 : index
    %c0_16 = arith.constant 0 : index
    %16 = vector.load %arg2[%c2, %c0_15, %c0_16] : memref<3x16x16xbf16, #tpu.memory_space<vmem>>, vector<1x16x16xbf16>
    %17 = vector.shape_cast %16 : vector<1x16x16xbf16> to vector<16x16xbf16>
    %cst_17 = arith.constant dense<0.000000e+00> : vector<16x64xf32>
    %18 = tpu.matmul %17, %0, %cst_17 {dimension_numbers = #tpu.dot_dimension_numbers<[1], [0], [0], [1], [0, 0, 1, 1], [], []>} : vector<16x16xbf16>, vector<16x64xbf16>, vector<16x64xf32> -> vector<16x64xf32>
    %19 = arith.truncf %18 : vector<16x64xf32> to vector<16x64xbf16>
    %c2_18 = arith.constant 2 : index
    %c0_19 = arith.constant 0 : index
    %c0_20 = arith.constant 0 : index
    %20 = vector.load %arg3[%c2_18, %c0_19, %c0_20] : memref<3x64x128xbf16, #tpu.memory_space<vmem>>, vector<1x64x128xbf16>
    %21 = vector.shape_cast %20 : vector<1x64x128xbf16> to vector<64x128xbf16>
    %cst_21 = arith.constant dense<0.000000e+00> : vector<16x128xf32>
    %22 = tpu.matmul %19, %21, %cst_21 {dimension_numbers = #tpu.dot_dimension_numbers<[1], [0], [0], [1], [0, 0, 1, 1], [], []>} : vector<16x64xbf16>, vector<64x128xbf16>, vector<16x128xf32> -> vector<16x128xf32>
    %23 = arith.addf %15, %22 : vector<16x128xf32>
    %c0_22 = arith.constant 0 : index
    %c0_23 = arith.constant 0 : index
    %24 = vector.load %arg4[%c0_22, %c0_23] : memref<1x128xf32, #tpu.memory_space<vmem>>, vector<1x128xf32>
    %25 = vector.broadcast %24 : vector<1x128xf32> to vector<16x128xf32>
    %26 = arith.addf %23, %25 : vector<16x128xf32>
    %cst_24 = arith.constant 0.000000e+00 : f32
    %27 = vector.broadcast %cst_24 : f32 to vector<16x128xf32>
    %28 = arith.maximumf %26, %27 : vector<16x128xf32>
    %29 = arith.truncf %28 : vector<16x128xf32> to vector<16x128xbf16>
    %c0_25 = arith.constant 0 : index
    %c0_26 = arith.constant 0 : index
    %30 = vector.load %arg9[%c0_25, %c0_26] : memref<1x16xbf16, #tpu.memory_space<vmem>>, vector<1x16xbf16>
    %cst_27 = arith.constant dense<0.000000e+00> : vector<1x128xf32>
    %31 = tpu.matmul %30, %29, %cst_27 {dimension_numbers = #tpu.dot_dimension_numbers<[1], [0], [0], [1], [0, 0, 1, 1], [], []>} : vector<1x16xbf16>, vector<16x128xbf16>, vector<1x128xf32> -> vector<1x128xf32>
    %32 = arith.truncf %31 : vector<1x128xf32> to vector<1x128xbf16>
    %c0_28 = arith.constant 0 : index
    %c0_29 = arith.constant 0 : index
    %33 = vector.load %arg5[%c0_28, %c0_29] : memref<128x2xbf16, #tpu.memory_space<vmem>>, vector<128x2xbf16>
    %cst_30 = arith.constant dense<0.000000e+00> : vector<1x2xf32>
    %34 = tpu.matmul %32, %33, %cst_30 {dimension_numbers = #tpu.dot_dimension_numbers<[1], [0], [0], [1], [0, 0, 1, 1], [], []>} : vector<1x128xbf16>, vector<128x2xbf16>, vector<1x2xf32> -> vector<1x2xf32>
    %cst_31 = arith.constant 3.906250e-03 : f32
    %35 = vector.broadcast %cst_31 : f32 to vector<1x2xf32>
    %36 = arith.mulf %34, %35 : vector<1x2xf32>
    %c0_32 = arith.constant 0 : index
    %c0_33 = arith.constant 0 : index
    %37 = vector.load %arg6[%c0_32, %c0_33] : memref<1x2xf32, #tpu.memory_space<vmem>>, vector<1x2xf32>
    %38 = arith.addf %36, %37 : vector<1x2xf32>
    %cst_34 = arith.constant 0.000000e+00 : f32
    %39 = vector.broadcast %cst_34 : f32 to vector<1x2xf32>
    %40 = arith.maximumf %38, %39 : vector<1x2xf32>
    %41 = arith.truncf %40 : vector<1x2xf32> to vector<1x2xbf16>
    %c0_35 = arith.constant 0 : index
    %c0_36 = arith.constant 0 : index
    %42 = vector.load %arg7[%c0_35, %c0_36] : memref<2x128xbf16, #tpu.memory_space<vmem>>, vector<2x128xbf16>
    %cst_37 = arith.constant dense<0.000000e+00> : vector<1x128xf32>
    %43 = tpu.matmul %41, %42, %cst_37 {dimension_numbers = #tpu.dot_dimension_numbers<[1], [0], [0], [1], [0, 0, 1, 1], [], []>} : vector<1x2xbf16>, vector<2x128xbf16>, vector<1x128xf32> -> vector<1x128xf32>
    %c0_38 = arith.constant 0 : index
    %c0_39 = arith.constant 0 : index
    %44 = vector.load %arg8[%c0_38, %c0_39] : memref<1x128xf32, #tpu.memory_space<vmem>>, vector<1x128xf32>
    %45 = arith.addf %43, %44 : vector<1x128xf32>
    %46 = arith.negf %45 : vector<1x128xf32>
    %47 = math.exp %46 : vector<1x128xf32>
    %cst_40 = arith.constant 1.000000e+00 : f32
    %48 = vector.broadcast %cst_40 : f32 to vector<1x128xf32>
    %49 = arith.addf %48, %47 : vector<1x128xf32>
    %50 = arith.divf %48, %49 : vector<1x128xf32>
    %51 = vector.broadcast %50 : vector<1x128xf32> to vector<16x128xf32>
    %52 = arith.mulf %28, %51 : vector<16x128xf32>
    %c0_41 = arith.constant 0 : index
    %c0_42 = arith.constant 0 : index
    %53 = vector.load %arg11[%c0_41, %c0_42] : memref<16x128xf32, #tpu.memory_space<vmem>>, vector<16x128xf32>
    tpu.vector_store %arg11[%c0_41, %c0_42], %52 {strides = array<i32>} : memref<16x128xf32, #tpu.memory_space<vmem>>, vector<16x128xf32>,
    return
  }
  func.func @transform_0(%arg0: i32) -> (i32, i32) {
    %c0_i32 = arith.constant 0 : i32
    %c0_i32_0 = arith.constant 0 : i32
    return %arg0, %c0_i32 : i32, i32
  }
  func.func @transform_1(%arg0: i32) -> (i32, i32, i32) {
    %c0_i32 = arith.constant 0 : i32
    %c0_i32_0 = arith.constant 0 : i32
    %c0_i32_1 = arith.constant 0 : i32
    %c0_i32_2 = arith.constant 0 : i32
    return %c0_i32, %c0_i32_0, %c0_i32_1 : i32, i32, i32
  }
  func.func @transform_2(%arg0: i32) -> (i32, i32, i32) {
    %c0_i32 = arith.constant 0 : i32
    %c0_i32_0 = arith.constant 0 : i32
    %c0_i32_1 = arith.constant 0 : i32
    %c0_i32_2 = arith.constant 0 : i32
    return %c0_i32, %c0_i32_0, %c0_i32_1 : i32, i32, i32
  }
  func.func @transform_3(%arg0: i32) -> (i32, i32) {
    %c0_i32 = arith.constant 0 : i32
    %c0_i32_0 = arith.constant 0 : i32
    %c0_i32_1 = arith.constant 0 : i32
    return %c0_i32, %c0_i32_0 : i32, i32
  }
  func.func @transform_4(%arg0: i32) -> (i32, i32) {
    %c0_i32 = arith.constant 0 : i32
    %c0_i32_0 = arith.constant 0 : i32
    %c0_i32_1 = arith.constant 0 : i32
    return %c0_i32, %c0_i32_0 : i32, i32
  }
  func.func @transform_5(%arg0: i32) -> (i32, i32) {
    %c0_i32 = arith.constant 0 : i32
    %c0_i32_0 = arith.constant 0 : i32
    %c0_i32_1 = arith.constant 0 : i32
    return %c0_i32, %c0_i32_0 : i32, i32
  }
  func.func @transform_6(%arg0: i32) -> (i32, i32) {
    %c0_i32 = arith.constant 0 : i32
    %c0_i32_0 = arith.constant 0 : i32
    %c0_i32_1 = arith.constant 0 : i32
    return %c0_i32, %c0_i32_0 : i32, i32
  }
  func.func @transform_7(%arg0: i32) -> (i32, i32) {
    %c0_i32 = arith.constant 0 : i32
    %c0_i32_0 = arith.constant 0 : i32
    %c0_i32_1 = arith.constant 0 : i32
    return %c0_i32, %c0_i32_0 : i32, i32
  }
  func.func @transform_8(%arg0: i32) -> (i32, i32) {
    %c0_i32 = arith.constant 0 : i32
    %c0_i32_0 = arith.constant 0 : i32
    %c0_i32_1 = arith.constant 0 : i32
    return %c0_i32, %c0_i32_0 : i32, i32
  }
  func.func @transform_9(%arg0: i32) -> (i32, i32) {
    %c0_i32 = arith.constant 0 : i32
    %c0_i32_0 = arith.constant 0 : i32
    %c0_i32_1 = arith.constant 0 : i32
    return %c0_i32, %c0_i32_0 : i32, i32
  }
  func.func @transform_10(%arg0: i32) -> (i32, i32) {
    %c0_i32 = arith.constant 0 : i32
    %c0_i32_0 = arith.constant 0 : i32
    return %arg0, %c0_i32 : i32, i32
  }
}

</mosaic_0001>

<llo_original>
// kernel: tile.34
$region0: #{tile.34}
  %s0 = inlined_call_operand.vmem [shape: bf16[8,16,8], index: 0, kind: input, shape index: {}]
  %s1 = inlined_call_operand.vmem [shape: bf16[8,128], index: 1, kind: output, shape index: {}]
  $region1: #{tile.34} parent=0
    #allocation0 [shape = 'u8[4096]{0}', space=vmem, size = 0x1000, scoped, tag = 'scoped mem for output reshape']
    #allocation1 [shape = 'u8[65536]{0}', space=vmem, size = 0x10000, scoped, tag = 'scoped mem for input reshape']
    %s3 = smul.u32 4, 2
    %s4 = sshll.u32 1, %s3
    %s5 = ssub.s32 %s4, 1
    %s6 = smul.addr 4, 15
    %s7 = scalar_lea.vmem %s0, %s6
    %s8 = sshrl.u32 %s5, 1
    %s9 = sor.u32 %s5, %s8
    %s10 = sand.u32 %s9, 85
    %s11 = sshrl.u32 %s10, 1
    %s12 = sor.u32 %s10, %s11
    %s13 = sand.u32 51, %s12
    %s14 = sshrl.u32 %s13, 2
    %s15 = sor.u32 %s13, %s14
    %s16 = sand.u32 15, %s15
    %v17 = vld [vmem:[%s7] sm:%s16]
    %v18 = vunpack.c.l.bf16 %v17
    %v19 = vunpack.c.h.bf16 %v17
    %s20 = scalar_lea.vmem [#allocation1], 120
    %21 = vst [vmem:[%s20] sm:%s5] %v18
    %s22 = smul.addr 4, 14
    %s23 = scalar_lea.vmem %s0, %s22
    %s24 = sshrl.u32 %s5, 1
    %s25 = sor.u32 %s5, %s24
    %s26 = sand.u32 %s25, 85
    %s27 = sshrl.u32 %s26, 1
    %s28 = sor.u32 %s26, %s27
    %s29 = sand.u32 51, %s28
    %s30 = sshrl.u32 %s29, 2
    %s31 = sor.u32 %s29, %s30
    %s32 = sand.u32 15, %s31
    %v33 = vld [vmem:[%s23] sm:%s32]
    %v34 = vunpack.c.l.bf16 %v33
    %v35 = vunpack.c.h.bf16 %v33
    %s36 = scalar_lea.vmem [#allocation1], 112
    %37 = vst [vmem:[%s36] sm:%s5] %v34
    %s38 = smul.addr 4, 13
    %s39 = scalar_lea.vmem %s0, %s38
    %s40 = sshrl.u32 %s5, 1
    %s41 = sor.u32 %s5, %s40
    %s42 = sand.u32 %s41, 85
    %s43 = sshrl.u32 %s42, 1
    %s44 = sor.u32 %s42, %s43
    %s45 = sand.u32 51, %s44
    %s46 = sshrl.u32 %s45, 2
    %s47 = sor.u32 %s45, %s46
    %s48 = sand.u32 15, %s47
    %v49 = vld [vmem:[%s39] sm:%s48]
    %v50 = vunpack.c.l.bf16 %v49
    %v51 = vunpack.c.h.bf16 %v49
    %s52 = scalar_lea.vmem [#allocation1], 104
    %53 = vst [vmem:[%s52] sm:%s5] %v50
    %s54 = smul.addr 4, 12
    %s55 = scalar_lea.vmem %s0, %s54
    %s56 = sshrl.u32 %s5, 1
    %s57 = sor.u32 %s5, %s56
    %s58 = sand.u32 %s57, 85
    %s59 = sshrl.u32 %s58, 1
    %s60 = sor.u32 %s58, %s59
    %s61 = sand.u32 51, %s60
    %s62 = sshrl.u32 %s61, 2
    %s63 = sor.u32 %s61, %s62
    %s64 = sand.u32 15, %s63
    %v65 = vld [vmem:[%s55] sm:%s64]
    %v66 = vunpack.c.l.bf16 %v65
    %v67 = vunpack.c.h.bf16 %v65
    %s68 = scalar_lea.vmem [#allocation1], 96
    %69 = vst [vmem:[%s68] sm:%s5] %v66
    %s70 = smul.addr 4, 11
    %s71 = scalar_lea.vmem %s0, %s70
    %s72 = sshrl.u32 %s5, 1
    %s73 = sor.u32 %s5, %s72
    %s74 = sand.u32 %s73, 85
    %s75 = sshrl.u32 %s74, 1
    %s76 = sor.u32 %s74, %s75
    %s77 = sand.u32 51, %s76
    %s78 = sshrl.u32 %s77, 2
    %s79 = sor.u32 %s77, %s78
    %s80 = sand.u32 15, %s79
    %v81 = vld [vmem:[%s71] sm:%s80]
    %v82 = vunpack.c.l.bf16 %v81
    %v83 = vunpack.c.h.bf16 %v81
    %s84 = scalar_lea.vmem [#allocation1], 88
    %85 = vst [vmem:[%s84] sm:%s5] %v82
    %s86 = smul.addr 4, 10
    %s87 = scalar_lea.vmem %s0, %s86
    %s88 = sshrl.u32 %s5, 1
    %s89 = sor.u32 %s5, %s88
    %s90 = sand.u32 %s89, 85
    %s91 = sshrl.u32 %s90, 1
    %s92 = sor.u32 %s90, %s91
    %s93 = sand.u32 51, %s92
    %s94 = sshrl.u32 %s93, 2
    %s95 = sor.u32 %s93, %s94
    %s96 = sand.u32 15, %s95
    %v97 = vld [vmem:[%s87] sm:%s96]
    %v98 = vunpack.c.l.bf16 %v97
    %v99 = vunpack.c.h.bf16 %v97
    %s100 = scalar_lea.vmem [#allocation1], 80
    %101 = vst [vmem:[%s100] sm:%s5] %v98
    %s102 = smul.addr 4, 9
    %s103 = scalar_lea.vmem %s0, %s102
    %s104 = sshrl.u32 %s5, 1
    %s105 = sor.u32 %s5, %s104
    %s106 = sand.u32 %s105, 85
    %s107 = sshrl.u32 %s106, 1
    %s108 = sor.u32 %s106, %s107
    %s109 = sand.u32 51, %s108
    %s110 = sshrl.u32 %s109, 2
    %s111 = sor.u32 %s109, %s110
    %s112 = sand.u32 15, %s111
    %v113 = vld [vmem:[%s103] sm:%s112]
    %v114 = vunpack.c.l.bf16 %v113
    %v115 = vunpack.c.h.bf16 %v113
    %s116 = scalar_lea.vmem [#allocation1], 72
    %117 = vst [vmem:[%s116] sm:%s5] %v114
    %s118 = smul.addr 4, 8
    %s119 = scalar_lea.vmem %s0, %s118
    %s120 = sshrl.u32 %s5, 1
    %s121 = sor.u32 %s5, %s120
    %s122 = sand.u32 %s121, 85
    %s123 = sshrl.u32 %s122, 1
    %s124 = sor.u32 %s122, %s123
    %s125 = sand.u32 51, %s124
    %s126 = sshrl.u32 %s125, 2
    %s127 = sor.u32 %s125, %s126
    %s128 = sand.u32 15, %s127
    %v129 = vld [vmem:[%s119] sm:%s128]
    %v130 = vunpack.c.l.bf16 %v129
    %v131 = vunpack.c.h.bf16 %v129
    %s132 = scalar_lea.vmem [#allocation1], 64
    %133 = vst [vmem:[%s132] sm:%s5] %v130
    %s134 = smul.addr 4, 7
    %s135 = scalar_lea.vmem %s0, %s134
    %s136 = sshrl.u32 %s5, 1
    %s137 = sor.u32 %s5, %s136
    %s138 = sand.u32 %s137, 85
    %s139 = sshrl.u32 %s138, 1
    %s140 = sor.u32 %s138, %s139
    %s141 = sand.u32 51, %s140
    %s142 = sshrl.u32 %s141, 2
    %s143 = sor.u32 %s141, %s142
    %s144 = sand.u32 15, %s143
    %v145 = vld [vmem:[%s135] sm:%s144]
    %v146 = vunpack.c.l.bf16 %v145
    %v147 = vunpack.c.h.bf16 %v145
    %s148 = scalar_lea.vmem [#allocation1], 56
    %149 = vst [vmem:[%s148] sm:%s5] %v146
    %s150 = smul.addr 4, 6
    %s151 = scalar_lea.vmem %s0, %s150
    %s152 = sshrl.u32 %s5, 1
    %s153 = sor.u32 %s5, %s152
    %s154 = sand.u32 %s153, 85
    %s155 = sshrl.u32 %s154, 1
    %s156 = sor.u32 %s154, %s155
    %s157 = sand.u32 51, %s156
    %s158 = sshrl.u32 %s157, 2
    %s159 = sor.u32 %s157, %s158
    %s160 = sand.u32 15, %s159
    %v161 = vld [vmem:[%s151] sm:%s160]
    %v162 = vunpack.c.l.bf16 %v161
    %v163 = vunpack.c.h.bf16 %v161
    %s164 = scalar_lea.vmem [#allocation1], 48
    %165 = vst [vmem:[%s164] sm:%s5] %v162
    %s166 = smul.addr 4, 5
    %s167 = scalar_lea.vmem %s0, %s166
    %s168 = sshrl.u32 %s5, 1
    %s169 = sor.u32 %s5, %s168
    %s170 = sand.u32 %s169, 85
    %s171 = sshrl.u32 %s170, 1
    %s172 = sor.u32 %s170, %s171
    %s173 = sand.u32 51, %s172
    %s174 = sshrl.u32 %s173, 2
    %s175 = sor.u32 %s173, %s174
    %s176 = sand.u32 15, %s175
    %v177 = vld [vmem:[%s167] sm:%s176]
    %v178 = vunpack.c.l.bf16 %v177
    %v179 = vunpack.c.h.bf16 %v177
    %s180 = scalar_lea.vmem [#allocation1], 40
    %181 = vst [vmem:[%s180] sm:%s5] %v178
    %s182 = smul.addr 4, 4
    %s183 = scalar_lea.vmem %s0, %s182
    %s184 = sshrl.u32 %s5, 1
    %s185 = sor.u32 %s5, %s184
    %s186 = sand.u32 %s185, 85
    %s187 = sshrl.u32 %s186, 1
    %s188 = sor.u32 %s186, %s187
    %s189 = sand.u32 51, %s188
    %s190 = sshrl.u32 %s189, 2
    %s191 = sor.u32 %s189, %s190
    %s192 = sand.u32 15, %s191
    %v193 = vld [vmem:[%s183] sm:%s192]
    %v194 = vunpack.c.l.bf16 %v193
    %v195 = vunpack.c.h.bf16 %v193
    %s196 = scalar_lea.vmem [#allocation1], 32
    %197 = vst [vmem:[%s196] sm:%s5] %v194
    %s198 = smul.addr 4, 3
    %s199 = scalar_lea.vmem %s0, %s198
    %s200 = sshrl.u32 %s5, 1
    %s201 = sor.u32 %s5, %s200
    %s202 = sand.u32 %s201, 85
    %s203 = sshrl.u32 %s202, 1
    %s204 = sor.u32 %s202, %s203
    %s205 = sand.u32 51, %s204
    %s206 = sshrl.u32 %s205, 2
    %s207 = sor.u32 %s205, %s206
    %s208 = sand.u32 15, %s207
    %v209 = vld [vmem:[%s199] sm:%s208]
    %v210 = vunpack.c.l.bf16 %v209
    %v211 = vunpack.c.h.bf16 %v209
    %s212 = scalar_lea.vmem [#allocation1], 24
    %213 = vst [vmem:[%s212] sm:%s5] %v210
    %s214 = smul.addr 4, 2
    %s215 = scalar_lea.vmem %s0, %s214
    %s216 = sshrl.u32 %s5, 1
    %s217 = sor.u32 %s5, %s216
    %s218 = sand.u32 %s217, 85
    %s219 = sshrl.u32 %s218, 1
    %s220 = sor.u32 %s218, %s219
    %s221 = sand.u32 51, %s220
    %s222 = sshrl.u32 %s221, 2
    %s223 = sor.u32 %s221, %s222
    %s224 = sand.u32 15, %s223
    %v225 = vld [vmem:[%s215] sm:%s224]
    %v226 = vunpack.c.l.bf16 %v225
    %v227 = vunpack.c.h.bf16 %v225
    %s228 = scalar_lea.vmem [#allocation1], 16
    %229 = vst [vmem:[%s228] sm:%s5] %v226
    %s230 = scalar_lea.vmem %s0, 4
    %s231 = sshrl.u32 %s5, 1
    %s232 = sor.u32 %s5, %s231
    %s233 = sand.u32 %s232, 85
    %s234 = sshrl.u32 %s233, 1
    %s235 = sor.u32 %s233, %s234
    %s236 = sand.u32 51, %s235
    %s237 = sshrl.u32 %s236, 2
    %s238 = sor.u32 %s236, %s237
    %s239 = sand.u32 15, %s238
    %v240 = vld [vmem:[%s230] sm:%s239]
    %v241 = vunpack.c.l.bf16 %v240
    %v242 = vunpack.c.h.bf16 %v240
    %s243 = scalar_lea.vmem [#allocation1], 8
    %244 = vst [vmem:[%s243] sm:%s5] %v241
    %s245 = sshrl.u32 %s5, 1
    %s246 = sor.u32 %s5, %s245
    %s247 = sand.u32 %s246, 85
    %s248 = sshrl.u32 %s247, 1
    %s249 = sor.u32 %s247, %s248
    %s250 = sand.u32 51, %s249
    %s251 = sshrl.u32 %s250, 2
    %s252 = sor.u32 %s250, %s251
    %s253 = sand.u32 15, %s252
    %v254 = vld [vmem:[%s0] sm:%s253]
    %v255 = vunpack.c.l.bf16 %v254
    %v256 = vunpack.c.h.bf16 %v254
    %257 = vst [vmem:[#allocation1] sm:%s5] %v255
    %s258 = smov 3
    %v259 = vld [vmem:[#allocation1] ss:$16 sm:%s258]
    %s260 = smov 12
    %v261 = vld [vmem:[#allocation1] ss:$16 sm:%s260]
    %vm262 = vcmask 1043458
    %v263 = vsel %vm262, %v261, %v259
    %s264 = smov 48
    %v265 = vld [vmem:[#allocation1] ss:$16 sm:%s264]
    %vm266 = vcmask 1045508
    %v267 = vsel %vm266, %v265, %v263
    %s268 = smov 192
    %v269 = vld [vmem:[#allocation1] ss:$16 sm:%s268]
    %vm270 = vcmask 1047558
    %v271 = vsel %vm270, %v269, %v267
    %vm272 = vcmask 64512
    %273 = vst.msk [vmem:[#allocation0] sm:$0xff] %vm272, %v271
    %s274 = scalar_lea.vmem [#allocation1], 15
    %s275 = smov 3
    %v276 = vld [vmem:[%s274] ss:$16 sm:%s275]
    %s277 = scalar_lea.vmem [#allocation1], 15
    %s278 = smov 12
    %v279 = vld [vmem:[%s277] ss:$16 sm:%s278]
    %vm280 = vcmask 1043458
    %v281 = vsel %vm280, %v279, %v276
    %s282 = scalar_lea.vmem [#allocation1], 15
    %s283 = smov 48
    %v284 = vld [vmem:[%s282] ss:$16 sm:%s283]
    %vm285 = vcmask 1045508
    %v286 = vsel %vm285, %v284, %v281
    %s287 = scalar_lea.vmem [#allocation1], 15
    %s288 = smov 192
    %v289 = vld [vmem:[%s287] ss:$16 sm:%s288]
    %vm290 = vcmask 1047558
    %v291 = vsel %vm290, %v289, %v286
    %292 = vrot.lane.b32.xlu0 %v291, 120
    %v293 = vpop.permute.xlu0 %292
    %vm294 = vcmask 1048512
    %295 = vst.msk [vmem:[#allocation0] sm:$0xff] %vm294, %v293
    %s296 = scalar_lea.vmem [#allocation1], 14
    %s297 = smov 3
    %v298 = vld [vmem:[%s296] ss:$16 sm:%s297]
    %s299 = scalar_lea.vmem [#allocation1], 14
    %s300 = smov 12
    %v301 = vld [vmem:[%s299] ss:$16 sm:%s300]
    %vm302 = vcmask 1043458
    %v303 = vsel %vm302, %v301, %v298
    %s304 = scalar_lea.vmem [#allocation1], 14
    %s305 = smov 48
    %v306 = vld [vmem:[%s304] ss:$16 sm:%s305]
    %vm307 = vcmask 1045508
    %v308 = vsel %vm307, %v306, %v303
    %s309 = scalar_lea.vmem [#allocation1], 14
    %s310 = smov 192
    %v311 = vld [vmem:[%s309] ss:$16 sm:%s310]
    %vm312 = vcmask 1047558
    %v313 = vsel %vm312, %v311, %v308
    %314 = vrot.lane.b32.xlu0 %v313, 112
    %v315 = vpop.permute.xlu0 %314
    %vm316 = vcmask 982912
    %317 = vst.msk [vmem:[#allocation0] sm:$0xff] %vm316, %v315
    %s318 = scalar_lea.vmem [#allocation1], 13
    %s319 = smov 3
    %v320 = vld [vmem:[%s318] ss:$16 sm:%s319]
    %s321 = scalar_lea.vmem [#allocation1], 13
    %s322 = smov 12
    %v323 = vld [vmem:[%s321] ss:$16 sm:%s322]
    %vm324 = vcmask 1043458
    %v325 = vsel %vm324, %v323, %v320
    %s326 = scalar_lea.vmem [#allocation1], 13
    %s327 = smov 48
    %v328 = vld [vmem:[%s326] ss:$16 sm:%s327]
    %vm329 = vcmask 1045508
    %v330 = vsel %vm329, %v328, %v325
    %s331 = scalar_lea.vmem [#allocation1], 13
    %s332 = smov 192
    %v333 = vld [vmem:[%s331] ss:$16 sm:%s332]
    %vm334 = vcmask 1047558
    %v335 = vsel %vm334, %v333, %v330
    %336 = vrot.lane.b32.xlu0 %v335, 104
    %v337 = vpop.permute.xlu0 %336
    %vm338 = vcmask 917312
    %339 = vst.msk [vmem:[#allocation0] sm:$0xff] %vm338, %v337
    %s340 = scalar_lea.vmem [#allocation1], 12
    %s341 = smov 3
    %v342 = vld [vmem:[%s340] ss:$16 sm:%s341]
    %s343 = scalar_lea.vmem [#allocation1], 12
    %s344 = smov 12
    %v345 = vld [vmem:[%s343] ss:$16 sm:%s344]
    %vm346 = vcmask 1043458
    %v347 = vsel %vm346, %v345, %v342
    %s348 = scalar_lea.vmem [#allocation1], 12
    %s349 = smov 48
    %v350 = vld [vmem:[%s348] ss:$16 sm:%s349]
    %vm351 = vcmask 1045508
    %v352 = vsel %vm351, %v350, %v347
    %s353 = scalar_lea.vmem [#allocation1], 12
    %s354 = smov 192
    %v355 = vld [vmem:[%s353] ss:$16 sm:%s354]
    %vm356 = vcmask 1047558
    %v357 = vsel %vm356, %v355, %v352
    %358 = vrot.lane.b32.xlu0 %v357, 96
    %v359 = vpop.permute.xlu0 %358
    %vm360 = vcmask 851712
    %361 = vst.msk [vmem:[#allocation0] sm:$0xff] %vm360, %v359
    %s362 = scalar_lea.vmem [#allocation1], 11
    %s363 = smov 3
    %v364 = vld [vmem:[%s362] ss:$16 sm:%s363]
    %s365 = scalar_lea.vmem [#allocation1], 11
    %s366 = smov 12
    %v367 = vld [vmem:[%s365] ss:$16 sm:%s366]
    %vm368 = vcmask 1043458
    %v369 = vsel %vm368, %v367, %v364
    %s370 = scalar_lea.vmem [#allocation1], 11
    %s371 = smov 48
    %v372 = vld [vmem:[%s370] ss:$16 sm:%s371]
    %vm373 = vcmask 1045508
    %v374 = vsel %vm373, %v372, %v369
    %s375 = scalar_lea.vmem [#allocation1], 11
    %s376 = smov 192
    %v377 = vld [vmem:[%s375] ss:$16 sm:%s376]
    %vm378 = vcmask 1047558
    %v379 = vsel %vm378, %v377, %v374
    %380 = vrot.lane.b32.xlu0 %v379, 88
    %v381 = vpop.permute.xlu0 %380
    %vm382 = vcmask 786112
    %383 = vst.msk [vmem:[#allocation0] sm:$0xff] %vm382, %v381
    %s384 = scalar_lea.vmem [#allocation1], 10
    %s385 = smov 3
    %v386 = vld [vmem:[%s384] ss:$16 sm:%s385]
    %s387 = scalar_lea.vmem [#allocation1], 10
    %s388 = smov 12
    %v389 = vld [vmem:[%s387] ss:$16 sm:%s388]
    %vm390 = vcmask 1043458
    %v391 = vsel %vm390, %v389, %v386
    %s392 = scalar_lea.vmem [#allocation1], 10
    %s393 = smov 48
    %v394 = vld [vmem:[%s392] ss:$16 sm:%s393]
    %vm395 = vcmask 1045508
    %v396 = vsel %vm395, %v394, %v391
    %s397 = scalar_lea.vmem [#allocation1], 10
    %s398 = smov 192
    %v399 = vld [vmem:[%s397] ss:$16 sm:%s398]
    %vm400 = vcmask 1047558
    %v401 = vsel %vm400, %v399, %v396
    %402 = vrot.lane.b32.xlu0 %v401, 80
    %v403 = vpop.permute.xlu0 %402
    %vm404 = vcmask 720512
    %405 = vst.msk [vmem:[#allocation0] sm:$0xff] %vm404, %v403
    %s406 = scalar_lea.vmem [#allocation1], 9
    %s407 = smov 3
    %v408 = vld [vmem:[%s406] ss:$16 sm:%s407]
    %s409 = scalar_lea.vmem [#allocation1], 9
    %s410 = smov 12
    %v411 = vld [vmem:[%s409] ss:$16 sm:%s410]
    %vm412 = vcmask 1043458
    %v413 = vsel %vm412, %v411, %v408
    %s414 = scalar_lea.vmem [#allocation1], 9
    %s415 = smov 48
    %v416 = vld [vmem:[%s414] ss:$16 sm:%s415]
    %vm417 = vcmask 1045508
    %v418 = vsel %vm417, %v416, %v413
    %s419 = scalar_lea.vmem [#allocation1], 9
    %s420 = smov 192
    %v421 = vld [vmem:[%s419] ss:$16 sm:%s420]
    %vm422 = vcmask 1047558
    %v423 = vsel %vm422, %v421, %v418
    %424 = vrot.lane.b32.xlu0 %v423, 72
    %v425 = vpop.permute.xlu0 %424
    %vm426 = vcmask 654912
    %427 = vst.msk [vmem:[#allocation0] sm:$0xff] %vm426, %v425
    %s428 = scalar_lea.vmem [#allocation1], 8
    %s429 = smov 3
    %v430 = vld [vmem:[%s428] ss:$16 sm:%s429]
    %s431 = scalar_lea.vmem [#allocation1], 8
    %s432 = smov 12
    %v433 = vld [vmem:[%s431] ss:$16 sm:%s432]
    %vm434 = vcmask 1043458
    %v435 = vsel %vm434, %v433, %v430
    %s436 = scalar_lea.vmem [#allocation1], 8
    %s437 = smov 48
    %v438 = vld [vmem:[%s436] ss:$16 sm:%s437]
    %vm439 = vcmask 1045508
    %v440 = vsel %vm439, %v438, %v435
    %s441 = scalar_lea.vmem [#allocation1], 8
    %s442 = smov 192
    %v443 = vld [vmem:[%s441] ss:$16 sm:%s442]
    %vm444 = vcmask 1047558
    %v445 = vsel %vm444, %v443, %v440
    %446 = vrot.lane.b32.xlu0 %v445, 64
    %v447 = vpop.permute.xlu0 %446
    %vm448 = vcmask 589312
    %449 = vst.msk [vmem:[#allocation0] sm:$0xff] %vm448, %v447
    %s450 = scalar_lea.vmem [#allocation1], 7
    %s451 = smov 3
    %v452 = vld [vmem:[%s450] ss:$16 sm:%s451]
    %s453 = scalar_lea.vmem [#allocation1], 7
    %s454 = smov 12
    %v455 = vld [vmem:[%s453] ss:$16 sm:%s454]
    %vm456 = vcmask 1043458
    %v457 = vsel %vm456, %v455, %v452
    %s458 = scalar_lea.vmem [#allocation1], 7
    %s459 = smov 48
    %v460 = vld [vmem:[%s458] ss:$16 sm:%s459]
    %vm461 = vcmask 1045508
    %v462 = vsel %vm461, %v460, %v457
    %s463 = scalar_lea.vmem [#allocation1], 7
    %s464 = smov 192
    %v465 = vld [vmem:[%s463] ss:$16 sm:%s464]
    %vm466 = vcmask 1047558
    %v467 = vsel %vm466, %v465, %v462
    %468 = vrot.lane.b32.xlu0 %v467, 56
    %v469 = vpop.permute.xlu0 %468
    %vm470 = vcmask 523712
    %471 = vst.msk [vmem:[#allocation0] sm:$0xff] %vm470, %v469
    %s472 = scalar_lea.vmem [#allocation1], 6
    %s473 = smov 3
    %v474 = vld [vmem:[%s472] ss:$16 sm:%s473]
    %s475 = scalar_lea.vmem [#allocation1], 6
    %s476 = smov 12
    %v477 = vld [vmem:[%s475] ss:$16 sm:%s476]
    %vm478 = vcmask 1043458
    %v479 = vsel %vm478, %v477, %v474
    %s480 = scalar_lea.vmem [#allocation1], 6
    %s481 = smov 48
    %v482 = vld [vmem:[%s480] ss:$16 sm:%s481]
    %vm483 = vcmask 1045508
    %v484 = vsel %vm483, %v482, %v479
    %s485 = scalar_lea.vmem [#allocation1], 6
    %s486 = smov 192
    %v487 = vld [vmem:[%s485] ss:$16 sm:%s486]
    %vm488 = vcmask 1047558
    %v489 = vsel %vm488, %v487, %v484
    %490 = vrot.lane.b32.xlu0 %v489, 48
    %v491 = vpop.permute.xlu0 %490
    %vm492 = vcmask 458112
    %493 = vst.msk [vmem:[#allocation0] sm:$0xff] %vm492, %v491
    %s494 = scalar_lea.vmem [#allocation1], 5
    %s495 = smov 3
    %v496 = vld [vmem:[%s494] ss:$16 sm:%s495]
    %s497 = scalar_lea.vmem [#allocation1], 5
    %s498 = smov 12
    %v499 = vld [vmem:[%s497] ss:$16 sm:%s498]
    %vm500 = vcmask 1043458
    %v501 = vsel %vm500, %v499, %v496
    %s502 = scalar_lea.vmem [#allocation1], 5
    %s503 = smov 48
    %v504 = vld [vmem:[%s502] ss:$16 sm:%s503]
    %vm505 = vcmask 1045508
    %v506 = vsel %vm505, %v504, %v501
    %s507 = scalar_lea.vmem [#allocation1], 5
    %s508 = smov 192
    %v509 = vld [vmem:[%s507] ss:$16 sm:%s508]
    %vm510 = vcmask 1047558
    %v511 = vsel %vm510, %v509, %v506
    %512 = vrot.lane.b32.xlu0 %v511, 40
    %v513 = vpop.permute.xlu0 %512
    %vm514 = vcmask 392512
    %515 = vst.msk [vmem:[#allocation0] sm:$0xff] %vm514, %v513
    %s516 = scalar_lea.vmem [#allocation1], 4
    %s517 = smov 3
    %v518 = vld [vmem:[%s516] ss:$16 sm:%s517]
    %s519 = scalar_lea.vmem [#allocation1], 4
    %s520 = smov 12
    %v521 = vld [vmem:[%s519] ss:$16 sm:%s520]
    %vm522 = vcmask 1043458
    %v523 = vsel %vm522, %v521, %v518
    %s524 = scalar_lea.vmem [#allocation1], 4
    %s525 = smov 48
    %v526 = vld [vmem:[%s524] ss:$16 sm:%s525]
    %vm527 = vcmask 1045508
    %v528 = vsel %vm527, %v526, %v523
    %s529 = scalar_lea.vmem [#allocation1], 4
    %s530 = smov 192
    %v531 = vld [vmem:[%s529] ss:$16 sm:%s530]
    %vm532 = vcmask 1047558
    %v533 = vsel %vm532, %v531, %v528
    %534 = vrot.lane.b32.xlu0 %v533, 32
    %v535 = vpop.permute.xlu0 %534
    %vm536 = vcmask 326912
    %537 = vst.msk [vmem:[#allocation0] sm:$0xff] %vm536, %v535
    %s538 = scalar_lea.vmem [#allocation1], 3
    %s539 = smov 3
    %v540 = vld [vmem:[%s538] ss:$16 sm:%s539]
    %s541 = scalar_lea.vmem [#allocation1], 3
    %s542 = smov 12
    %v543 = vld [vmem:[%s541] ss:$16 sm:%s542]
    %vm544 = vcmask 1043458
    %v545 = vsel %vm544, %v543, %v540
    %s546 = scalar_lea.vmem [#allocation1], 3
    %s547 = smov 48
    %v548 = vld [vmem:[%s546] ss:$16 sm:%s547]
    %vm549 = vcmask 1045508
    %v550 = vsel %vm549, %v548, %v545
    %s551 = scalar_lea.vmem [#allocation1], 3
    %s552 = smov 192
    %v553 = vld [vmem:[%s551] ss:$16 sm:%s552]
    %vm554 = vcmask 1047558
    %v555 = vsel %vm554, %v553, %v550
    %556 = vrot.lane.b32.xlu0 %v555, 24
    %v557 = vpop.permute.xlu0 %556
    %vm558 = vcmask 261312
    %559 = vst.msk [vmem:[#allocation0] sm:$0xff] %vm558, %v557
    %s560 = scalar_lea.vmem [#allocation1], 2
    %s561 = smov 3
    %v562 = vld [vmem:[%s560] ss:$16 sm:%s561]
    %s563 = scalar_lea.vmem [#allocation1], 2
    %s564 = smov 12
    %v565 = vld [vmem:[%s563] ss:$16 sm:%s564]
    %vm566 = vcmask 1043458
    %v567 = vsel %vm566, %v565, %v562
    %s568 = scalar_lea.vmem [#allocation1], 2
    %s569 = smov 48
    %v570 = vld [vmem:[%s568] ss:$16 sm:%s569]
    %vm571 = vcmask 1045508
    %v572 = vsel %vm571, %v570, %v567
    %s573 = scalar_lea.vmem [#allocation1], 2
    %s574 = smov 192
    %v575 = vld [vmem:[%s573] ss:$16 sm:%s574]
    %vm576 = vcmask 1047558
    %v577 = vsel %vm576, %v575, %v572
    %578 = vrot.lane.b32.xlu0 %v577, 16
    %v579 = vpop.permute.xlu0 %578
    %vm580 = vcmask 195712
    %581 = vst.msk [vmem:[#allocation0] sm:$0xff] %vm580, %v579
    %s582 = scalar_lea.vmem [#allocation1], 1
    %s583 = smov 3
    %v584 = vld [vmem:[%s582] ss:$16 sm:%s583]
    %s585 = scalar_lea.vmem [#allocation1], 1
    %s586 = smov 12
    %v587 = vld [vmem:[%s585] ss:$16 sm:%s586]
    %vm588 = vcmask 1043458
    %v589 = vsel %vm588, %v587, %v584
    %s590 = scalar_lea.vmem [#allocation1], 1
    %s591 = smov 48
    %v592 = vld [vmem:[%s590] ss:$16 sm:%s591]
    %vm593 = vcmask 1045508
    %v594 = vsel %vm593, %v592, %v589
    %s595 = scalar_lea.vmem [#allocation1], 1
    %s596 = smov 192
    %v597 = vld [vmem:[%s595] ss:$16 sm:%s596]
    %vm598 = vcmask 1047558
    %v599 = vsel %vm598, %v597, %v594
    %600 = vrot.lane.b32.xlu0 %v599, 8
    %v601 = vpop.permute.xlu0 %600
    %vm602 = vcmask 130112
    %603 = vst.msk [vmem:[#allocation0] sm:$0xff] %vm602, %v601
    %s605 = smul.u32 4, 2
    %s606 = sshll.u32 1, %s605
    %s607 = ssub.s32 %s606, 1
    %s608 = sshrl.u32 %s605, 1
    %v609 = vld [vmem:[#allocation0] sm:%s607]
    %v610 = vpack.c.bf16 0.0, %v609
    %s611 = sshll.u32 1, %s608
    %s612 = ssub.s32 %s611, 1
    %613 = vst [vmem:[%s1] sm:%s612] %v610

// kernel: depthwise_forward_nhwc.1
$region0: #{depthwise_forward_nhwc.1}
  #allocation0 [shape = 'u32[]', space=smem, size = 0x4, offset = 0x4, fixed_abs, tag = 'smem constant byte address 0x4 - core index']
  #allocation1 [shape = 'u32[144,128]{1,0:T(1,128)}', space=vmem, size = 0x12000, scoped, tag = 'internal scratch']
  %s0 = inlined_call_operand.vmem [shape: bf16[32,64], index: 0, kind: input, shape index: {}]
  %s1 = inlined_call_operand.vmem [shape: bf16[3,16,16], index: 1, kind: input, shape index: {}]
  %s2 = inlined_call_operand.vmem [shape: bf16[3,64,128], index: 2, kind: input, shape index: {}]
  %s3 = inlined_call_operand.vmem [shape: f32[1,128], index: 3, kind: input, shape index: {}]
  %s4 = inlined_call_operand.vmem [shape: bf16[128,2], index: 4, kind: input, shape index: {}]
  %s5 = inlined_call_operand.vmem [shape: f32[1,2], index: 5, kind: input, shape index: {}]
  %s6 = inlined_call_operand.vmem [shape: bf16[2,128], index: 6, kind: input, shape index: {}]
  %s7 = inlined_call_operand.vmem [shape: f32[1,128], index: 7, kind: input, shape index: {}]
  %s8 = inlined_call_operand.vmem [shape: bf16[1,16], index: 8, kind: input, shape index: {}]
  %s9 = inlined_call_operand.vmem [shape: bf16[16,1], index: 9, kind: input, shape index: {}]
  %s10 = inlined_call_operand.vmem [shape: f32[32,128], index: 10, kind: output, shape index: {}]
  %s11 = sld [smem:[#allocation0]]
  $region73: #{depthwise_forward_nhwc.1} parent=0
    _
  %s13 = ssub.s32 1, %s11
  %s14 = scalar_select 0, %s13, %s11
  loop: start=0, step=1, limit=4
  $region2: #{depthwise_forward_nhwc.1} parent=0 // loop_pre_header
    _
  $region3: #{depthwise_forward_nhwc.1} parent=0 // loop_header
    %s16 = sphi 0, %s20
    %p17 = scmp.ge.s32.totalorder %s16, 4
    %s26 = sphi 0, %s28
    %s29 = sphi 0, %s26
    %s30 = sphi 0, %s29
    %s46 = sphi 0, %s30
    %s50 = sphi 0, %s50
    %s52 = sphi 0, %s50
    %s53 = sphi 0, %s52
    %s67 = sphi 0, %s53
    %s71 = sphi 0, %s71
    %s73 = sphi 0, %s71
    %s74 = sphi 0, %s73
    %s88 = sphi 0, %s74
    %s92 = sphi 0, %s92
    %s94 = sphi 0, %s92
    %s95 = sphi 0, %s94
    %s109 = sphi 0, %s95
    %s113 = sphi 0, %s113
    %s115 = sphi 0, %s113
    %s116 = sphi 0, %s115
    %s130 = sphi 0, %s116
    %s134 = sphi 0, %s134
    %s136 = sphi 0, %s134
    %s137 = sphi 0, %s136
    %s151 = sphi 0, %s137
    %s155 = sphi 0, %s155
    %s157 = sphi 0, %s155
    %s158 = sphi 0, %s157
    %s172 = sphi 0, %s158
    %s176 = sphi 0, %s176
    %s178 = sphi 0, %s176
    %s179 = sphi 0, %s178
    %s193 = sphi 0, %s179
    %s197 = sphi 0, %s197
    %s199 = sphi 0, %s197
    %s200 = sphi 0, %s199
    %s214 = sphi 0, %s200
    %s218 = sphi 0, %s218
    %s220 = sphi 0, %s218
    %s221 = sphi 0, %s220
    %s235 = sphi 0, %s221
    %s241 = sphi 0, %s243
    %s244 = sphi 0, %s241
    %s245 = sphi 0, %s244
    %s261 = sphi 0, %s245
  $region4: #{depthwise_forward_nhwc.1} parent=0 // loop_header_branch
    %19 = sbr.rel (%p17) target = $region8
  $region5: #{depthwise_forward_nhwc.1} parent=0 // loop_body
    %s21 = ssub.s32 %s16, 1
    %s22 = ssub.s32 %s16, 2
    %s23 = sadd.s32 %s16, 1
    %s24 = ssub.s32 %s16, %s23
    %p25 = scmp.eq.s32.totalorder %s24, 0
    %s27 = sadd.s32 %s26, 1
    %s28 = scalar_select %p25, %s26, %s27
    %p31 = pneg %p25
    %p32 = scmp.eq.s32.totalorder %s16, 1
    %p33 = por %p31, %p32
    %p34 = scmp.ne.s32.totalorder %s26, %s29
    %p35 = scmp.eq.s32.totalorder %s16, 0
    %p36 = por %p34, %p35
    %p37 = scmp.ne.s32.totalorder %s26, %s29
    %p38 = scmp.eq.s32.totalorder %s21, 1
    %p39 = por %p37, %p38
    %p40 = scmp.ne.s32.totalorder %s29, %s30
    %p41 = scmp.eq.s32.totalorder %s21, 0
    %p42 = por %p40, %p41
    %p43 = scmp.ne.s32.totalorder %s29, %s30
    %p44 = scmp.eq.s32.totalorder %s22, 1
    %p45 = por %p43, %p44
    %p47 = scmp.ne.s32.totalorder %s30, %s46
    %p48 = scmp.eq.s32.totalorder %s22, 0
    %p49 = por %p47, %p48
    %s51 = sadd.s32 %s50, 1
    %p54 = scmp.eq.s32.totalorder %s16, 1
    %p55 = scmp.ne.s32.totalorder %s50, %s52
    %p56 = scmp.eq.s32.totalorder %s16, 0
    %p57 = por %p55, %p56
    %p58 = scmp.ne.s32.totalorder %s50, %s52
    %p59 = scmp.eq.s32.totalorder %s21, 1
    %p60 = por %p58, %p59
    %p61 = scmp.ne.s32.totalorder %s52, %s53
    %p62 = scmp.eq.s32.totalorder %s21, 0
    %p63 = por %p61, %p62
    %p64 = scmp.ne.s32.totalorder %s52, %s53
    %p65 = scmp.eq.s32.totalorder %s22, 1
    %p66 = por %p64, %p65
    %p68 = scmp.ne.s32.totalorder %s53, %s67
    %p69 = scmp.eq.s32.totalorder %s22, 0
    %p70 = por %p68, %p69
    %s72 = sadd.s32 %s71, 1
    %p75 = scmp.eq.s32.totalorder %s16, 1
    %p76 = scmp.ne.s32.totalorder %s71, %s73
    %p77 = scmp.eq.s32.totalorder %s16, 0
    %p78 = por %p76, %p77
    %p79 = scmp.ne.s32.totalorder %s71, %s73
    %p80 = scmp.eq.s32.totalorder %s21, 1
    %p81 = por %p79, %p80
    %p82 = scmp.ne.s32.totalorder %s73, %s74
    %p83 = scmp.eq.s32.totalorder %s21, 0
    %p84 = por %p82, %p83
    %p85 = scmp.ne.s32.totalorder %s73, %s74
    %p86 = scmp.eq.s32.totalorder %s22, 1
    %p87 = por %p85, %p86
    %p89 = scmp.ne.s32.totalorder %s74, %s88
    %p90 = scmp.eq.s32.totalorder %s22, 0
    %p91 = por %p89, %p90
    %s93 = sadd.s32 %s92, 1
    %p96 = scmp.eq.s32.totalorder %s16, 1
    %p97 = scmp.ne.s32.totalorder %s92, %s94
    %p98 = scmp.eq.s32.totalorder %s16, 0
    %p99 = por %p97, %p98
    %p100 = scmp.ne.s32.totalorder %s92, %s94
    %p101 = scmp.eq.s32.totalorder %s21, 1
    %p102 = por %p100, %p101
    %p103 = scmp.ne.s32.totalorder %s94, %s95
    %p104 = scmp.eq.s32.totalorder %s21, 0
    %p105 = por %p103, %p104
    %p106 = scmp.ne.s32.totalorder %s94, %s95
    %p107 = scmp.eq.s32.totalorder %s22, 1
    %p108 = por %p106, %p107
    %p110 = scmp.ne.s32.totalorder %s95, %s109
    %p111 = scmp.eq.s32.totalorder %s22, 0
    %p112 = por %p110, %p111
    %s114 = sadd.s32 %s113, 1
    %p117 = scmp.eq.s32.totalorder %s16, 1
    %p118 = scmp.ne.s32.totalorder %s113, %s115
    %p119 = scmp.eq.s32.totalorder %s16, 0
    %p120 = por %p118, %p119
    %p121 = scmp.ne.s32.totalorder %s113, %s115
    %p122 = scmp.eq.s32.totalorder %s21, 1
    %p123 = por %p121, %p122
    %p124 = scmp.ne.s32.totalorder %s115, %s116
    %p125 = scmp.eq.s32.totalorder %s21, 0
    %p126 = por %p124, %p125
    %p127 = scmp.ne.s32.totalorder %s115, %s116
    %p128 = scmp.eq.s32.totalorder %s22, 1
    %p129 = por %p127, %p128
    %p131 = scmp.ne.s32.totalorder %s116, %s130
    %p132 = scmp.eq.s32.totalorder %s22, 0
    %p133 = por %p131, %p132
    %s135 = sadd.s32 %s134, 1
    %p138 = scmp.eq.s32.totalorder %s16, 1
    %p139 = scmp.ne.s32.totalorder %s134, %s136
    %p140 = scmp.eq.s32.totalorder %s16, 0
    %p141 = por %p139, %p140
    %p142 = scmp.ne.s32.totalorder %s134, %s136
    %p143 = scmp.eq.s32.totalorder %s21, 1
    %p144 = por %p142, %p143
    %p145 = scmp.ne.s32.totalorder %s136, %s137
    %p146 = scmp.eq.s32.totalorder %s21, 0
    %p147 = por %p145, %p146
    %p148 = scmp.ne.s32.totalorder %s136, %s137
    %p149 = scmp.eq.s32.totalorder %s22, 1
    %p150 = por %p148, %p149
    %p152 = scmp.ne.s32.totalorder %s137, %s151
    %p153 = scmp.eq.s32.totalorder %s22, 0
    %p154 = por %p152, %p153
    %s156 = sadd.s32 %s155, 1
    %p159 = scmp.eq.s32.totalorder %s16, 1
    %p160 = scmp.ne.s32.totalorder %s155, %s157
    %p161 = scmp.eq.s32.totalorder %s16, 0
    %p162 = por %p160, %p161
    %p163 = scmp.ne.s32.totalorder %s155, %s157
    %p164 = scmp.eq.s32.totalorder %s21, 1
    %p165 = por %p163, %p164
    %p166 = scmp.ne.s32.totalorder %s157, %s158
    %p167 = scmp.eq.s32.totalorder %s21, 0
    %p168 = por %p166, %p167
    %p169 = scmp.ne.s32.totalorder %s157, %s158
    %p170 = scmp.eq.s32.totalorder %s22, 1
    %p171 = por %p169, %p170
    %p173 = scmp.ne.s32.totalorder %s158, %s172
    %p174 = scmp.eq.s32.totalorder %s22, 0
    %p175 = por %p173, %p174
    %s177 = sadd.s32 %s176, 1
    %p180 = scmp.eq.s32.totalorder %s16, 1
    %p181 = scmp.ne.s32.totalorder %s176, %s178
    %p182 = scmp.eq.s32.totalorder %s16, 0
    %p183 = por %p181, %p182
    %p184 = scmp.ne.s32.totalorder %s176, %s178
    %p185 = scmp.eq.s32.totalorder %s21, 1
    %p186 = por %p184, %p185
    %p187 = scmp.ne.s32.totalorder %s178, %s179
    %p188 = scmp.eq.s32.totalorder %s21, 0
    %p189 = por %p187, %p188
    %p190 = scmp.ne.s32.totalorder %s178, %s179
    %p191 = scmp.eq.s32.totalorder %s22, 1
    %p192 = por %p190, %p191
    %p194 = scmp.ne.s32.totalorder %s179, %s193
    %p195 = scmp.eq.s32.totalorder %s22, 0
    %p196 = por %p194, %p195
    %s198 = sadd.s32 %s197, 1
    %p201 = scmp.eq.s32.totalorder %s16, 1
    %p202 = scmp.ne.s32.totalorder %s197, %s199
    %p203 = scmp.eq.s32.totalorder %s16, 0
    %p204 = por %p202, %p203
    %p205 = scmp.ne.s32.totalorder %s197, %s199
    %p206 = scmp.eq.s32.totalorder %s21, 1
    %p207 = por %p205, %p206
    %p208 = scmp.ne.s32.totalorder %s199, %s200
    %p209 = scmp.eq.s32.totalorder %s21, 0
    %p210 = por %p208, %p209
    %p211 = scmp.ne.s32.totalorder %s199, %s200
    %p212 = scmp.eq.s32.totalorder %s22, 1
    %p213 = por %p211, %p212
    %p215 = scmp.ne.s32.totalorder %s200, %s214
    %p216 = scmp.eq.s32.totalorder %s22, 0
    %p217 = por %p215, %p216
    %s219 = sadd.s32 %s218, 1
    %p222 = scmp.eq.s32.totalorder %s16, 1
    %p223 = scmp.ne.s32.totalorder %s218, %s220
    %p224 = scmp.eq.s32.totalorder %s16, 0
    %p225 = por %p223, %p224
    %p226 = scmp.ne.s32.totalorder %s218, %s220
    %p227 = scmp.eq.s32.totalorder %s21, 1
    %p228 = por %p226, %p227
    %p229 = scmp.ne.s32.totalorder %s220, %s221
    %p230 = scmp.eq.s32.totalorder %s21, 0
    %p231 = por %p229, %p230
    %p232 = scmp.ne.s32.totalorder %s220, %s221
    %p233 = scmp.eq.s32.totalorder %s22, 1
    %p234 = por %p232, %p233
    %p236 = scmp.ne.s32.totalorder %s221, %s235
    %p237 = scmp.eq.s32.totalorder %s22, 0
    %p238 = por %p236, %p237
    %s239 = ssub.s32 %s16, %s23
    %p240 = scmp.eq.s32.totalorder %s239, 0
    %s242 = sadd.s32 %s241, 1
    %s243 = scalar_select %p240, %s241, %s242
    %p246 = pneg %p240
    %p247 = scmp.eq.s32.totalorder %s16, 1
    %p248 = por %p246, %p247
    %p249 = scmp.ne.s32.totalorder %s241, %s244
    %p250 = scmp.eq.s32.totalorder %s16, 0
    %p251 = por %p249, %p250
    %p252 = scmp.ne.s32.totalorder %s241, %s244
    %p253 = scmp.eq.s32.totalorder %s21, 1
    %p254 = por %p252, %p253
    %p255 = scmp.ne.s32.totalorder %s244, %s245
    %p256 = scmp.eq.s32.totalorder %s21, 0
    %p257 = por %p255, %p256
    %p258 = scmp.ne.s32.totalorder %s244, %s245
    %p259 = scmp.eq.s32.totalorder %s22, 1
    %p260 = por %p258, %p259
    %p262 = scmp.ne.s32.totalorder %s245, %s261
    %p263 = scmp.eq.s32.totalorder %s22, 0
    %p264 = por %p262, %p263
    %p265 = scmp.le.s32.totalorder 1, %s16
    %p266 = scmp.lt.s32.totalorder %s16, 3
    %p267 = pnand %p265, %p266
    %p268 = pneg %p267
    // Predicated region
    $region9: #{depthwise_forward_nhwc.1} parent=5 // pred_check
      _
    $region10: #{depthwise_forward_nhwc.1} parent=5 // pred_check_branch
      %270 = sbr.rel (%p267) target = $region12
    $region11: #{depthwise_forward_nhwc.1} parent=5 // pred_region
      %s271 = ssub.s32 %s16, 1
      // Predicated region
      $region13: #{depthwise_forward_nhwc.1} parent=11 // pred_check
        %p272 = pneg %p63
      $region14: #{depthwise_forward_nhwc.1} parent=11 // pred_check_branch
        %274 = sbr.rel (%p272) target = $region16
      $region15: #{depthwise_forward_nhwc.1} parent=11 // pred_region
        _
      $region16: #{depthwise_forward_nhwc.1} parent=11 // pred_fallthru
        _
      // Predicated region
      $region17: #{depthwise_forward_nhwc.1} parent=11 // pred_check
        %p275 = pneg %p84
      $region18: #{depthwise_forward_nhwc.1} parent=11 // pred_check_branch
        %277 = sbr.rel (%p275) target = $region20
      $region19: #{depthwise_forward_nhwc.1} parent=11 // pred_region
        _
      $region20: #{depthwise_forward_nhwc.1} parent=11 // pred_fallthru
        _
      // Predicated region
      $region21: #{depthwise_forward_nhwc.1} parent=11 // pred_check
        %p278 = pneg %p105
      $region22: #{depthwise_forward_nhwc.1} parent=11 // pred_check_branch
        %280 = sbr.rel (%p278) target = $region24
      $region23: #{depthwise_forward_nhwc.1} parent=11 // pred_region
        _
      $region24: #{depthwise_forward_nhwc.1} parent=11 // pred_fallthru
        _
      // Predicated region
      $region25: #{depthwise_forward_nhwc.1} parent=11 // pred_check
        %p281 = pneg %p126
      $region26: #{depthwise_forward_nhwc.1} parent=11 // pred_check_branch
        %283 = sbr.rel (%p281) target = $region28
      $region27: #{depthwise_forward_nhwc.1} parent=11 // pred_region
        _
      $region28: #{depthwise_forward_nhwc.1} parent=11 // pred_fallthru
        _
      // Predicated region
      $region29: #{depthwise_forward_nhwc.1} parent=11 // pred_check
        %p284 = pneg %p147
      $region30: #{depthwise_forward_nhwc.1} parent=11 // pred_check_branch
        %286 = sbr.rel (%p284) target = $region32
      $region31: #{depthwise_forward_nhwc.1} parent=11 // pred_region
        _
      $region32: #{depthwise_forward_nhwc.1} parent=11 // pred_fallthru
        _
      // Predicated region
      $region33: #{depthwise_forward_nhwc.1} parent=11 // pred_check
        %p287 = pneg %p168
      $region34: #{depthwise_forward_nhwc.1} parent=11 // pred_check_branch
        %289 = sbr.rel (%p287) target = $region36
      $region35: #{depthwise_forward_nhwc.1} parent=11 // pred_region
        _
      $region36: #{depthwise_forward_nhwc.1} parent=11 // pred_fallthru
        _
      // Predicated region
      $region37: #{depthwise_forward_nhwc.1} parent=11 // pred_check
        %p290 = pneg %p189
      $region38: #{depthwise_forward_nhwc.1} parent=11 // pred_check_branch
        %292 = sbr.rel (%p290) target = $region40
      $region39: #{depthwise_forward_nhwc.1} parent=11 // pred_region
        _
      $region40: #{depthwise_forward_nhwc.1} parent=11 // pred_fallthru
        _
      // Predicated region
      $region41: #{depthwise_forward_nhwc.1} parent=11 // pred_check
        %p293 = pneg %p210
      $region42: #{depthwise_forward_nhwc.1} parent=11 // pred_check_branch
        %295 = sbr.rel (%p293) target = $region44
      $region43: #{depthwise_forward_nhwc.1} parent=11 // pred_region
        _
      $region44: #{depthwise_forward_nhwc.1} parent=11 // pred_fallthru
        _
      // Predicated region
      $region45: #{depthwise_forward_nhwc.1} parent=11 // pred_check
        %p296 = pneg %p231
      $region46: #{depthwise_forward_nhwc.1} parent=11 // pred_check_branch
        %298 = sbr.rel (%p296) target = $region48
      $region47: #{depthwise_forward_nhwc.1} parent=11 // pred_region
        _
      $region48: #{depthwise_forward_nhwc.1} parent=11 // pred_fallthru
        _
    $region12: #{depthwise_forward_nhwc.1} parent=5 // pred_fallthru
      _
    %p299 = scmp.lt.s32.totalorder %s16, 2
    // Predicated region
    $region49: #{depthwise_forward_nhwc.1} parent=5 // pred_check
      %p300 = pneg %p299
    $region50: #{depthwise_forward_nhwc.1} parent=5 // pred_check_branch
      %302 = sbr.rel (%p300) target = $region52
    $region51: #{depthwise_forward_nhwc.1} parent=5 // pred_region
      // Predicated region
      $region53: #{depthwise_forward_nhwc.1} parent=51 // pred_check
        %p303 = pneg %p36
      $region54: #{depthwise_forward_nhwc.1} parent=51 // pred_check_branch
        %305 = sbr.rel (%p303) target = $region56
      $region55: #{depthwise_forward_nhwc.1} parent=51 // pred_region
        %s306 = smul.u32 2, %s16
        %p307 = scmp.lt.s32.totalorder %s306, 3
        %s308 = scalar_select %p307, %s306, 3
        %s309 = smul.addr %s308, 4
        %s310 = scalar_lea.vmem %s0, %s309
        %s311 = smul.u32 2, %s16
      $region56: #{depthwise_forward_nhwc.1} parent=51 // pred_fallthru
        _
    $region52: #{depthwise_forward_nhwc.1} parent=5 // pred_fallthru
      _
    %p312 = scmp.le.s32.totalorder 1, %s16
    %p313 = scmp.lt.s32.totalorder %s16, 3
    %p314 = pnand %p312, %p313
    %p315 = pneg %p314
    // Predicated region
    $region57: #{depthwise_forward_nhwc.1} parent=5 // pred_check
      _
    $region58: #{depthwise_forward_nhwc.1} parent=5 // pred_check_branch
      %317 = sbr.rel (%p314) target = $region60
    $region59: #{depthwise_forward_nhwc.1} parent=5 // pred_region
      %s318 = ssub.s32 %s16, 1
      %s319 = smul.u32 2, %s21
      %p320 = scmp.lt.s32.totalorder %s319, 3
      %s321 = scalar_select %p320, %s319, 3
      %s322 = smul.addr %s321, 4
      %s323 = scalar_lea.vmem %s0, %s322
      %p324 = pneg %p42
      %p325 = pneg %p39
      %p326 = pneg %p63
      %p327 = pneg %p60
      %p328 = pneg %p84
      %p329 = pneg %p81
      %p330 = pneg %p105
      %p331 = pneg %p102
      %p332 = pneg %p126
      %p333 = pneg %p123
      %p334 = pneg %p147
      %p335 = pneg %p144
      %p336 = pneg %p168
      %p337 = pneg %p165
      %p338 = pneg %p189
      %p339 = pneg %p186
      %p340 = pneg %p210
      %p341 = pneg %p207
      %p342 = pneg %p231
      %p343 = pneg %p228
      %p344 = pneg %p257
      %p345 = pneg %p254
      %s346 = smul.u32 2, %s21
      %p347 = scmp.lt.s32.totalorder %s346, 3
      %s348 = scalar_select %p347, %s346, 3
      %s349 = smul.addr %s348, 8
      %s350 = scalar_lea.vmem %s10, %s349
      %s351 = smul.u32 2, %s21
      %p352 = scmp.lt.s32.totalorder %s351, 3
      %s353 = scalar_select %p352, %s351, 3
      %s354 = smul.addr %s353, 4
      %s355 = scalar_lea.vmem %s0, %s354
      %s356 = smul.u32 2, %s21
      %s357 = smul.u32 2, %s21
      %p358 = scmp.lt.s32.totalorder %s357, 3
      %s359 = scalar_select %p358, %s357, 3
      %s360 = smul.addr %s359, 8
      %s361 = scalar_lea.vmem %s10, %s360
      %s362 = smul.u32 2, %s21
      %v364 = vld [vmem:[%s355] sm:$0xf]
      %v365 = vld [vmem:[%s355 + $0x4] sm:$0xf]
      %v366 = vld [vmem:[%s1] sm:$0xf]
      %v367 = vld [vmem:[%s1 + $0x4] sm:$0xf]
      %v370 = vunpack.c.l.b16 %v366
      %v371 = vunpack.c.l.b16 %v367
      %v372 = vpack.c.b16 %v371, %v370
      %v375 = vunpack.c.l.b16 %v364
      %v376 = vunpack.c.l.b16 %v365
      %v377 = vpack.c.b16 %v376, %v375
      %vm379 = vcmask 130048
      %v381 = vsel %vm379, %v372, 0
      %383 = vmatprep.subr.bf16.mxu0 0
      %384 = vmatpush1.bf16.msra.mxu0 0
      %385 = vmatprep.subr.bf16.mxu0 0
      %386 = vmatpush1.bf16.msra.mxu0 0
      %387 = vmatprep.subr.bf16.mxu0 0
      %388 = vmatpush1.bf16.msra.mxu0 0
      %389 = vmatprep.subr.bf16.mxu0 0
      %390 = vmatpush1.bf16.msra.mxu0 0
      %391 = vmatprep.subr.bf16.mxu0 0
      %392 = vmatpush1.bf16.msra.mxu0 0
      %393 = vmatprep.subr.bf16.mxu0 0
      %394 = vmatpush1.bf16.msra.mxu0 0
      %395 = vmatprep.subr.bf16.mxu0 0
      %396 = vmatpush1.bf16.msra.mxu0 0
      %397 = vmatprep.subr.bf16.mxu0 0
      %398 = vmatpush1.bf16.msra.mxu0 %v377
      %399 = vmatprep.subr.bf16.mxu0 0
      %400 = vmatpush2.bf16.msra.mxu0 0
      %401 = vmatprep.subr.bf16.mxu0 0
      %402 = vmatpush2.bf16.msra.mxu0 0
      %403 = vmatprep.subr.bf16.mxu0 0
      %404 = vmatpush2.bf16.msra.mxu0 0
      %405 = vmatprep.subr.bf16.mxu0 0
      %406 = vmatpush2.bf16.msra.mxu0 0
      %407 = vmatprep.subr.bf16.mxu0 0
      %408 = vmatpush2.bf16.msra.mxu0 0
      %409 = vmatprep.subr.bf16.mxu0 0
      %410 = vmatpush2.bf16.msra.mxu0 0
      %411 = vmatprep.subr.bf16.mxu0 0
      %412 = vmatpush2.bf16.msra.mxu0 0
      %413 = vmatprep.subr.bf16.mxu0 0
      %414 = vmatpush2.bf16.msra.mxu0 0
      %415 = vmatprep.mubr.bf16.mxu0 0
      %416 = vmatmul.mubr.bf16.gmra.mxu0 %v381
      %v417 = vpop.f32.mrf.mxu0
      %v418 = vadd.f32 0.0, %v417
      %v419 = vpop.f32.mrf.mxu0
      %v420 = vpop.f32.mrf.mxu0
      %v421 = vadd.f32 0.0, %v420
      %v422 = vpop.f32.mrf.mxu0
      %423 = vdwg.mxu0
      %v424 = vpack.c.bf16 %v421, %v418
      %v425 = vld [vmem:[%s2] sm:$0xf]
      %v426 = vld [vmem:[%s2 + $0x4] sm:$0xf]
      %v427 = vld [vmem:[%s2 + $0x8] sm:$0xf]
      %v428 = vld [vmem:[%s2 + $0xc] sm:$0xf]
      %v429 = vld [vmem:[%s2 + $0x10] sm:$0xf]
      %v430 = vld [vmem:[%s2 + $0x14] sm:$0xf]
      %v431 = vld [vmem:[%s2 + $0x18] sm:$0xf]
      %v432 = vld [vmem:[%s2 + $0x1c] sm:$0xf]
      %s433 = scalar_lea.vmem %s1, 8
      %v434 = vld [vmem:[%s433] sm:$0xf]
      %v435 = vld [vmem:[%s433 + $0x4] sm:$0xf]
      %v438 = vunpack.c.l.b16 %v434
      %v439 = vunpack.c.l.b16 %v435
      %v440 = vpack.c.b16 %v439, %v438
      %v442 = vsel %vm379, %v440, 0
      %444 = vmatprep.subr.bf16.mxu0 0
      %445 = vmatpush1.bf16.msra.mxu0 0
      %446 = vmatprep.subr.bf16.mxu0 0
      %447 = vmatpush1.bf16.msra.mxu0 0
      %448 = vmatprep.subr.bf16.mxu0 0
      %449 = vmatpush1.bf16.msra.mxu0 0
      %450 = vmatprep.subr.bf16.mxu0 0
      %451 = vmatpush1.bf16.msra.mxu0 0
      %452 = vmatprep.subr.bf16.mxu0 0
      %453 = vmatpush1.bf16.msra.mxu0 0
      %454 = vmatprep.subr.bf16.mxu0 0
      %455 = vmatpush1.bf16.msra.mxu0 0
      %456 = vmatprep.subr.bf16.mxu0 0
      %457 = vmatpush1.bf16.msra.mxu0 0
      %458 = vmatprep.subr.bf16.mxu0 0
      %459 = vmatpush1.bf16.msra.mxu0 %v377
      %460 = vmatprep.subr.bf16.mxu0 0
      %461 = vmatpush2.bf16.msra.mxu0 0
      %462 = vmatprep.subr.bf16.mxu0 0
      %463 = vmatpush2.bf16.msra.mxu0 0
      %464 = vmatprep.subr.bf16.mxu0 0
      %465 = vmatpush2.bf16.msra.mxu0 0
      %466 = vmatprep.subr.bf16.mxu0 0
      %467 = vmatpush2.bf16.msra.mxu0 0
      %468 = vmatprep.subr.bf16.mxu0 0
      %469 = vmatpush2.bf16.msra.mxu0 0
      %470 = vmatprep.subr.bf16.mxu0 0
      %471 = vmatpush2.bf16.msra.mxu0 0
      %472 = vmatprep.subr.bf16.mxu0 0
      %473 = vmatpush2.bf16.msra.mxu0 0
      %474 = vmatprep.subr.bf16.mxu0 0
      %475 = vmatpush2.bf16.msra.mxu0 0
      %476 = vmatprep.mubr.bf16.mxu0 0
      %477 = vmatmul.mubr.bf16.gmra.mxu0 %v442
      %v478 = vpop.f32.mrf.mxu0
      %v479 = vadd.f32 0.0, %v478
      %v480 = vpop.f32.mrf.mxu0
      %v481 = vpop.f32.mrf.mxu0
      %v482 = vadd.f32 0.0, %v481
      %v483 = vpop.f32.mrf.mxu0
      %484 = vdwg.mxu0
      %v485 = vpack.c.bf16 %v482, %v479
      %s486 = scalar_lea.vmem %s2, 32
      %v487 = vld [vmem:[%s486] sm:$0xf]
      %v488 = vld [vmem:[%s486 + $0x4] sm:$0xf]
      %v489 = vld [vmem:[%s486 + $0x8] sm:$0xf]
      %v490 = vld [vmem:[%s486 + $0xc] sm:$0xf]
      %v491 = vld [vmem:[%s486 + $0x10] sm:$0xf]
      %v492 = vld [vmem:[%s486 + $0x14] sm:$0xf]
      %v493 = vld [vmem:[%s486 + $0x18] sm:$0xf]
      %v494 = vld [vmem:[%s486 + $0x1c] sm:$0xf]
      %v503 = vunpack.c.l.b16 %v487
      %v504 = vunpack.c.l.b16 %v488
      %v505 = vunpack.c.l.b16 %v489
      %v506 = vunpack.c.l.b16 %v490
      %v507 = vunpack.c.l.b16 %v491
      %v508 = vunpack.c.l.b16 %v492
      %v509 = vunpack.c.l.b16 %v493
      %v510 = vunpack.c.l.b16 %v494
      %v511 = vpack.c.b16 %v504, %v503
      %v512 = vpack.c.b16 %v506, %v505
      %v513 = vpack.c.b16 %v508, %v507
      %v514 = vpack.c.b16 %v510, %v509
      %vm519 = vcmask 523264
      %v521 = vsel %vm519, %v485, 0
      %523 = vmatprep.subr.bf16.mxu0 0
      %524 = vmatpush1.bf16.msra.mxu0 0
      %525 = vmatprep.subr.bf16.mxu0 0
      %526 = vmatpush1.bf16.msra.mxu0 0
      %527 = vmatprep.subr.bf16.mxu0 0
      %528 = vmatpush1.bf16.msra.mxu0 0
      %529 = vmatprep.subr.bf16.mxu0 0
      %530 = vmatpush1.bf16.msra.mxu0 0
      %531 = vmatprep.subr.bf16.mxu0 0
      %532 = vmatpush1.bf16.msra.mxu0 %v514
      %533 = vmatprep.subr.bf16.mxu0 0
      %534 = vmatpush1.bf16.msra.mxu0 %v513
      %535 = vmatprep.subr.bf16.mxu0 0
      %536 = vmatpush1.bf16.msra.mxu0 %v512
      %537 = vmatprep.subr.bf16.mxu0 0
      %538 = vmatpush1.bf16.msra.mxu0 %v511
      %539 = vmatprep.subr.bf16.mxu0 0
      %540 = vmatpush2.bf16.msra.mxu0 0
      %541 = vmatprep.subr.bf16.mxu0 0
      %542 = vmatpush2.bf16.msra.mxu0 0
      %543 = vmatprep.subr.bf16.mxu0 0
      %544 = vmatpush2.bf16.msra.mxu0 0
      %545 = vmatprep.subr.bf16.mxu0 0
      %546 = vmatpush2.bf16.msra.mxu0 0
      %547 = vmatprep.subr.bf16.mxu0 0
      %548 = vmatpush2.bf16.msra.mxu0 0
      %549 = vmatprep.subr.bf16.mxu0 0
      %550 = vmatpush2.bf16.msra.mxu0 0
      %551 = vmatprep.subr.bf16.mxu0 0
      %552 = vmatpush2.bf16.msra.mxu0 0
      %553 = vmatprep.subr.bf16.mxu0 0
      %554 = vmatpush2.bf16.msra.mxu0 0
      %555 = vmatprep.mubr.bf16.mxu0 0
      %556 = vmatmul.mubr.bf16.gmra.mxu0 %v521
      %v557 = vpop.f32.mrf.mxu0
      %v558 = vadd.f32 0.0, %v557
      %v559 = vpop.f32.mrf.mxu0
      %v560 = vpop.f32.mrf.mxu0
      %v561 = vadd.f32 0.0, %v560
      %v562 = vpop.f32.mrf.mxu0
      %563 = vdwg.mxu0
      %v572 = vunpack.c.l.b16 %v425
      %v573 = vunpack.c.l.b16 %v426
      %v574 = vunpack.c.l.b16 %v427
      %v575 = vunpack.c.l.b16 %v428
      %v576 = vunpack.c.l.b16 %v429
      %v577 = vunpack.c.l.b16 %v430
      %v578 = vunpack.c.l.b16 %v431
      %v579 = vunpack.c.l.b16 %v432
      %v580 = vpack.c.b16 %v573, %v572
      %v581 = vpack.c.b16 %v575, %v574
      %v582 = vpack.c.b16 %v577, %v576
      %v583 = vpack.c.b16 %v579, %v578
      %v589 = vsel %vm519, %v424, 0
      %591 = vmatprep.subr.bf16.mxu0 0
      %592 = vmatpush1.bf16.msra.mxu0 0
      %593 = vmatprep.subr.bf16.mxu0 0
      %594 = vmatpush1.bf16.msra.mxu0 0
      %595 = vmatprep.subr.bf16.mxu0 0
      %596 = vmatpush1.bf16.msra.mxu0 0
      %597 = vmatprep.subr.bf16.mxu0 0
      %598 = vmatpush1.bf16.msra.mxu0 0
      %599 = vmatprep.subr.bf16.mxu0 0
      %600 = vmatpush1.bf16.msra.mxu0 %v583
      %601 = vmatprep.subr.bf16.mxu0 0
      %602 = vmatpush1.bf16.msra.mxu0 %v582
      %603 = vmatprep.subr.bf16.mxu0 0
      %604 = vmatpush1.bf16.msra.mxu0 %v581
      %605 = vmatprep.subr.bf16.mxu0 0
      %606 = vmatpush1.bf16.msra.mxu0 %v580
      %607 = vmatprep.subr.bf16.mxu0 0
      %608 = vmatpush2.bf16.msra.mxu0 0
      %609 = vmatprep.subr.bf16.mxu0 0
      %610 = vmatpush2.bf16.msra.mxu0 0
      %611 = vmatprep.subr.bf16.mxu0 0
      %612 = vmatpush2.bf16.msra.mxu0 0
      %613 = vmatprep.subr.bf16.mxu0 0
      %614 = vmatpush2.bf16.msra.mxu0 0
      %615 = vmatprep.subr.bf16.mxu0 0
      %616 = vmatpush2.bf16.msra.mxu0 0
      %617 = vmatprep.subr.bf16.mxu0 0
      %618 = vmatpush2.bf16.msra.mxu0 0
      %619 = vmatprep.subr.bf16.mxu0 0
      %620 = vmatpush2.bf16.msra.mxu0 0
      %621 = vmatprep.subr.bf16.mxu0 0
      %622 = vmatpush2.bf16.msra.mxu0 0
      %623 = vmatprep.mubr.bf16.mxu0 0
      %624 = vmatmul.mubr.bf16.gmra.mxu0 %v589
      %v625 = vpop.f32.mrf.mxu0
      %v626 = vadd.f32 %v558, %v625
      %v627 = vpop.f32.mrf.mxu0
      %v628 = vpop.f32.mrf.mxu0
      %v629 = vadd.f32 %v561, %v628
      %v630 = vpop.f32.mrf.mxu0
      %631 = vdwg.mxu0
      %s632 = scalar_lea.vmem %s1, 16
      %v633 = vld [vmem:[%s632] sm:$0xf]
      %v634 = vld [vmem:[%s632 + $0x4] sm:$0xf]
      %v637 = vunpack.c.l.b16 %v633
      %v638 = vunpack.c.l.b16 %v634
      %v639 = vpack.c.b16 %v638, %v637
      %v641 = vsel %vm379, %v639, 0
      %643 = vmatprep.subr.bf16.mxu0 0
      %644 = vmatpush1.bf16.msra.mxu0 0
      %645 = vmatprep.subr.bf16.mxu0 0
      %646 = vmatpush1.bf16.msra.mxu0 0
      %647 = vmatprep.subr.bf16.mxu0 0
      %648 = vmatpush1.bf16.msra.mxu0 0
      %649 = vmatprep.subr.bf16.mxu0 0
      %650 = vmatpush1.bf16.msra.mxu0 0
      %651 = vmatprep.subr.bf16.mxu0 0
      %652 = vmatpush1.bf16.msra.mxu0 0
      %653 = vmatprep.subr.bf16.mxu0 0
      %654 = vmatpush1.bf16.msra.mxu0 0
      %655 = vmatprep.subr.bf16.mxu0 0
      %656 = vmatpush1.bf16.msra.mxu0 0
      %657 = vmatprep.subr.bf16.mxu0 0
      %658 = vmatpush1.bf16.msra.mxu0 %v377
      %659 = vmatprep.subr.bf16.mxu0 0
      %660 = vmatpush2.bf16.msra.mxu0 0
      %661 = vmatprep.subr.bf16.mxu0 0
      %662 = vmatpush2.bf16.msra.mxu0 0
      %663 = vmatprep.subr.bf16.mxu0 0
      %664 = vmatpush2.bf16.msra.mxu0 0
      %665 = vmatprep.subr.bf16.mxu0 0
      %666 = vmatpush2.bf16.msra.mxu0 0
      %667 = vmatprep.subr.bf16.mxu0 0
      %668 = vmatpush2.bf16.msra.mxu0 0
      %669 = vmatprep.subr.bf16.mxu0 0
      %670 = vmatpush2.bf16.msra.mxu0 0
      %671 = vmatprep.subr.bf16.mxu0 0
      %672 = vmatpush2.bf16.msra.mxu0 0
      %673 = vmatprep.subr.bf16.mxu0 0
      %674 = vmatpush2.bf16.msra.mxu0 0
      %675 = vmatprep.mubr.bf16.mxu0 0
      %676 = vmatmul.mubr.bf16.gmra.mxu0 %v641
      %v677 = vpop.f32.mrf.mxu0
      %v678 = vadd.f32 0.0, %v677
      %v679 = vpop.f32.mrf.mxu0
      %v680 = vpop.f32.mrf.mxu0
      %v681 = vadd.f32 0.0, %v680
      %v682 = vpop.f32.mrf.mxu0
      %683 = vdwg.mxu0
      %v684 = vpack.c.bf16 %v681, %v678
      %s685 = scalar_lea.vmem %s2, 64
      %v686 = vld [vmem:[%s685] sm:$0xf]
      %v687 = vld [vmem:[%s685 + $0x4] sm:$0xf]
      %v688 = vld [vmem:[%s685 + $0x8] sm:$0xf]
      %v689 = vld [vmem:[%s685 + $0xc] sm:$0xf]
      %v690 = vld [vmem:[%s685 + $0x10] sm:$0xf]
      %v691 = vld [vmem:[%s685 + $0x14] sm:$0xf]
      %v692 = vld [vmem:[%s685 + $0x18] sm:$0xf]
      %v693 = vld [vmem:[%s685 + $0x1c] sm:$0xf]
      %v702 = vunpack.c.l.b16 %v686
      %v703 = vunpack.c.l.b16 %v687
      %v704 = vunpack.c.l.b16 %v688
      %v705 = vunpack.c.l.b16 %v689
      %v706 = vunpack.c.l.b16 %v690
      %v707 = vunpack.c.l.b16 %v691
      %v708 = vunpack.c.l.b16 %v692
      %v709 = vunpack.c.l.b16 %v693
      %v710 = vpack.c.b16 %v703, %v702
      %v711 = vpack.c.b16 %v705, %v704
      %v712 = vpack.c.b16 %v707, %v706
      %v713 = vpack.c.b16 %v709, %v708
      %v719 = vsel %vm519, %v684, 0
      %721 = vmatprep.subr.bf16.mxu0 0
      %722 = vmatpush1.bf16.msra.mxu0 0
      %723 = vmatprep.subr.bf16.mxu0 0
      %724 = vmatpush1.bf16.msra.mxu0 0
      %725 = vmatprep.subr.bf16.mxu0 0
      %726 = vmatpush1.bf16.msra.mxu0 0
      %727 = vmatprep.subr.bf16.mxu0 0
      %728 = vmatpush1.bf16.msra.mxu0 0
      %729 = vmatprep.subr.bf16.mxu0 0
      %730 = vmatpush1.bf16.msra.mxu0 %v713
      %731 = vmatprep.subr.bf16.mxu0 0
      %732 = vmatpush1.bf16.msra.mxu0 %v712
      %733 = vmatprep.subr.bf16.mxu0 0
      %734 = vmatpush1.bf16.msra.mxu0 %v711
      %735 = vmatprep.subr.bf16.mxu0 0
      %736 = vmatpush1.bf16.msra.mxu0 %v710
      %737 = vmatprep.subr.bf16.mxu0 0
      %738 = vmatpush2.bf16.msra.mxu0 0
      %739 = vmatprep.subr.bf16.mxu0 0
      %740 = vmatpush2.bf16.msra.mxu0 0
      %741 = vmatprep.subr.bf16.mxu0 0
      %742 = vmatpush2.bf16.msra.mxu0 0
      %743 = vmatprep.subr.bf16.mxu0 0
      %744 = vmatpush2.bf16.msra.mxu0 0
      %745 = vmatprep.subr.bf16.mxu0 0
      %746 = vmatpush2.bf16.msra.mxu0 0
      %747 = vmatprep.subr.bf16.mxu0 0
      %748 = vmatpush2.bf16.msra.mxu0 0
      %749 = vmatprep.subr.bf16.mxu0 0
      %750 = vmatpush2.bf16.msra.mxu0 0
      %751 = vmatprep.subr.bf16.mxu0 0
      %752 = vmatpush2.bf16.msra.mxu0 0
      %753 = vmatprep.mubr.bf16.mxu0 0
      %754 = vmatmul.mubr.bf16.gmra.mxu0 %v719
      %v755 = vpop.f32.mrf.mxu0
      %v756 = vadd.f32 0.0, %v755
      %v757 = vpop.f32.mrf.mxu0
      %v758 = vpop.f32.mrf.mxu0
      %v759 = vadd.f32 0.0, %v758
      %v760 = vpop.f32.mrf.mxu0
      %761 = vdwg.mxu0
      %v762 = vadd.f32 %v626, %v756
      %v763 = vadd.f32 %v629, %v759
      %v764 = vld [vmem:[%s3] sm:$0x1]
      %v766 = vlaneseq
      %v767 = vshrl.u32 %v766, 7
      %v768 = vsub.s32 0, %v767
      %v769 = vrot.slane %v764, %v768
      %v771 = vadd.f32 %v762, %v769
      %v772 = vadd.f32 %v763, %v769
      %v773 = vmax.f32 %v771, 0.0
      %v774 = vmax.f32 %v772, 0.0
      %v775 = vpack.c.bf16 %v774, %v773
      %v776 = vld [vmem:[%s8] sm:$0x1]
      %v778 = vsel %vm379, %v776, 0
      %780 = vmatprep.subr.bf16.mxu0 0
      %781 = vmatpush1.bf16.msra.mxu0 0
      %782 = vmatprep.subr.bf16.mxu0 0
      %783 = vmatpush1.bf16.msra.mxu0 0
      %784 = vmatprep.subr.bf16.mxu0 0
      %785 = vmatpush1.bf16.msra.mxu0 0
      %786 = vmatprep.subr.bf16.mxu0 0
      %787 = vmatpush1.bf16.msra.mxu0 0
      %788 = vmatprep.subr.bf16.mxu0 0
      %789 = vmatpush1.bf16.msra.mxu0 0
      %790 = vmatprep.subr.bf16.mxu0 0
      %791 = vmatpush1.bf16.msra.mxu0 0
      %792 = vmatprep.subr.bf16.mxu0 0
      %793 = vmatpush1.bf16.msra.mxu0 0
      %794 = vmatprep.subr.bf16.mxu0 0
      %795 = vmatpush1.bf16.msra.mxu0 %v775
      %796 = vmatprep.subr.bf16.mxu0 0
      %797 = vmatpush2.bf16.msra.mxu0 0
      %798 = vmatprep.subr.bf16.mxu0 0
      %799 = vmatpush2.bf16.msra.mxu0 0
      %800 = vmatprep.subr.bf16.mxu0 0
      %801 = vmatpush2.bf16.msra.mxu0 0
      %802 = vmatprep.subr.bf16.mxu0 0
      %803 = vmatpush2.bf16.msra.mxu0 0
      %804 = vmatprep.subr.bf16.mxu0 0
      %805 = vmatpush2.bf16.msra.mxu0 0
      %806 = vmatprep.subr.bf16.mxu0 0
      %807 = vmatpush2.bf16.msra.mxu0 0
      %808 = vmatprep.subr.bf16.mxu0 0
      %809 = vmatpush2.bf16.msra.mxu0 0
      %810 = vmatprep.subr.bf16.mxu0 0
      %811 = vmatpush2.bf16.msra.mxu0 0
      %812 = vmatprep.mubr.bf16.mxu0 0
      %813 = vmatmul.mubr.bf16.gmra.mxu0 %v778
      %v814 = vpop.f32.mrf.mxu0
      %v815 = vadd.f32 0.0, %v814
      %v816 = vpop.f32.mrf.mxu0
      %v817 = vpop.f32.mrf.mxu0
      %v818 = vpop.f32.mrf.mxu0
      %819 = vdwg.mxu0
      %v820 = vpack.c.bf16 %v815, %v815
      %v821 = vld [vmem:[%s4] sm:$0xf]
      %v822 = vld [vmem:[%s4 + $0x4] sm:$0xf]
      %v823 = vld [vmem:[%s4 + $0x8] sm:$0xf]
      %v824 = vld [vmem:[%s4 + $0xc] sm:$0xf]
      %v825 = vld [vmem:[%s4 + $0x10] sm:$0xf]
      %v826 = vld [vmem:[%s4 + $0x14] sm:$0xf]
      %v827 = vld [vmem:[%s4 + $0x18] sm:$0xf]
      %v828 = vld [vmem:[%s4 + $0x1c] sm:$0xf]
      %v829 = vld [vmem:[%s4 + $0x20] sm:$0xf]
      %v830 = vld [vmem:[%s4 + $0x24] sm:$0xf]
      %v831 = vld [vmem:[%s4 + $0x28] sm:$0xf]
      %v832 = vld [vmem:[%s4 + $0x2c] sm:$0xf]
      %v833 = vld [vmem:[%s4 + $0x30] sm:$0xf]
      %v834 = vld [vmem:[%s4 + $0x34] sm:$0xf]
      %v835 = vld [vmem:[%s4 + $0x38] sm:$0xf]
      %v836 = vld [vmem:[%s4 + $0x3c] sm:$0xf]
      %v853 = vunpack.c.l.b16 %v821
      %v854 = vunpack.c.l.b16 %v822
      %v855 = vunpack.c.l.b16 %v823
      %v856 = vunpack.c.l.b16 %v824
      %v857 = vunpack.c.l.b16 %v825
      %v858 = vunpack.c.l.b16 %v826
      %v859 = vunpack.c.l.b16 %v827
      %v860 = vunpack.c.l.b16 %v828
      %v861 = vunpack.c.l.b16 %v829
      %v862 = vunpack.c.l.b16 %v830
      %v863 = vunpack.c.l.b16 %v831
      %v864 = vunpack.c.l.b16 %v832
      %v865 = vunpack.c.l.b16 %v833
      %v866 = vunpack.c.l.b16 %v834
      %v867 = vunpack.c.l.b16 %v835
      %v868 = vunpack.c.l.b16 %v836
      %v869 = vpack.c.b16 %v854, %v853
      %v870 = vpack.c.b16 %v856, %v855
      %v871 = vpack.c.b16 %v858, %v857
      %v872 = vpack.c.b16 %v860, %v859
      %v873 = vpack.c.b16 %v862, %v861
      %v874 = vpack.c.b16 %v864, %v863
      %v875 = vpack.c.b16 %v866, %v865
      %v876 = vpack.c.b16 %v868, %v867
      %885 = vmatprep.subr.bf16.mxu0 0
      %886 = vmatpush1.bf16.msra.mxu0 %v876
      %887 = vmatprep.subr.bf16.mxu0 0
      %888 = vmatpush1.bf16.msra.mxu0 %v875
      %889 = vmatprep.subr.bf16.mxu0 0
      %890 = vmatpush1.bf16.msra.mxu0 %v874
      %891 = vmatprep.subr.bf16.mxu0 0
      %892 = vmatpush1.bf16.msra.mxu0 %v873
      %893 = vmatprep.subr.bf16.mxu0 0
      %894 = vmatpush1.bf16.msra.mxu0 %v872
      %895 = vmatprep.subr.bf16.mxu0 0
      %896 = vmatpush1.bf16.msra.mxu0 %v871
      %897 = vmatprep.subr.bf16.mxu0 0
      %898 = vmatpush1.bf16.msra.mxu0 %v870
      %899 = vmatprep.subr.bf16.mxu0 0
      %900 = vmatpush1.bf16.msra.mxu0 %v869
      %901 = vmatprep.subr.bf16.mxu0 0
      %902 = vmatpush2.bf16.msra.mxu0 0
      %903 = vmatprep.subr.bf16.mxu0 0
      %904 = vmatpush2.bf16.msra.mxu0 0
      %905 = vmatprep.subr.bf16.mxu0 0
      %906 = vmatpush2.bf16.msra.mxu0 0
      %907 = vmatprep.subr.bf16.mxu0 0
      %908 = vmatpush2.bf16.msra.mxu0 0
      %909 = vmatprep.subr.bf16.mxu0 0
      %910 = vmatpush2.bf16.msra.mxu0 0
      %911 = vmatprep.subr.bf16.mxu0 0
      %912 = vmatpush2.bf16.msra.mxu0 0
      %913 = vmatprep.subr.bf16.mxu0 0
      %914 = vmatpush2.bf16.msra.mxu0 0
      %915 = vmatprep.subr.bf16.mxu0 0
      %916 = vmatpush2.bf16.msra.mxu0 0
      %917 = vmatprep.mubr.bf16.mxu0 0
      %918 = vmatmul.mubr.bf16.gmra.mxu0 %v820
      %v919 = vpop.f32.mrf.mxu0
      %v920 = vadd.f32 0.0, %v919
      %v921 = vpop.f32.mrf.mxu0
      %v922 = vpop.f32.mrf.mxu0
      %v923 = vpop.f32.mrf.mxu0
      %924 = vdwg.mxu0
      %v925 = vmul.f32 %v920, 0.00390625
      %v926 = vld [vmem:[%s5] sm:$0x1]
      %v927 = vadd.f32 %v925, %v926
      %v928 = vmax.f32 %v927, 0.0
      %v929 = vpack.c.bf16 %v928, %v928
      %v930 = vld [vmem:[%s6] sm:$0x1]
      %v931 = vld [vmem:[%s7] sm:$0x1]
      %vm932 = vcmask 15360
      %v934 = vsel %vm932, %v929, 0
      %vm936 = vcmask 1040384
      %v938 = vsel %vm936, %v930, 0
      %940 = vmatprep.subr.bf16.mxu0 0
      %941 = vmatpush1.bf16.msra.mxu0 0
      %942 = vmatprep.subr.bf16.mxu0 0
      %943 = vmatpush1.bf16.msra.mxu0 0
      %944 = vmatprep.subr.bf16.mxu0 0
      %945 = vmatpush1.bf16.msra.mxu0 0
      %946 = vmatprep.subr.bf16.mxu0 0
      %947 = vmatpush1.bf16.msra.mxu0 0
      %948 = vmatprep.subr.bf16.mxu0 0
      %949 = vmatpush1.bf16.msra.mxu0 0
      %950 = vmatprep.subr.bf16.mxu0 0
      %951 = vmatpush1.bf16.msra.mxu0 0
      %952 = vmatprep.subr.bf16.mxu0 0
      %953 = vmatpush1.bf16.msra.mxu0 0
      %954 = vmatprep.subr.bf16.mxu0 0
      %955 = vmatpush1.bf16.msra.mxu0 %v938
      %956 = vmatprep.subr.bf16.mxu0 0
      %957 = vmatpush2.bf16.msra.mxu0 0
      %958 = vmatprep.subr.bf16.mxu0 0
      %959 = vmatpush2.bf16.msra.mxu0 0
      %960 = vmatprep.subr.bf16.mxu0 0
      %961 = vmatpush2.bf16.msra.mxu0 0
      %962 = vmatprep.subr.bf16.mxu0 0
      %963 = vmatpush2.bf16.msra.mxu0 0
      %964 = vmatprep.subr.bf16.mxu0 0
      %965 = vmatpush2.bf16.msra.mxu0 0
      %966 = vmatprep.subr.bf16.mxu0 0
      %967 = vmatpush2.bf16.msra.mxu0 0
      %968 = vmatprep.subr.bf16.mxu0 0
      %969 = vmatpush2.bf16.msra.mxu0 0
      %970 = vmatprep.subr.bf16.mxu0 0
      %971 = vmatpush2.bf16.msra.mxu0 0
      %972 = vmatprep.mubr.bf16.mxu0 0
      %973 = vmatmul.mubr.bf16.gmra.mxu0 %v934
      %v974 = vpop.f32.mrf.mxu0
      %v975 = vadd.f32 %v931, %v974
      %v976 = vpop.f32.mrf.mxu0
      %v977 = vpop.f32.mrf.mxu0
      %v978 = vpop.f32.mrf.mxu0
      %979 = vdwg.mxu0
      %v980 = vxor.u32 %v975, 2147483648
      %v981 = vmul.f32 %v980, 1.442695
      %v982 = vpow.pop %v981
      %v983 = vadd.f32 %v982, 1.0
      %v984 = vrcp.pop %v983
      %v985 = vmul.f32 1.0, %v984
      %v986 = vlaneseq
      %v987 = vshrl.u32 %v986, 7
      %v988 = vsub.s32 0, %v987
      %v989 = vrot.slane %v985, %v988
      %v990 = vmul.f32 %v773, %v989
      %v991 = vmul.f32 %v774, %v989
      %992 = vst [vmem:[%s361] sm:$0xff] %v990
      %993 = vst [vmem:[%s361 + $0x8] sm:$0xff] %v991
      %s994 = smul.u32 2, %s21
      %p995 = scmp.lt.s32.totalorder %s994, 3
      %s996 = scalar_select %p995, %s994, 3
      %s997 = smul.addr %s996, 8
      %s998 = scalar_lea.vmem %s10, %s997
      // Predicated region
      $region61: #{depthwise_forward_nhwc.1} parent=59 // pred_check
        %p999 = pneg %p254
      $region62: #{depthwise_forward_nhwc.1} parent=59 // pred_check_branch
        %1001 = sbr.rel (%p999) target = $region64
      $region63: #{depthwise_forward_nhwc.1} parent=59 // pred_region
        %s1002 = smul.u32 2, %s21
      $region64: #{depthwise_forward_nhwc.1} parent=59 // pred_fallthru
        _
    $region60: #{depthwise_forward_nhwc.1} parent=5 // pred_fallthru
      _
    %p1003 = scmp.le.s32.totalorder 2, %s16
    // Predicated region
    $region65: #{depthwise_forward_nhwc.1} parent=5 // pred_check
      %p1004 = pneg %p1003
    $region66: #{depthwise_forward_nhwc.1} parent=5 // pred_check_branch
      %1006 = sbr.rel (%p1004) target = $region68
    $region67: #{depthwise_forward_nhwc.1} parent=5 // pred_region
      %s1007 = ssub.s32 %s16, 2
      // Predicated region
      $region69: #{depthwise_forward_nhwc.1} parent=67 // pred_check
        %p1008 = pneg %p260
      $region70: #{depthwise_forward_nhwc.1} parent=67 // pred_check_branch
        %1010 = sbr.rel (%p1008) target = $region72
      $region71: #{depthwise_forward_nhwc.1} parent=67 // pred_region
        %s1011 = smul.u32 2, %s22
        %p1012 = scmp.lt.s32.totalorder %s1011, 3
        %s1013 = scalar_select %p1012, %s1011, 3
        %s1014 = smul.addr %s1013, 8
        %s1015 = scalar_lea.vmem %s10, %s1014
      $region72: #{depthwise_forward_nhwc.1} parent=67 // pred_fallthru
        _
    $region68: #{depthwise_forward_nhwc.1} parent=5 // pred_fallthru
      _
  $region6: #{depthwise_forward_nhwc.1} parent=0 // loop_footer
    %s20 = sadd.s32 1, %s16
  $region7: #{depthwise_forward_nhwc.1} parent=0 // loop_footer_branch
    %15 = sbr.rel target = $region3
  $region8: #{depthwise_forward_nhwc.1} parent=0 // loop_exit
    _

// kernel: tile.34
$region0: #{tile.34}
  %s0 = inlined_call_operand.vmem [shape: bf16[8,16,8], index: 0, kind: input, shape index: {}]
  %s1 = inlined_call_operand.vmem [shape: bf16[8,128], index: 1, kind: output, shape index: {}]
  $region1: #{tile.34} parent=0
    #allocation0 [shape = 'u8[4096]{0}', space=vmem, size = 0x1000, scoped, tag = 'scoped mem for output reshape']
    #allocation1 [shape = 'u8[65536]{0}', space=vmem, size = 0x10000, scoped, tag = 'scoped mem for input reshape']
    %s3 = smul.u32 4, 2
    %s4 = sshll.u32 1, %s3
    %s5 = ssub.s32 %s4, 1
    %s6 = smul.addr 4, 15
    %s7 = scalar_lea.vmem %s0, %s6
    %s8 = sshrl.u32 %s5, 1
    %s9 = sor.u32 %s5, %s8
    %s10 = sand.u32 %s9, 85
    %s11 = sshrl.u32 %s10, 1
    %s12 = sor.u32 %s10, %s11
    %s13 = sand.u32 51, %s12
    %s14 = sshrl.u32 %s13, 2
    %s15 = sor.u32 %s13, %s14
    %s16 = sand.u32 15, %s15
    %v17 = vld [vmem:[%s7] sm:%s16]
    %v18 = vunpack.c.l.bf16 %v17
    %v19 = vunpack.c.h.bf16 %v17
    %s20 = scalar_lea.vmem [#allocation1], 120
    %21 = vst [vmem:[%s20] sm:%s5] %v18
    %s22 = smul.addr 4, 14
    %s23 = scalar_lea.vmem %s0, %s22
    %s24 = sshrl.u32 %s5, 1
    %s25 = sor.u32 %s5, %s24
    %s26 = sand.u32 %s25, 85
    %s27 = sshrl.u32 %s26, 1
    %s28 = sor.u32 %s26, %s27
    %s29 = sand.u32 51, %s28
    %s30 = sshrl.u32 %s29, 2
    %s31 = sor.u32 %s29, %s30
    %s32 = sand.u32 15, %s31
    %v33 = vld [vmem:[%s23] sm:%s32]
    %v34 = vunpack.c.l.bf16 %v33
    %v35 = vunpack.c.h.bf16 %v33
    %s36 = scalar_lea.vmem [#allocation1], 112
    %37 = vst [vmem:[%s36] sm:%s5] %v34
    %s38 = smul.addr 4, 13
    %s39 = scalar_lea.vmem %s0, %s38
    %s40 = sshrl.u32 %s5, 1
    %s41 = sor.u32 %s5, %s40
    %s42 = sand.u32 %s41, 85
    %s43 = sshrl.u32 %s42, 1
    %s44 = sor.u32 %s42, %s43
    %s45 = sand.u32 51, %s44
    %s46 = sshrl.u32 %s45, 2
    %s47 = sor.u32 %s45, %s46
    %s48 = sand.u32 15, %s47
    %v49 = vld [vmem:[%s39] sm:%s48]
    %v50 = vunpack.c.l.bf16 %v49
    %v51 = vunpack.c.h.bf16 %v49
    %s52 = scalar_lea.vmem [#allocation1], 104
    %53 = vst [vmem:[%s52] sm:%s5] %v50
    %s54 = smul.addr 4, 12
    %s55 = scalar_lea.vmem %s0, %s54
    %s56 = sshrl.u32 %s5, 1
    %s57 = sor.u32 %s5, %s56
    %s58 = sand.u32 %s57, 85
    %s59 = sshrl.u32 %s58, 1
    %s60 = sor.u32 %s58, %s59
    %s61 = sand.u32 51, %s60
    %s62 = sshrl.u32 %s61, 2
    %s63 = sor.u32 %s61, %s62
    %s64 = sand.u32 15, %s63
    %v65 = vld [vmem:[%s55] sm:%s64]
    %v66 = vunpack.c.l.bf16 %v65
    %v67 = vunpack.c.h.bf16 %v65
    %s68 = scalar_lea.vmem [#allocation1], 96
    %69 = vst [vmem:[%s68] sm:%s5] %v66
    %s70 = smul.addr 4, 11
    %s71 = scalar_lea.vmem %s0, %s70
    %s72 = sshrl.u32 %s5, 1
    %s73 = sor.u32 %s5, %s72
    %s74 = sand.u32 %s73, 85
    %s75 = sshrl.u32 %s74, 1
    %s76 = sor.u32 %s74, %s75
    %s77 = sand.u32 51, %s76
    %s78 = sshrl.u32 %s77, 2
    %s79 = sor.u32 %s77, %s78
    %s80 = sand.u32 15, %s79
    %v81 = vld [vmem:[%s71] sm:%s80]
    %v82 = vunpack.c.l.bf16 %v81
    %v83 = vunpack.c.h.bf16 %v81
    %s84 = scalar_lea.vmem [#allocation1], 88
    %85 = vst [vmem:[%s84] sm:%s5] %v82
    %s86 = smul.addr 4, 10
    %s87 = scalar_lea.vmem %s0, %s86
    %s88 = sshrl.u32 %s5, 1
    %s89 = sor.u32 %s5, %s88
    %s90 = sand.u32 %s89, 85
    %s91 = sshrl.u32 %s90, 1
    %s92 = sor.u32 %s90, %s91
    %s93 = sand.u32 51, %s92
    %s94 = sshrl.u32 %s93, 2
    %s95 = sor.u32 %s93, %s94
    %s96 = sand.u32 15, %s95
    %v97 = vld [vmem:[%s87] sm:%s96]
    %v98 = vunpack.c.l.bf16 %v97
    %v99 = vunpack.c.h.bf16 %v97
    %s100 = scalar_lea.vmem [#allocation1], 80
    %101 = vst [vmem:[%s100] sm:%s5] %v98
    %s102 = smul.addr 4, 9
    %s103 = scalar_lea.vmem %s0, %s102
    %s104 = sshrl.u32 %s5, 1
    %s105 = sor.u32 %s5, %s104
    %s106 = sand.u32 %s105, 85
    %s107 = sshrl.u32 %s106, 1
    %s108 = sor.u32 %s106, %s107
    %s109 = sand.u32 51, %s108
    %s110 = sshrl.u32 %s109, 2
    %s111 = sor.u32 %s109, %s110
    %s112 = sand.u32 15, %s111
    %v113 = vld [vmem:[%s103] sm:%s112]
    %v114 = vunpack.c.l.bf16 %v113
    %v115 = vunpack.c.h.bf16 %v113
    %s116 = scalar_lea.vmem [#allocation1], 72
    %117 = vst [vmem:[%s116] sm:%s5] %v114
    %s118 = smul.addr 4, 8
    %s119 = scalar_lea.vmem %s0, %s118
    %s120 = sshrl.u32 %s5, 1
    %s121 = sor.u32 %s5, %s120
    %s122 = sand.u32 %s121, 85
    %s123 = sshrl.u32 %s122, 1
    %s124 = sor.u32 %s122, %s123
    %s125 = sand.u32 51, %s124
    %s126 = sshrl.u32 %s125, 2
    %s127 = sor.u32 %s125, %s126
    %s128 = sand.u32 15, %s127
    %v129 = vld [vmem:[%s119] sm:%s128]
    %v130 = vunpack.c.l.bf16 %v129
    %v131 = vunpack.c.h.bf16 %v129
    %s132 = scalar_lea.vmem [#allocation1], 64
    %133 = vst [vmem:[%s132] sm:%s5] %v130
    %s134 = smul.addr 4, 7
    %s135 = scalar_lea.vmem %s0, %s134
    %s136 = sshrl.u32 %s5, 1
    %s137 = sor.u32 %s5, %s136
    %s138 = sand.u32 %s137, 85
    %s139 = sshrl.u32 %s138, 1
    %s140 = sor.u32 %s138, %s139
    %s141 = sand.u32 51, %s140
    %s142 = sshrl.u32 %s141, 2
    %s143 = sor.u32 %s141, %s142
    %s144 = sand.u32 15, %s143
    %v145 = vld [vmem:[%s135] sm:%s144]
    %v146 = vunpack.c.l.bf16 %v145
    %v147 = vunpack.c.h.bf16 %v145
    %s148 = scalar_lea.vmem [#allocation1], 56
    %149 = vst [vmem:[%s148] sm:%s5] %v146
    %s150 = smul.addr 4, 6
    %s151 = scalar_lea.vmem %s0, %s150
    %s152 = sshrl.u32 %s5, 1
    %s153 = sor.u32 %s5, %s152
    %s154 = sand.u32 %s153, 85
    %s155 = sshrl.u32 %s154, 1
    %s156 = sor.u32 %s154, %s155
    %s157 = sand.u32 51, %s156
    %s158 = sshrl.u32 %s157, 2
    %s159 = sor.u32 %s157, %s158
    %s160 = sand.u32 15, %s159
    %v161 = vld [vmem:[%s151] sm:%s160]
    %v162 = vunpack.c.l.bf16 %v161
    %v163 = vunpack.c.h.bf16 %v161
    %s164 = scalar_lea.vmem [#allocation1], 48
    %165 = vst [vmem:[%s164] sm:%s5] %v162
    %s166 = smul.addr 4, 5
    %s167 = scalar_lea.vmem %s0, %s166
    %s168 = sshrl.u32 %s5, 1
    %s169 = sor.u32 %s5, %s168
    %s170 = sand.u32 %s169, 85
    %s171 = sshrl.u32 %s170, 1
    %s172 = sor.u32 %s170, %s171
    %s173 = sand.u32 51, %s172
    %s174 = sshrl.u32 %s173, 2
    %s175 = sor.u32 %s173, %s174
    %s176 = sand.u32 15, %s175
    %v177 = vld [vmem:[%s167] sm:%s176]
    %v178 = vunpack.c.l.bf16 %v177
    %v179 = vunpack.c.h.bf16 %v177
    %s180 = scalar_lea.vmem [#allocation1], 40
    %181 = vst [vmem:[%s180] sm:%s5] %v178
    %s182 = smul.addr 4, 4
    %s183 = scalar_lea.vmem %s0, %s182
    %s184 = sshrl.u32 %s5, 1
    %s185 = sor.u32 %s5, %s184
    %s186 = sand.u32 %s185, 85
    %s187 = sshrl.u32 %s186, 1
    %s188 = sor.u32 %s186, %s187
    %s189 = sand.u32 51, %s188
    %s190 = sshrl.u32 %s189, 2
    %s191 = sor.u32 %s189, %s190
    %s192 = sand.u32 15, %s191
    %v193 = vld [vmem:[%s183] sm:%s192]
    %v194 = vunpack.c.l.bf16 %v193
    %v195 = vunpack.c.h.bf16 %v193
    %s196 = scalar_lea.vmem [#allocation1], 32
    %197 = vst [vmem:[%s196] sm:%s5] %v194
    %s198 = smul.addr 4, 3
    %s199 = scalar_lea.vmem %s0, %s198
    %s200 = sshrl.u32 %s5, 1
    %s201 = sor.u32 %s5, %s200
    %s202 = sand.u32 %s201, 85
    %s203 = sshrl.u32 %s202, 1
    %s204 = sor.u32 %s202, %s203
    %s205 = sand.u32 51, %s204
    %s206 = sshrl.u32 %s205, 2
    %s207 = sor.u32 %s205, %s206
    %s208 = sand.u32 15, %s207
    %v209 = vld [vmem:[%s199] sm:%s208]
    %v210 = vunpack.c.l.bf16 %v209
    %v211 = vunpack.c.h.bf16 %v209
    %s212 = scalar_lea.vmem [#allocation1], 24
    %213 = vst [vmem:[%s212] sm:%s5] %v210
    %s214 = smul.addr 4, 2
    %s215 = scalar_lea.vmem %s0, %s214
    %s216 = sshrl.u32 %s5, 1
    %s217 = sor.u32 %s5, %s216
    %s218 = sand.u32 %s217, 85
    %s219 = sshrl.u32 %s218, 1
    %s220 = sor.u32 %s218, %s219
    %s221 = sand.u32 51, %s220
    %s222 = sshrl.u32 %s221, 2
    %s223 = sor.u32 %s221, %s222
    %s224 = sand.u32 15, %s223
    %v225 = vld [vmem:[%s215] sm:%s224]
    %v226 = vunpack.c.l.bf16 %v225
    %v227 = vunpack.c.h.bf16 %v225
    %s228 = scalar_lea.vmem [#allocation1], 16
    %229 = vst [vmem:[%s228] sm:%s5] %v226
    %s230 = scalar_lea.vmem %s0, 4
    %s231 = sshrl.u32 %s5, 1
    %s232 = sor.u32 %s5, %s231
    %s233 = sand.u32 %s232, 85
    %s234 = sshrl.u32 %s233, 1
    %s235 = sor.u32 %s233, %s234
    %s236 = sand.u32 51, %s235
    %s237 = sshrl.u32 %s236, 2
    %s238 = sor.u32 %s236, %s237
    %s239 = sand.u32 15, %s238
    %v240 = vld [vmem:[%s230] sm:%s239]
    %v241 = vunpack.c.l.bf16 %v240
    %v242 = vunpack.c.h.bf16 %v240
    %s243 = scalar_lea.vmem [#allocation1], 8
    %244 = vst [vmem:[%s243] sm:%s5] %v241
    %s245 = sshrl.u32 %s5, 1
    %s246 = sor.u32 %s5, %s245
    %s247 = sand.u32 %s246, 85
    %s248 = sshrl.u32 %s247, 1
    %s249 = sor.u32 %s247, %s248
    %s250 = sand.u32 51, %s249
    %s251 = sshrl.u32 %s250, 2
    %s252 = sor.u32 %s250, %s251
    %s253 = sand.u32 15, %s252
    %v254 = vld [vmem:[%s0] sm:%s253]
    %v255 = vunpack.c.l.bf16 %v254
    %v256 = vunpack.c.h.bf16 %v254
    %257 = vst [vmem:[#allocation1] sm:%s5] %v255
    %s258 = smov 3
    %v259 = vld [vmem:[#allocation1] ss:$16 sm:%s258]
    %s260 = smov 12
    %v261 = vld [vmem:[#allocation1] ss:$16 sm:%s260]
    %vm262 = vcmask 1043458
    %v263 = vsel %vm262, %v261, %v259
    %s264 = smov 48
    %v265 = vld [vmem:[#allocation1] ss:$16 sm:%s264]
    %vm266 = vcmask 1045508
    %v267 = vsel %vm266, %v265, %v263
    %s268 = smov 192
    %v269 = vld [vmem:[#allocation1] ss:$16 sm:%s268]
    %vm270 = vcmask 1047558
    %v271 = vsel %vm270, %v269, %v267
    %vm272 = vcmask 64512
    %273 = vst.msk [vmem:[#allocation0] sm:$0xff] %vm272, %v271
    %s274 = scalar_lea.vmem [#allocation1], 15
    %s275 = smov 3
    %v276 = vld [vmem:[%s274] ss:$16 sm:%s275]
    %s277 = scalar_lea.vmem [#allocation1], 15
    %s278 = smov 12
    %v279 = vld [vmem:[%s277] ss:$16 sm:%s278]
    %vm280 = vcmask 1043458
    %v281 = vsel %vm280, %v279, %v276
    %s282 = scalar_lea.vmem [#allocation1], 15
    %s283 = smov 48
    %v284 = vld [vmem:[%s282] ss:$16 sm:%s283]
    %vm285 = vcmask 1045508
    %v286 = vsel %vm285, %v284, %v281
    %s287 = scalar_lea.vmem [#allocation1], 15
    %s288 = smov 192
    %v289 = vld [vmem:[%s287] ss:$16 sm:%s288]
    %vm290 = vcmask 1047558
    %v291 = vsel %vm290, %v289, %v286
    %292 = vrot.lane.b32.xlu0 %v291, 120
    %v293 = vpop.permute.xlu0 %292
    %vm294 = vcmask 1048512
    %295 = vst.msk [vmem:[#allocation0] sm:$0xff] %vm294, %v293
    %s296 = scalar_lea.vmem [#allocation1], 14
    %s297 = smov 3
    %v298 = vld [vmem:[%s296] ss:$16 sm:%s297]
    %s299 = scalar_lea.vmem [#allocation1], 14
    %s300 = smov 12
    %v301 = vld [vmem:[%s299] ss:$16 sm:%s300]
    %vm302 = vcmask 1043458
    %v303 = vsel %vm302, %v301, %v298
    %s304 = scalar_lea.vmem [#allocation1], 14
    %s305 = smov 48
    %v306 = vld [vmem:[%s304] ss:$16 sm:%s305]
    %vm307 = vcmask 1045508
    %v308 = vsel %vm307, %v306, %v303
    %s309 = scalar_lea.vmem [#allocation1], 14
    %s310 = smov 192
    %v311 = vld [vmem:[%s309] ss:$16 sm:%s310]
    %vm312 = vcmask 1047558
    %v313 = vsel %vm312, %v311, %v308
    %314 = vrot.lane.b32.xlu0 %v313, 112
    %v315 = vpop.permute.xlu0 %314
    %vm316 = vcmask 982912
    %317 = vst.msk [vmem:[#allocation0] sm:$0xff] %vm316, %v315
    %s318 = scalar_lea.vmem [#allocation1], 13
    %s319 = smov 3
    %v320 = vld [vmem:[%s318] ss:$16 sm:%s319]
    %s321 = scalar_lea.vmem [#allocation1], 13
    %s322 = smov 12
    %v323 = vld [vmem:[%s321] ss:$16 sm:%s322]
    %vm324 = vcmask 1043458
    %v325 = vsel %vm324, %v323, %v320
    %s326 = scalar_lea.vmem [#allocation1], 13
    %s327 = smov 48
    %v328 = vld [vmem:[%s326] ss:$16 sm:%s327]
    %vm329 = vcmask 1045508
    %v330 = vsel %vm329, %v328, %v325
    %s331 = scalar_lea.vmem [#allocation1], 13
    %s332 = smov 192
    %v333 = vld [vmem:[%s331] ss:$16 sm:%s332]
    %vm334 = vcmask 1047558
    %v335 = vsel %vm334, %v333, %v330
    %336 = vrot.lane.b32.xlu0 %v335, 104
    %v337 = vpop.permute.xlu0 %336
    %vm338 = vcmask 917312
    %339 = vst.msk [vmem:[#allocation0] sm:$0xff] %vm338, %v337
    %s340 = scalar_lea.vmem [#allocation1], 12
    %s341 = smov 3
    %v342 = vld [vmem:[%s340] ss:$16 sm:%s341]
    %s343 = scalar_lea.vmem [#allocation1], 12
    %s344 = smov 12
    %v345 = vld [vmem:[%s343] ss:$16 sm:%s344]
    %vm346 = vcmask 1043458
    %v347 = vsel %vm346, %v345, %v342
    %s348 = scalar_lea.vmem [#allocation1], 12
    %s349 = smov 48
    %v350 = vld [vmem:[%s348] ss:$16 sm:%s349]
    %vm351 = vcmask 1045508
    %v352 = vsel %vm351, %v350, %v347
    %s353 = scalar_lea.vmem [#allocation1], 12
    %s354 = smov 192
    %v355 = vld [vmem:[%s353] ss:$16 sm:%s354]
    %vm356 = vcmask 1047558
    %v357 = vsel %vm356, %v355, %v352
    %358 = vrot.lane.b32.xlu0 %v357, 96
    %v359 = vpop.permute.xlu0 %358
    %vm360 = vcmask 851712
    %361 = vst.msk [vmem:[#allocation0] sm:$0xff] %vm360, %v359
    %s362 = scalar_lea.vmem [#allocation1], 11
    %s363 = smov 3
    %v364 = vld [vmem:[%s362] ss:$16 sm:%s363]
    %s365 = scalar_lea.vmem [#allocation1], 11
    %s366 = smov 12
    %v367 = vld [vmem:[%s365] ss:$16 sm:%s366]
    %vm368 = vcmask 1043458
    %v369 = vsel %vm368, %v367, %v364
    %s370 = scalar_lea.vmem [#allocation1], 11
    %s371 = smov 48
    %v372 = vld [vmem:[%s370] ss:$16 sm:%s371]
    %vm373 = vcmask 1045508
    %v374 = vsel %vm373, %v372, %v369
    %s375 = scalar_lea.vmem [#allocation1], 11
    %s376 = smov 192
    %v377 = vld [vmem:[%s375] ss:$16 sm:%s376]
    %vm378 = vcmask 1047558
    %v379 = vsel %vm378, %v377, %v374
    %380 = vrot.lane.b32.xlu0 %v379, 88
    %v381 = vpop.permute.xlu0 %380
    %vm382 = vcmask 786112
    %383 = vst.msk [vmem:[#allocation0] sm:$0xff] %vm382, %v381
    %s384 = scalar_lea.vmem [#allocation1], 10
    %s385 = smov 3
    %v386 = vld [vmem:[%s384] ss:$16 sm:%s385]
    %s387 = scalar_lea.vmem [#allocation1], 10
    %s388 = smov 12
    %v389 = vld [vmem:[%s387] ss:$16 sm:%s388]
    %vm390 = vcmask 1043458
    %v391 = vsel %vm390, %v389, %v386
    %s392 = scalar_lea.vmem [#allocation1], 10
    %s393 = smov 48
    %v394 = vld [vmem:[%s392] ss:$16 sm:%s393]
    %vm395 = vcmask 1045508
    %v396 = vsel %vm395, %v394, %v391
    %s397 = scalar_lea.vmem [#allocation1], 10
    %s398 = smov 192
    %v399 = vld [vmem:[%s397] ss:$16 sm:%s398]
    %vm400 = vcmask 1047558
    %v401 = vsel %vm400, %v399, %v396
    %402 = vrot.lane.b32.xlu0 %v401, 80
    %v403 = vpop.permute.xlu0 %402
    %vm404 = vcmask 720512
    %405 = vst.msk [vmem:[#allocation0] sm:$0xff] %vm404, %v403
    %s406 = scalar_lea.vmem [#allocation1], 9
    %s407 = smov 3
    %v408 = vld [vmem:[%s406] ss:$16 sm:%s407]
    %s409 = scalar_lea.vmem [#allocation1], 9
    %s410 = smov 12
    %v411 = vld [vmem:[%s409] ss:$16 sm:%s410]
    %vm412 = vcmask 1043458
    %v413 = vsel %vm412, %v411, %v408
    %s414 = scalar_lea.vmem [#allocation1], 9
    %s415 = smov 48
    %v416 = vld [vmem:[%s414] ss:$16 sm:%s415]
    %vm417 = vcmask 1045508
    %v418 = vsel %vm417, %v416, %v413
    %s419 = scalar_lea.vmem [#allocation1], 9
    %s420 = smov 192
    %v421 = vld [vmem:[%s419] ss:$16 sm:%s420]
    %vm422 = vcmask 1047558
    %v423 = vsel %vm422, %v421, %v418
    %424 = vrot.lane.b32.xlu0 %v423, 72
    %v425 = vpop.permute.xlu0 %424
    %vm426 = vcmask 654912
    %427 = vst.msk [vmem:[#allocation0] sm:$0xff] %vm426, %v425
    %s428 = scalar_lea.vmem [#allocation1], 8
    %s429 = smov 3
    %v430 = vld [vmem:[%s428] ss:$16 sm:%s429]
    %s431 = scalar_lea.vmem [#allocation1], 8
    %s432 = smov 12
    %v433 = vld [vmem:[%s431] ss:$16 sm:%s432]
    %vm434 = vcmask 1043458
    %v435 = vsel %vm434, %v433, %v430
    %s436 = scalar_lea.vmem [#allocation1], 8
    %s437 = smov 48
    %v438 = vld [vmem:[%s436] ss:$16 sm:%s437]
    %vm439 = vcmask 1045508
    %v440 = vsel %vm439, %v438, %v435
    %s441 = scalar_lea.vmem [#allocation1], 8
    %s442 = smov 192
    %v443 = vld [vmem:[%s441] ss:$16 sm:%s442]
    %vm444 = vcmask 1047558
    %v445 = vsel %vm444, %v443, %v440
    %446 = vrot.lane.b32.xlu0 %v445, 64
    %v447 = vpop.permute.xlu0 %446
    %vm448 = vcmask 589312
    %449 = vst.msk [vmem:[#allocation0] sm:$0xff] %vm448, %v447
    %s450 = scalar_lea.vmem [#allocation1], 7
    %s451 = smov 3
    %v452 = vld [vmem:[%s450] ss:$16 sm:%s451]
    %s453 = scalar_lea.vmem [#allocation1], 7
    %s454 = smov 12
    %v455 = vld [vmem:[%s453] ss:$16 sm:%s454]
    %vm456 = vcmask 1043458
    %v457 = vsel %vm456, %v455, %v452
    %s458 = scalar_lea.vmem [#allocation1], 7
    %s459 = smov 48
    %v460 = vld [vmem:[%s458] ss:$16 sm:%s459]
    %vm461 = vcmask 1045508
    %v462 = vsel %vm461, %v460, %v457
    %s463 = scalar_lea.vmem [#allocation1], 7
    %s464 = smov 192
    %v465 = vld [vmem:[%s463] ss:$16 sm:%s464]
    %vm466 = vcmask 1047558
    %v467 = vsel %vm466, %v465, %v462
    %468 = vrot.lane.b32.xlu0 %v467, 56
    %v469 = vpop.permute.xlu0 %468
    %vm470 = vcmask 523712
    %471 = vst.msk [vmem:[#allocation0] sm:$0xff] %vm470, %v469
    %s472 = scalar_lea.vmem [#allocation1], 6
    %s473 = smov 3
    %v474 = vld [vmem:[%s472] ss:$16 sm:%s473]
    %s475 = scalar_lea.vmem [#allocation1], 6
    %s476 = smov 12
    %v477 = vld [vmem:[%s475] ss:$16 sm:%s476]
    %vm478 = vcmask 1043458
    %v479 = vsel %vm478, %v477, %v474
    %s480 = scalar_lea.vmem [#allocation1], 6
    %s481 = smov 48
    %v482 = vld [vmem:[%s480] ss:$16 sm:%s481]
    %vm483 = vcmask 1045508
    %v484 = vsel %vm483, %v482, %v479
    %s485 = scalar_lea.vmem [#allocation1], 6
    %s486 = smov 192
    %v487 = vld [vmem:[%s485] ss:$16 sm:%s486]
    %vm488 = vcmask 1047558
    %v489 = vsel %vm488, %v487, %v484
    %490 = vrot.lane.b32.xlu0 %v489, 48
    %v491 = vpop.permute.xlu0 %490
    %vm492 = vcmask 458112
    %493 = vst.msk [vmem:[#allocation0] sm:$0xff] %vm492, %v491
    %s494 = scalar_lea.vmem [#allocation1], 5
    %s495 = smov 3
    %v496 = vld [vmem:[%s494] ss:$16 sm:%s495]
    %s497 = scalar_lea.vmem [#allocation1], 5
    %s498 = smov 12
    %v499 = vld [vmem:[%s497] ss:$16 sm:%s498]
    %vm500 = vcmask 1043458
    %v501 = vsel %vm500, %v499, %v496
    %s502 = scalar_lea.vmem [#allocation1], 5
    %s503 = smov 48
    %v504 = vld [vmem:[%s502] ss:$16 sm:%s503]
    %vm505 = vcmask 1045508
    %v506 = vsel %vm505, %v504, %v501
    %s507 = scalar_lea.vmem [#allocation1], 5
    %s508 = smov 192
    %v509 = vld [vmem:[%s507] ss:$16 sm:%s508]
    %vm510 = vcmask 1047558
    %v511 = vsel %vm510, %v509, %v506
    %512 = vrot.lane.b32.xlu0 %v511, 40
    %v513 = vpop.permute.xlu0 %512
    %vm514 = vcmask 392512
    %515 = vst.msk [vmem:[#allocation0] sm:$0xff] %vm514, %v513
    %s516 = scalar_lea.vmem [#allocation1], 4
    %s517 = smov 3
    %v518 = vld [vmem:[%s516] ss:$16 sm:%s517]
    %s519 = scalar_lea.vmem [#allocation1], 4
    %s520 = smov 12
    %v521 = vld [vmem:[%s519] ss:$16 sm:%s520]
    %vm522 = vcmask 1043458
    %v523 = vsel %vm522, %v521, %v518
    %s524 = scalar_lea.vmem [#allocation1], 4
    %s525 = smov 48
    %v526 = vld [vmem:[%s524] ss:$16 sm:%s525]
    %vm527 = vcmask 1045508
    %v528 = vsel %vm527, %v526, %v523
    %s529 = scalar_lea.vmem [#allocation1], 4
    %s530 = smov 192
    %v531 = vld [vmem:[%s529] ss:$16 sm:%s530]
    %vm532 = vcmask 1047558
    %v533 = vsel %vm532, %v531, %v528
    %534 = vrot.lane.b32.xlu0 %v533, 32
    %v535 = vpop.permute.xlu0 %534
    %vm536 = vcmask 326912
    %537 = vst.msk [vmem:[#allocation0] sm:$0xff] %vm536, %v535
    %s538 = scalar_lea.vmem [#allocation1], 3
    %s539 = smov 3
    %v540 = vld [vmem:[%s538] ss:$16 sm:%s539]
    %s541 = scalar_lea.vmem [#allocation1], 3
    %s542 = smov 12
    %v543 = vld [vmem:[%s541] ss:$16 sm:%s542]
    %vm544 = vcmask 1043458
    %v545 = vsel %vm544, %v543, %v540
    %s546 = scalar_lea.vmem [#allocation1], 3
    %s547 = smov 48
    %v548 = vld [vmem:[%s546] ss:$16 sm:%s547]
    %vm549 = vcmask 1045508
    %v550 = vsel %vm549, %v548, %v545
    %s551 = scalar_lea.vmem [#allocation1], 3
    %s552 = smov 192
    %v553 = vld [vmem:[%s551] ss:$16 sm:%s552]
    %vm554 = vcmask 1047558
    %v555 = vsel %vm554, %v553, %v550
    %556 = vrot.lane.b32.xlu0 %v555, 24
    %v557 = vpop.permute.xlu0 %556
    %vm558 = vcmask 261312
    %559 = vst.msk [vmem:[#allocation0] sm:$0xff] %vm558, %v557
    %s560 = scalar_lea.vmem [#allocation1], 2
    %s561 = smov 3
    %v562 = vld [vmem:[%s560] ss:$16 sm:%s561]
    %s563 = scalar_lea.vmem [#allocation1], 2
    %s564 = smov 12
    %v565 = vld [vmem:[%s563] ss:$16 sm:%s564]
    %vm566 = vcmask 1043458
    %v567 = vsel %vm566, %v565, %v562
    %s568 = scalar_lea.vmem [#allocation1], 2
    %s569 = smov 48
    %v570 = vld [vmem:[%s568] ss:$16 sm:%s569]
    %vm571 = vcmask 1045508
    %v572 = vsel %vm571, %v570, %v567
    %s573 = scalar_lea.vmem [#allocation1], 2
    %s574 = smov 192
    %v575 = vld [vmem:[%s573] ss:$16 sm:%s574]
    %vm576 = vcmask 1047558
    %v577 = vsel %vm576, %v575, %v572
    %578 = vrot.lane.b32.xlu0 %v577, 16
    %v579 = vpop.permute.xlu0 %578
    %vm580 = vcmask 195712
    %581 = vst.msk [vmem:[#allocation0] sm:$0xff] %vm580, %v579
    %s582 = scalar_lea.vmem [#allocation1], 1
    %s583 = smov 3
    %v584 = vld [vmem:[%s582] ss:$16 sm:%s583]
    %s585 = scalar_lea.vmem [#allocation1], 1
    %s586 = smov 12
    %v587 = vld [vmem:[%s585] ss:$16 sm:%s586]
    %vm588 = vcmask 1043458
    %v589 = vsel %vm588, %v587, %v584
    %s590 = scalar_lea.vmem [#allocation1], 1
    %s591 = smov 48
    %v592 = vld [vmem:[%s590] ss:$16 sm:%s591]
    %vm593 = vcmask 1045508
    %v594 = vsel %vm593, %v592, %v589
    %s595 = scalar_lea.vmem [#allocation1], 1
    %s596 = smov 192
    %v597 = vld [vmem:[%s595] ss:$16 sm:%s596]
    %vm598 = vcmask 1047558
    %v599 = vsel %vm598, %v597, %v594
    %600 = vrot.lane.b32.xlu0 %v599, 8
    %v601 = vpop.permute.xlu0 %600
    %vm602 = vcmask 130112
    %603 = vst.msk [vmem:[#allocation0] sm:$0xff] %vm602, %v601
    %s605 = smul.u32 4, 2
    %s606 = sshll.u32 1, %s605
    %s607 = ssub.s32 %s606, 1
    %s608 = sshrl.u32 %s605, 1
    %v609 = vld [vmem:[#allocation0] sm:%s607]
    %v610 = vpack.c.bf16 0.0, %v609
    %s611 = sshll.u32 1, %s608
    %s612 = ssub.s32 %s611, 1
    %613 = vst [vmem:[%s1] sm:%s612] %v610

// kernel: depthwise_forward_nhwc.1
$region0: #{depthwise_forward_nhwc.1}
  #allocation0 [shape = 'u32[]', space=smem, size = 0x4, offset = 0x4, fixed_abs, tag = 'smem constant byte address 0x4 - core index']
  #allocation1 [shape = 'u32[144,128]{1,0:T(1,128)}', space=vmem, size = 0x12000, scoped, tag = 'internal scratch']
  %s0 = inlined_call_operand.vmem [shape: bf16[32,64], index: 0, kind: input, shape index: {}]
  %s1 = inlined_call_operand.vmem [shape: bf16[3,16,16], index: 1, kind: input, shape index: {}]
  %s2 = inlined_call_operand.vmem [shape: bf16[3,64,128], index: 2, kind: input, shape index: {}]
  %s3 = inlined_call_operand.vmem [shape: f32[1,128], index: 3, kind: input, shape index: {}]
  %s4 = inlined_call_operand.vmem [shape: bf16[128,2], index: 4, kind: input, shape index: {}]
  %s5 = inlined_call_operand.vmem [shape: f32[1,2], index: 5, kind: input, shape index: {}]
  %s6 = inlined_call_operand.vmem [shape: bf16[2,128], index: 6, kind: input, shape index: {}]
  %s7 = inlined_call_operand.vmem [shape: f32[1,128], index: 7, kind: input, shape index: {}]
  %s8 = inlined_call_operand.vmem [shape: bf16[1,16], index: 8, kind: input, shape index: {}]
  %s9 = inlined_call_operand.vmem [shape: bf16[16,1], index: 9, kind: input, shape index: {}]
  %s10 = inlined_call_operand.vmem [shape: f32[32,128], index: 10, kind: output, shape index: {}]
  %s11 = sld [smem:[#allocation0]]
  $region73: #{depthwise_forward_nhwc.1} parent=0
    _
  %s13 = ssub.s32 1, %s11
  %s14 = scalar_select 0, %s13, %s11
  loop: start=0, step=1, limit=4
  $region2: #{depthwise_forward_nhwc.1} parent=0 // loop_pre_header
    _
  $region3: #{depthwise_forward_nhwc.1} parent=0 // loop_header
    %s16 = sphi 0, %s20
    %p17 = scmp.ge.s32.totalorder %s16, 4
    %s26 = sphi 0, %s28
    %s29 = sphi 0, %s26
    %s30 = sphi 0, %s29
    %s46 = sphi 0, %s30
    %s50 = sphi 0, %s50
    %s52 = sphi 0, %s50
    %s53 = sphi 0, %s52
    %s67 = sphi 0, %s53
    %s71 = sphi 0, %s71
    %s73 = sphi 0, %s71
    %s74 = sphi 0, %s73
    %s88 = sphi 0, %s74
    %s92 = sphi 0, %s92
    %s94 = sphi 0, %s92
    %s95 = sphi 0, %s94
    %s109 = sphi 0, %s95
    %s113 = sphi 0, %s113
    %s115 = sphi 0, %s113
    %s116 = sphi 0, %s115
    %s130 = sphi 0, %s116
    %s134 = sphi 0, %s134
    %s136 = sphi 0, %s134
    %s137 = sphi 0, %s136
    %s151 = sphi 0, %s137
    %s155 = sphi 0, %s155
    %s157 = sphi 0, %s155
    %s158 = sphi 0, %s157
    %s172 = sphi 0, %s158
    %s176 = sphi 0, %s176
    %s178 = sphi 0, %s176
    %s179 = sphi 0, %s178
    %s193 = sphi 0, %s179
    %s197 = sphi 0, %s197
    %s199 = sphi 0, %s197
    %s200 = sphi 0, %s199
    %s214 = sphi 0, %s200
    %s218 = sphi 0, %s218
    %s220 = sphi 0, %s218
    %s221 = sphi 0, %s220
    %s235 = sphi 0, %s221
    %s241 = sphi 0, %s243
    %s244 = sphi 0, %s241
    %s245 = sphi 0, %s244
    %s261 = sphi 0, %s245
  $region4: #{depthwise_forward_nhwc.1} parent=0 // loop_header_branch
    %19 = sbr.rel (%p17) target = $region8
  $region5: #{depthwise_forward_nhwc.1} parent=0 // loop_body
    %s21 = ssub.s32 %s16, 1
    %s22 = ssub.s32 %s16, 2
    %s23 = sadd.s32 %s16, 1
    %s24 = ssub.s32 %s16, %s23
    %p25 = scmp.eq.s32.totalorder %s24, 0
    %s27 = sadd.s32 %s26, 1
    %s28 = scalar_select %p25, %s26, %s27
    %p31 = pneg %p25
    %p32 = scmp.eq.s32.totalorder %s16, 1
    %p33 = por %p31, %p32
    %p34 = scmp.ne.s32.totalorder %s26, %s29
    %p35 = scmp.eq.s32.totalorder %s16, 0
    %p36 = por %p34, %p35
    %p37 = scmp.ne.s32.totalorder %s26, %s29
    %p38 = scmp.eq.s32.totalorder %s21, 1
    %p39 = por %p37, %p38
    %p40 = scmp.ne.s32.totalorder %s29, %s30
    %p41 = scmp.eq.s32.totalorder %s21, 0
    %p42 = por %p40, %p41
    %p43 = scmp.ne.s32.totalorder %s29, %s30
    %p44 = scmp.eq.s32.totalorder %s22, 1
    %p45 = por %p43, %p44
    %p47 = scmp.ne.s32.totalorder %s30, %s46
    %p48 = scmp.eq.s32.totalorder %s22, 0
    %p49 = por %p47, %p48
    %s51 = sadd.s32 %s50, 1
    %p54 = scmp.eq.s32.totalorder %s16, 1
    %p55 = scmp.ne.s32.totalorder %s50, %s52
    %p56 = scmp.eq.s32.totalorder %s16, 0
    %p57 = por %p55, %p56
    %p58 = scmp.ne.s32.totalorder %s50, %s52
    %p59 = scmp.eq.s32.totalorder %s21, 1
    %p60 = por %p58, %p59
    %p61 = scmp.ne.s32.totalorder %s52, %s53
    %p62 = scmp.eq.s32.totalorder %s21, 0
    %p63 = por %p61, %p62
    %p64 = scmp.ne.s32.totalorder %s52, %s53
    %p65 = scmp.eq.s32.totalorder %s22, 1
    %p66 = por %p64, %p65
    %p68 = scmp.ne.s32.totalorder %s53, %s67
    %p69 = scmp.eq.s32.totalorder %s22, 0
    %p70 = por %p68, %p69
    %s72 = sadd.s32 %s71, 1
    %p75 = scmp.eq.s32.totalorder %s16, 1
    %p76 = scmp.ne.s32.totalorder %s71, %s73
    %p77 = scmp.eq.s32.totalorder %s16, 0
    %p78 = por %p76, %p77
    %p79 = scmp.ne.s32.totalorder %s71, %s73
    %p80 = scmp.eq.s32.totalorder %s21, 1
    %p81 = por %p79, %p80
    %p82 = scmp.ne.s32.totalorder %s73, %s74
    %p83 = scmp.eq.s32.totalorder %s21, 0
    %p84 = por %p82, %p83
    %p85 = scmp.ne.s32.totalorder %s73, %s74
    %p86 = scmp.eq.s32.totalorder %s22, 1
    %p87 = por %p85, %p86
    %p89 = scmp.ne.s32.totalorder %s74, %s88
    %p90 = scmp.eq.s32.totalorder %s22, 0
    %p91 = por %p89, %p90
    %s93 = sadd.s32 %s92, 1
    %p96 = scmp.eq.s32.totalorder %s16, 1
    %p97 = scmp.ne.s32.totalorder %s92, %s94
    %p98 = scmp.eq.s32.totalorder %s16, 0
    %p99 = por %p97, %p98
    %p100 = scmp.ne.s32.totalorder %s92, %s94
    %p101 = scmp.eq.s32.totalorder %s21, 1
    %p102 = por %p100, %p101
    %p103 = scmp.ne.s32.totalorder %s94, %s95
    %p104 = scmp.eq.s32.totalorder %s21, 0
    %p105 = por %p103, %p104
    %p106 = scmp.ne.s32.totalorder %s94, %s95
    %p107 = scmp.eq.s32.totalorder %s22, 1
    %p108 = por %p106, %p107
    %p110 = scmp.ne.s32.totalorder %s95, %s109
    %p111 = scmp.eq.s32.totalorder %s22, 0
    %p112 = por %p110, %p111
    %s114 = sadd.s32 %s113, 1
    %p117 = scmp.eq.s32.totalorder %s16, 1
    %p118 = scmp.ne.s32.totalorder %s113, %s115
    %p119 = scmp.eq.s32.totalorder %s16, 0
    %p120 = por %p118, %p119
    %p121 = scmp.ne.s32.totalorder %s113, %s115
    %p122 = scmp.eq.s32.totalorder %s21, 1
    %p123 = por %p121, %p122
    %p124 = scmp.ne.s32.totalorder %s115, %s116
    %p125 = scmp.eq.s32.totalorder %s21, 0
    %p126 = por %p124, %p125
    %p127 = scmp.ne.s32.totalorder %s115, %s116
    %p128 = scmp.eq.s32.totalorder %s22, 1
    %p129 = por %p127, %p128
    %p131 = scmp.ne.s32.totalorder %s116, %s130
    %p132 = scmp.eq.s32.totalorder %s22, 0
    %p133 = por %p131, %p132
    %s135 = sadd.s32 %s134, 1
    %p138 = scmp.eq.s32.totalorder %s16, 1
    %p139 = scmp.ne.s32.totalorder %s134, %s136
    %p140 = scmp.eq.s32.totalorder %s16, 0
    %p141 = por %p139, %p140
    %p142 = scmp.ne.s32.totalorder %s134, %s136
    %p143 = scmp.eq.s32.totalorder %s21, 1
    %p144 = por %p142, %p143
    %p145 = scmp.ne.s32.totalorder %s136, %s137
    %p146 = scmp.eq.s32.totalorder %s21, 0
    %p147 = por %p145, %p146
    %p148 = scmp.ne.s32.totalorder %s136, %s137
    %p149 = scmp.eq.s32.totalorder %s22, 1
    %p150 = por %p148, %p149
    %p152 = scmp.ne.s32.totalorder %s137, %s151
    %p153 = scmp.eq.s32.totalorder %s22, 0
    %p154 = por %p152, %p153
    %s156 = sadd.s32 %s155, 1
    %p159 = scmp.eq.s32.totalorder %s16, 1
    %p160 = scmp.ne.s32.totalorder %s155, %s157
    %p161 = scmp.eq.s32.totalorder %s16, 0
    %p162 = por %p160, %p161
    %p163 = scmp.ne.s32.totalorder %s155, %s157
    %p164 = scmp.eq.s32.totalorder %s21, 1
    %p165 = por %p163, %p164
    %p166 = scmp.ne.s32.totalorder %s157, %s158
    %p167 = scmp.eq.s32.totalorder %s21, 0
    %p168 = por %p166, %p167
    %p169 = scmp.ne.s32.totalorder %s157, %s158
    %p170 = scmp.eq.s32.totalorder %s22, 1
    %p171 = por %p169, %p170
    %p173 = scmp.ne.s32.totalorder %s158, %s172
    %p174 = scmp.eq.s32.totalorder %s22, 0
    %p175 = por %p173, %p174
    %s177 = sadd.s32 %s176, 1
    %p180 = scmp.eq.s32.totalorder %s16, 1
    %p181 = scmp.ne.s32.totalorder %s176, %s178
    %p182 = scmp.eq.s32.totalorder %s16, 0
    %p183 = por %p181, %p182
    %p184 = scmp.ne.s32.totalorder %s176, %s178
    %p185 = scmp.eq.s32.totalorder %s21, 1
    %p186 = por %p184, %p185
    %p187 = scmp.ne.s32.totalorder %s178, %s179
    %p188 = scmp.eq.s32.totalorder %s21, 0
    %p189 = por %p187, %p188
    %p190 = scmp.ne.s32.totalorder %s178, %s179
    %p191 = scmp.eq.s32.totalorder %s22, 1
    %p192 = por %p190, %p191
    %p194 = scmp.ne.s32.totalorder %s179, %s193
    %p195 = scmp.eq.s32.totalorder %s22, 0
    %p196 = por %p194, %p195
    %s198 = sadd.s32 %s197, 1
    %p201 = scmp.eq.s32.totalorder %s16, 1
    %p202 = scmp.ne.s32.totalorder %s197, %s199
    %p203 = scmp.eq.s32.totalorder %s16, 0
    %p204 = por %p202, %p203
    %p205 = scmp.ne.s32.totalorder %s197, %s199
    %p206 = scmp.eq.s32.totalorder %s21, 1
    %p207 = por %p205, %p206
    %p208 = scmp.ne.s32.totalorder %s199, %s200
    %p209 = scmp.eq.s32.totalorder %s21, 0
    %p210 = por %p208, %p209
    %p211 = scmp.ne.s32.totalorder %s199, %s200
    %p212 = scmp.eq.s32.totalorder %s22, 1
    %p213 = por %p211, %p212
    %p215 = scmp.ne.s32.totalorder %s200, %s214
    %p216 = scmp.eq.s32.totalorder %s22, 0
    %p217 = por %p215, %p216
    %s219 = sadd.s32 %s218, 1
    %p222 = scmp.eq.s32.totalorder %s16, 1
    %p223 = scmp.ne.s32.totalorder %s218, %s220
    %p224 = scmp.eq.s32.totalorder %s16, 0
    %p225 = por %p223, %p224
    %p226 = scmp.ne.s32.totalorder %s218, %s220
    %p227 = scmp.eq.s32.totalorder %s21, 1
    %p228 = por %p226, %p227
    %p229 = scmp.ne.s32.totalorder %s220, %s221
    %p230 = scmp.eq.s32.totalorder %s21, 0
    %p231 = por %p229, %p230
    %p232 = scmp.ne.s32.totalorder %s220, %s221
    %p233 = scmp.eq.s32.totalorder %s22, 1
    %p234 = por %p232, %p233
    %p236 = scmp.ne.s32.totalorder %s221, %s235
    %p237 = scmp.eq.s32.totalorder %s22, 0
    %p238 = por %p236, %p237
    %s239 = ssub.s32 %s16, %s23
    %p240 = scmp.eq.s32.totalorder %s239, 0
    %s242 = sadd.s32 %s241, 1
    %s243 = scalar_select %p240, %s241, %s242
    %p246 = pneg %p240
    %p247 = scmp.eq.s32.totalorder %s16, 1
    %p248 = por %p246, %p247
    %p249 = scmp.ne.s32.totalorder %s241, %s244
    %p250 = scmp.eq.s32.totalorder %s16, 0
    %p251 = por %p249, %p250
    %p252 = scmp.ne.s32.totalorder %s241, %s244
    %p253 = scmp.eq.s32.totalorder %s21, 1
    %p254 = por %p252, %p253
    %p255 = scmp.ne.s32.totalorder %s244, %s245
    %p256 = scmp.eq.s32.totalorder %s21, 0
    %p257 = por %p255, %p256
    %p258 = scmp.ne.s32.totalorder %s244, %s245
    %p259 = scmp.eq.s32.totalorder %s22, 1
    %p260 = por %p258, %p259
    %p262 = scmp.ne.s32.totalorder %s245, %s261
    %p263 = scmp.eq.s32.totalorder %s22, 0
    %p264 = por %p262, %p263
    %p265 = scmp.le.s32.totalorder 1, %s16
    %p266 = scmp.lt.s32.totalorder %s16, 3
    %p267 = pnand %p265, %p266
    %p268 = pneg %p267
    // Predicated region
    $region9: #{depthwise_forward_nhwc.1} parent=5 // pred_check
      _
    $region10: #{depthwise_forward_nhwc.1} parent=5 // pred_check_branch
      %270 = sbr.rel (%p267) target = $region12
    $region11: #{depthwise_forward_nhwc.1} parent=5 // pred_region
      %s271 = ssub.s32 %s16, 1
      // Predicated region
      $region13: #{depthwise_forward_nhwc.1} parent=11 // pred_check
        %p272 = pneg %p63
      $region14: #{depthwise_forward_nhwc.1} parent=11 // pred_check_branch
        %274 = sbr.rel (%p272) target = $region16
      $region15: #{depthwise_forward_nhwc.1} parent=11 // pred_region
        _
      $region16: #{depthwise_forward_nhwc.1} parent=11 // pred_fallthru
        _
      // Predicated region
      $region17: #{depthwise_forward_nhwc.1} parent=11 // pred_check
        %p275 = pneg %p84
      $region18: #{depthwise_forward_nhwc.1} parent=11 // pred_check_branch
        %277 = sbr.rel (%p275) target = $region20
      $region19: #{depthwise_forward_nhwc.1} parent=11 // pred_region
        _
      $region20: #{depthwise_forward_nhwc.1} parent=11 // pred_fallthru
        _
      // Predicated region
      $region21: #{depthwise_forward_nhwc.1} parent=11 // pred_check
        %p278 = pneg %p105
      $region22: #{depthwise_forward_nhwc.1} parent=11 // pred_check_branch
        %280 = sbr.rel (%p278) target = $region24
      $region23: #{depthwise_forward_nhwc.1} parent=11 // pred_region
        _
      $region24: #{depthwise_forward_nhwc.1} parent=11 // pred_fallthru
        _
      // Predicated region
      $region25: #{depthwise_forward_nhwc.1} parent=11 // pred_check
        %p281 = pneg %p126
      $region26: #{depthwise_forward_nhwc.1} parent=11 // pred_check_branch
        %283 = sbr.rel (%p281) target = $region28
      $region27: #{depthwise_forward_nhwc.1} parent=11 // pred_region
        _
      $region28: #{depthwise_forward_nhwc.1} parent=11 // pred_fallthru
        _
      // Predicated region
      $region29: #{depthwise_forward_nhwc.1} parent=11 // pred_check
        %p284 = pneg %p147
      $region30: #{depthwise_forward_nhwc.1} parent=11 // pred_check_branch
        %286 = sbr.rel (%p284) target = $region32
      $region31: #{depthwise_forward_nhwc.1} parent=11 // pred_region
        _
      $region32: #{depthwise_forward_nhwc.1} parent=11 // pred_fallthru
        _
      // Predicated region
      $region33: #{depthwise_forward_nhwc.1} parent=11 // pred_check
        %p287 = pneg %p168
      $region34: #{depthwise_forward_nhwc.1} parent=11 // pred_check_branch
        %289 = sbr.rel (%p287) target = $region36
      $region35: #{depthwise_forward_nhwc.1} parent=11 // pred_region
        _
      $region36: #{depthwise_forward_nhwc.1} parent=11 // pred_fallthru
        _
      // Predicated region
      $region37: #{depthwise_forward_nhwc.1} parent=11 // pred_check
        %p290 = pneg %p189
      $region38: #{depthwise_forward_nhwc.1} parent=11 // pred_check_branch
        %292 = sbr.rel (%p290) target = $region40
      $region39: #{depthwise_forward_nhwc.1} parent=11 // pred_region
        _
      $region40: #{depthwise_forward_nhwc.1} parent=11 // pred_fallthru
        _
      // Predicated region
      $region41: #{depthwise_forward_nhwc.1} parent=11 // pred_check
        %p293 = pneg %p210
      $region42: #{depthwise_forward_nhwc.1} parent=11 // pred_check_branch
        %295 = sbr.rel (%p293) target = $region44
      $region43: #{depthwise_forward_nhwc.1} parent=11 // pred_region
        _
      $region44: #{depthwise_forward_nhwc.1} parent=11 // pred_fallthru
        _
      // Predicated region
      $region45: #{depthwise_forward_nhwc.1} parent=11 // pred_check
        %p296 = pneg %p231
      $region46: #{depthwise_forward_nhwc.1} parent=11 // pred_check_branch
        %298 = sbr.rel (%p296) target = $region48
      $region47: #{depthwise_forward_nhwc.1} parent=11 // pred_region
        _
      $region48: #{depthwise_forward_nhwc.1} parent=11 // pred_fallthru
        _
    $region12: #{depthwise_forward_nhwc.1} parent=5 // pred_fallthru
      _
    %p299 = scmp.lt.s32.totalorder %s16, 2
    // Predicated region
    $region49: #{depthwise_forward_nhwc.1} parent=5 // pred_check
      %p300 = pneg %p299
    $region50: #{depthwise_forward_nhwc.1} parent=5 // pred_check_branch
      %302 = sbr.rel (%p300) target = $region52
    $region51: #{depthwise_forward_nhwc.1} parent=5 // pred_region
      // Predicated region
      $region53: #{depthwise_forward_nhwc.1} parent=51 // pred_check
        %p303 = pneg %p36
      $region54: #{depthwise_forward_nhwc.1} parent=51 // pred_check_branch
        %305 = sbr.rel (%p303) target = $region56
      $region55: #{depthwise_forward_nhwc.1} parent=51 // pred_region
        %s306 = smul.u32 2, %s16
        %p307 = scmp.lt.s32.totalorder %s306, 3
        %s308 = scalar_select %p307, %s306, 3
        %s309 = smul.addr %s308, 4
        %s310 = scalar_lea.vmem %s0, %s309
        %s311 = smul.u32 2, %s16
      $region56: #{depthwise_forward_nhwc.1} parent=51 // pred_fallthru
        _
    $region52: #{depthwise_forward_nhwc.1} parent=5 // pred_fallthru
      _
    %p312 = scmp.le.s32.totalorder 1, %s16
    %p313 = scmp.lt.s32.totalorder %s16, 3
    %p314 = pnand %p312, %p313
    %p315 = pneg %p314
    // Predicated region
    $region57: #{depthwise_forward_nhwc.1} parent=5 // pred_check
      _
    $region58: #{depthwise_forward_nhwc.1} parent=5 // pred_check_branch
      %317 = sbr.rel (%p314) target = $region60
    $region59: #{depthwise_forward_nhwc.1} parent=5 // pred_region
      %s318 = ssub.s32 %s16, 1
      %s319 = smul.u32 2, %s21
      %p320 = scmp.lt.s32.totalorder %s319, 3
      %s321 = scalar_select %p320, %s319, 3
      %s322 = smul.addr %s321, 4
      %s323 = scalar_lea.vmem %s0, %s322
      %p324 = pneg %p42
      %p325 = pneg %p39
      %p326 = pneg %p63
      %p327 = pneg %p60
      %p328 = pneg %p84
      %p329 = pneg %p81
      %p330 = pneg %p105
      %p331 = pneg %p102
      %p332 = pneg %p126
      %p333 = pneg %p123
      %p334 = pneg %p147
      %p335 = pneg %p144
      %p336 = pneg %p168
      %p337 = pneg %p165
      %p338 = pneg %p189
      %p339 = pneg %p186
      %p340 = pneg %p210
      %p341 = pneg %p207
      %p342 = pneg %p231
      %p343 = pneg %p228
      %p344 = pneg %p257
      %p345 = pneg %p254
      %s346 = smul.u32 2, %s21
      %p347 = scmp.lt.s32.totalorder %s346, 3
      %s348 = scalar_select %p347, %s346, 3
      %s349 = smul.addr %s348, 8
      %s350 = scalar_lea.vmem %s10, %s349
      %s351 = smul.u32 2, %s21
      %p352 = scmp.lt.s32.totalorder %s351, 3
      %s353 = scalar_select %p352, %s351, 3
      %s354 = smul.addr %s353, 4
      %s355 = scalar_lea.vmem %s0, %s354
      %s356 = smul.u32 2, %s21
      %s357 = smul.u32 2, %s21
      %p358 = scmp.lt.s32.totalorder %s357, 3
      %s359 = scalar_select %p358, %s357, 3
      %s360 = smul.addr %s359, 8
      %s361 = scalar_lea.vmem %s10, %s360
      %s362 = smul.u32 2, %s21
      %v364 = vld [vmem:[%s355] sm:$0xf]
      %v365 = vld [vmem:[%s355 + $0x4] sm:$0xf]
      %v366 = vld [vmem:[%s1] sm:$0xf]
      %v367 = vld [vmem:[%s1 + $0x4] sm:$0xf]
      %v370 = vunpack.c.l.b16 %v366
      %v371 = vunpack.c.l.b16 %v367
      %v372 = vpack.c.b16 %v371, %v370
      %v375 = vunpack.c.l.b16 %v364
      %v376 = vunpack.c.l.b16 %v365
      %v377 = vpack.c.b16 %v376, %v375
      %vm379 = vcmask 130048
      %v381 = vsel %vm379, %v372, 0
      %383 = vmatprep.subr.bf16.mxu0 0
      %384 = vmatpush1.bf16.msra.mxu0 0
      %385 = vmatprep.subr.bf16.mxu0 0
      %386 = vmatpush1.bf16.msra.mxu0 0
      %387 = vmatprep.subr.bf16.mxu0 0
      %388 = vmatpush1.bf16.msra.mxu0 0
      %389 = vmatprep.subr.bf16.mxu0 0
      %390 = vmatpush1.bf16.msra.mxu0 0
      %391 = vmatprep.subr.bf16.mxu0 0
      %392 = vmatpush1.bf16.msra.mxu0 0
      %393 = vmatprep.subr.bf16.mxu0 0
      %394 = vmatpush1.bf16.msra.mxu0 0
      %395 = vmatprep.subr.bf16.mxu0 0
      %396 = vmatpush1.bf16.msra.mxu0 0
      %397 = vmatprep.subr.bf16.mxu0 0
      %398 = vmatpush1.bf16.msra.mxu0 %v377
      %399 = vmatprep.subr.bf16.mxu0 0
      %400 = vmatpush2.bf16.msra.mxu0 0
      %401 = vmatprep.subr.bf16.mxu0 0
      %402 = vmatpush2.bf16.msra.mxu0 0
      %403 = vmatprep.subr.bf16.mxu0 0
      %404 = vmatpush2.bf16.msra.mxu0 0
      %405 = vmatprep.subr.bf16.mxu0 0
      %406 = vmatpush2.bf16.msra.mxu0 0
      %407 = vmatprep.subr.bf16.mxu0 0
      %408 = vmatpush2.bf16.msra.mxu0 0
      %409 = vmatprep.subr.bf16.mxu0 0
      %410 = vmatpush2.bf16.msra.mxu0 0
      %411 = vmatprep.subr.bf16.mxu0 0
      %412 = vmatpush2.bf16.msra.mxu0 0
      %413 = vmatprep.subr.bf16.mxu0 0
      %414 = vmatpush2.bf16.msra.mxu0 0
      %415 = vmatprep.mubr.bf16.mxu0 0
      %416 = vmatmul.mubr.bf16.gmra.mxu0 %v381
      %v417 = vpop.f32.mrf.mxu0
      %v418 = vadd.f32 0.0, %v417
      %v419 = vpop.f32.mrf.mxu0
      %v420 = vpop.f32.mrf.mxu0
      %v421 = vadd.f32 0.0, %v420
      %v422 = vpop.f32.mrf.mxu0
      %423 = vdwg.mxu0
      %v424 = vpack.c.bf16 %v421, %v418
      %v425 = vld [vmem:[%s2] sm:$0xf]
      %v426 = vld [vmem:[%s2 + $0x4] sm:$0xf]
      %v427 = vld [vmem:[%s2 + $0x8] sm:$0xf]
      %v428 = vld [vmem:[%s2 + $0xc] sm:$0xf]
      %v429 = vld [vmem:[%s2 + $0x10] sm:$0xf]
      %v430 = vld [vmem:[%s2 + $0x14] sm:$0xf]
      %v431 = vld [vmem:[%s2 + $0x18] sm:$0xf]
      %v432 = vld [vmem:[%s2 + $0x1c] sm:$0xf]
      %s433 = scalar_lea.vmem %s1, 8
      %v434 = vld [vmem:[%s433] sm:$0xf]
      %v435 = vld [vmem:[%s433 + $0x4] sm:$0xf]
      %v438 = vunpack.c.l.b16 %v434
      %v439 = vunpack.c.l.b16 %v435
      %v440 = vpack.c.b16 %v439, %v438
      %v442 = vsel %vm379, %v440, 0
      %444 = vmatprep.subr.bf16.mxu0 0
      %445 = vmatpush1.bf16.msra.mxu0 0
      %446 = vmatprep.subr.bf16.mxu0 0
      %447 = vmatpush1.bf16.msra.mxu0 0
      %448 = vmatprep.subr.bf16.mxu0 0
      %449 = vmatpush1.bf16.msra.mxu0 0
      %450 = vmatprep.subr.bf16.mxu0 0
      %451 = vmatpush1.bf16.msra.mxu0 0
      %452 = vmatprep.subr.bf16.mxu0 0
      %453 = vmatpush1.bf16.msra.mxu0 0
      %454 = vmatprep.subr.bf16.mxu0 0
      %455 = vmatpush1.bf16.msra.mxu0 0
      %456 = vmatprep.subr.bf16.mxu0 0
      %457 = vmatpush1.bf16.msra.mxu0 0
      %458 = vmatprep.subr.bf16.mxu0 0
      %459 = vmatpush1.bf16.msra.mxu0 %v377
      %460 = vmatprep.subr.bf16.mxu0 0
      %461 = vmatpush2.bf16.msra.mxu0 0
      %462 = vmatprep.subr.bf16.mxu0 0
      %463 = vmatpush2.bf16.msra.mxu0 0
      %464 = vmatprep.subr.bf16.mxu0 0
      %465 = vmatpush2.bf16.msra.mxu0 0
      %466 = vmatprep.subr.bf16.mxu0 0
      %467 = vmatpush2.bf16.msra.mxu0 0
      %468 = vmatprep.subr.bf16.mxu0 0
      %469 = vmatpush2.bf16.msra.mxu0 0
      %470 = vmatprep.subr.bf16.mxu0 0
      %471 = vmatpush2.bf16.msra.mxu0 0
      %472 = vmatprep.subr.bf16.mxu0 0
      %473 = vmatpush2.bf16.msra.mxu0 0
      %474 = vmatprep.subr.bf16.mxu0 0
      %475 = vmatpush2.bf16.msra.mxu0 0
      %476 = vmatprep.mubr.bf16.mxu0 0
      %477 = vmatmul.mubr.bf16.gmra.mxu0 %v442
      %v478 = vpop.f32.mrf.mxu0
      %v479 = vadd.f32 0.0, %v478
      %v480 = vpop.f32.mrf.mxu0
      %v481 = vpop.f32.mrf.mxu0
      %v482 = vadd.f32 0.0, %v481
      %v483 = vpop.f32.mrf.mxu0
      %484 = vdwg.mxu0
      %v485 = vpack.c.bf16 %v482, %v479
      %s486 = scalar_lea.vmem %s2, 32
      %v487 = vld [vmem:[%s486] sm:$0xf]
      %v488 = vld [vmem:[%s486 + $0x4] sm:$0xf]
      %v489 = vld [vmem:[%s486 + $0x8] sm:$0xf]
      %v490 = vld [vmem:[%s486 + $0xc] sm:$0xf]
      %v491 = vld [vmem:[%s486 + $0x10] sm:$0xf]
      %v492 = vld [vmem:[%s486 + $0x14] sm:$0xf]
      %v493 = vld [vmem:[%s486 + $0x18] sm:$0xf]
      %v494 = vld [vmem:[%s486 + $0x1c] sm:$0xf]
      %v503 = vunpack.c.l.b16 %v487
      %v504 = vunpack.c.l.b16 %v488
      %v505 = vunpack.c.l.b16 %v489
      %v506 = vunpack.c.l.b16 %v490
      %v507 = vunpack.c.l.b16 %v491
      %v508 = vunpack.c.l.b16 %v492
      %v509 = vunpack.c.l.b16 %v493
      %v510 = vunpack.c.l.b16 %v494
      %v511 = vpack.c.b16 %v504, %v503
      %v512 = vpack.c.b16 %v506, %v505
      %v513 = vpack.c.b16 %v508, %v507
      %v514 = vpack.c.b16 %v510, %v509
      %vm519 = vcmask 523264
      %v521 = vsel %vm519, %v485, 0
      %523 = vmatprep.subr.bf16.mxu0 0
      %524 = vmatpush1.bf16.msra.mxu0 0
      %525 = vmatprep.subr.bf16.mxu0 0
      %526 = vmatpush1.bf16.msra.mxu0 0
      %527 = vmatprep.subr.bf16.mxu0 0
      %528 = vmatpush1.bf16.msra.mxu0 0
      %529 = vmatprep.subr.bf16.mxu0 0
      %530 = vmatpush1.bf16.msra.mxu0 0
      %531 = vmatprep.subr.bf16.mxu0 0
      %532 = vmatpush1.bf16.msra.mxu0 %v514
      %533 = vmatprep.subr.bf16.mxu0 0
      %534 = vmatpush1.bf16.msra.mxu0 %v513
      %535 = vmatprep.subr.bf16.mxu0 0
      %536 = vmatpush1.bf16.msra.mxu0 %v512
      %537 = vmatprep.subr.bf16.mxu0 0
      %538 = vmatpush1.bf16.msra.mxu0 %v511
      %539 = vmatprep.subr.bf16.mxu0 0
      %540 = vmatpush2.bf16.msra.mxu0 0
      %541 = vmatprep.subr.bf16.mxu0 0
      %542 = vmatpush2.bf16.msra.mxu0 0
      %543 = vmatprep.subr.bf16.mxu0 0
      %544 = vmatpush2.bf16.msra.mxu0 0
      %545 = vmatprep.subr.bf16.mxu0 0
      %546 = vmatpush2.bf16.msra.mxu0 0
      %547 = vmatprep.subr.bf16.mxu0 0
      %548 = vmatpush2.bf16.msra.mxu0 0
      %549 = vmatprep.subr.bf16.mxu0 0
      %550 = vmatpush2.bf16.msra.mxu0 0
      %551 = vmatprep.subr.bf16.mxu0 0
      %552 = vmatpush2.bf16.msra.mxu0 0
      %553 = vmatprep.subr.bf16.mxu0 0
      %554 = vmatpush2.bf16.msra.mxu0 0
      %555 = vmatprep.mubr.bf16.mxu0 0
      %556 = vmatmul.mubr.bf16.gmra.mxu0 %v521
      %v557 = vpop.f32.mrf.mxu0
      %v558 = vadd.f32 0.0, %v557
      %v559 = vpop.f32.mrf.mxu0
      %v560 = vpop.f32.mrf.mxu0
      %v561 = vadd.f32 0.0, %v560
      %v562 = vpop.f32.mrf.mxu0
      %563 = vdwg.mxu0
      %v572 = vunpack.c.l.b16 %v425
      %v573 = vunpack.c.l.b16 %v426
      %v574 = vunpack.c.l.b16 %v427
      %v575 = vunpack.c.l.b16 %v428
      %v576 = vunpack.c.l.b16 %v429
      %v577 = vunpack.c.l.b16 %v430
      %v578 = vunpack.c.l.b16 %v431
      %v579 = vunpack.c.l.b16 %v432
      %v580 = vpack.c.b16 %v573, %v572
      %v581 = vpack.c.b16 %v575, %v574
      %v582 = vpack.c.b16 %v577, %v576
      %v583 = vpack.c.b16 %v579, %v578
      %v589 = vsel %vm519, %v424, 0
      %591 = vmatprep.subr.bf16.mxu0 0
      %592 = vmatpush1.bf16.msra.mxu0 0
      %593 = vmatprep.subr.bf16.mxu0 0
      %594 = vmatpush1.bf16.msra.mxu0 0
      %595 = vmatprep.subr.bf16.mxu0 0
      %596 = vmatpush1.bf16.msra.mxu0 0
      %597 = vmatprep.subr.bf16.mxu0 0
      %598 = vmatpush1.bf16.msra.mxu0 0
      %599 = vmatprep.subr.bf16.mxu0 0
      %600 = vmatpush1.bf16.msra.mxu0 %v583
      %601 = vmatprep.subr.bf16.mxu0 0
      %602 = vmatpush1.bf16.msra.mxu0 %v582
      %603 = vmatprep.subr.bf16.mxu0 0
      %604 = vmatpush1.bf16.msra.mxu0 %v581
      %605 = vmatprep.subr.bf16.mxu0 0
      %606 = vmatpush1.bf16.msra.mxu0 %v580
      %607 = vmatprep.subr.bf16.mxu0 0
      %608 = vmatpush2.bf16.msra.mxu0 0
      %609 = vmatprep.subr.bf16.mxu0 0
      %610 = vmatpush2.bf16.msra.mxu0 0
      %611 = vmatprep.subr.bf16.mxu0 0
      %612 = vmatpush2.bf16.msra.mxu0 0
      %613 = vmatprep.subr.bf16.mxu0 0
      %614 = vmatpush2.bf16.msra.mxu0 0
      %615 = vmatprep.subr.bf16.mxu0 0
      %616 = vmatpush2.bf16.msra.mxu0 0
      %617 = vmatprep.subr.bf16.mxu0 0
      %618 = vmatpush2.bf16.msra.mxu0 0
      %619 = vmatprep.subr.bf16.mxu0 0
      %620 = vmatpush2.bf16.msra.mxu0 0
      %621 = vmatprep.subr.bf16.mxu0 0
      %622 = vmatpush2.bf16.msra.mxu0 0
      %623 = vmatprep.mubr.bf16.mxu0 0
      %624 = vmatmul.mubr.bf16.gmra.mxu0 %v589
      %v625 = vpop.f32.mrf.mxu0
      %v626 = vadd.f32 %v558, %v625
      %v627 = vpop.f32.mrf.mxu0
      %v628 = vpop.f32.mrf.mxu0
      %v629 = vadd.f32 %v561, %v628
      %v630 = vpop.f32.mrf.mxu0
      %631 = vdwg.mxu0
      %s632 = scalar_lea.vmem %s1, 16
      %v633 = vld [vmem:[%s632] sm:$0xf]
      %v634 = vld [vmem:[%s632 + $0x4] sm:$0xf]
      %v637 = vunpack.c.l.b16 %v633
      %v638 = vunpack.c.l.b16 %v634
      %v639 = vpack.c.b16 %v638, %v637
      %v641 = vsel %vm379, %v639, 0
      %643 = vmatprep.subr.bf16.mxu0 0
      %644 = vmatpush1.bf16.msra.mxu0 0
      %645 = vmatprep.subr.bf16.mxu0 0
      %646 = vmatpush1.bf16.msra.mxu0 0
      %647 = vmatprep.subr.bf16.mxu0 0
      %648 = vmatpush1.bf16.msra.mxu0 0
      %649 = vmatprep.subr.bf16.mxu0 0
      %650 = vmatpush1.bf16.msra.mxu0 0
      %651 = vmatprep.subr.bf16.mxu0 0
      %652 = vmatpush1.bf16.msra.mxu0 0
      %653 = vmatprep.subr.bf16.mxu0 0
      %654 = vmatpush1.bf16.msra.mxu0 0
      %655 = vmatprep.subr.bf16.mxu0 0
      %656 = vmatpush1.bf16.msra.mxu0 0
      %657 = vmatprep.subr.bf16.mxu0 0
      %658 = vmatpush1.bf16.msra.mxu0 %v377
      %659 = vmatprep.subr.bf16.mxu0 0
      %660 = vmatpush2.bf16.msra.mxu0 0
      %661 = vmatprep.subr.bf16.mxu0 0
      %662 = vmatpush2.bf16.msra.mxu0 0
      %663 = vmatprep.subr.bf16.mxu0 0
      %664 = vmatpush2.bf16.msra.mxu0 0
      %665 = vmatprep.subr.bf16.mxu0 0
      %666 = vmatpush2.bf16.msra.mxu0 0
      %667 = vmatprep.subr.bf16.mxu0 0
      %668 = vmatpush2.bf16.msra.mxu0 0
      %669 = vmatprep.subr.bf16.mxu0 0
      %670 = vmatpush2.bf16.msra.mxu0 0
      %671 = vmatprep.subr.bf16.mxu0 0
      %672 = vmatpush2.bf16.msra.mxu0 0
      %673 = vmatprep.subr.bf16.mxu0 0
      %674 = vmatpush2.bf16.msra.mxu0 0
      %675 = vmatprep.mubr.bf16.mxu0 0
      %676 = vmatmul.mubr.bf16.gmra.mxu0 %v641
      %v677 = vpop.f32.mrf.mxu0
      %v678 = vadd.f32 0.0, %v677
      %v679 = vpop.f32.mrf.mxu0
      %v680 = vpop.f32.mrf.mxu0
      %v681 = vadd.f32 0.0, %v680
      %v682 = vpop.f32.mrf.mxu0
      %683 = vdwg.mxu0
      %v684 = vpack.c.bf16 %v681, %v678
      %s685 = scalar_lea.vmem %s2, 64
      %v686 = vld [vmem:[%s685] sm:$0xf]
      %v687 = vld [vmem:[%s685 + $0x4] sm:$0xf]
      %v688 = vld [vmem:[%s685 + $0x8] sm:$0xf]
      %v689 = vld [vmem:[%s685 + $0xc] sm:$0xf]
      %v690 = vld [vmem:[%s685 + $0x10] sm:$0xf]
      %v691 = vld [vmem:[%s685 + $0x14] sm:$0xf]
      %v692 = vld [vmem:[%s685 + $0x18] sm:$0xf]
      %v693 = vld [vmem:[%s685 + $0x1c] sm:$0xf]
      %v702 = vunpack.c.l.b16 %v686
      %v703 = vunpack.c.l.b16 %v687
      %v704 = vunpack.c.l.b16 %v688
      %v705 = vunpack.c.l.b16 %v689
      %v706 = vunpack.c.l.b16 %v690
      %v707 = vunpack.c.l.b16 %v691
      %v708 = vunpack.c.l.b16 %v692
      %v709 = vunpack.c.l.b16 %v693
      %v710 = vpack.c.b16 %v703, %v702
      %v711 = vpack.c.b16 %v705, %v704
      %v712 = vpack.c.b16 %v707, %v706
      %v713 = vpack.c.b16 %v709, %v708
      %v719 = vsel %vm519, %v684, 0
      %721 = vmatprep.subr.bf16.mxu0 0
      %722 = vmatpush1.bf16.msra.mxu0 0
      %723 = vmatprep.subr.bf16.mxu0 0
      %724 = vmatpush1.bf16.msra.mxu0 0
      %725 = vmatprep.subr.bf16.mxu0 0
      %726 = vmatpush1.bf16.msra.mxu0 0
      %727 = vmatprep.subr.bf16.mxu0 0
      %728 = vmatpush1.bf16.msra.mxu0 0
      %729 = vmatprep.subr.bf16.mxu0 0
      %730 = vmatpush1.bf16.msra.mxu0 %v713
      %731 = vmatprep.subr.bf16.mxu0 0
      %732 = vmatpush1.bf16.msra.mxu0 %v712
      %733 = vmatprep.subr.bf16.mxu0 0
      %734 = vmatpush1.bf16.msra.mxu0 %v711
      %735 = vmatprep.subr.bf16.mxu0 0
      %736 = vmatpush1.bf16.msra.mxu0 %v710
      %737 = vmatprep.subr.bf16.mxu0 0
      %738 = vmatpush2.bf16.msra.mxu0 0
      %739 = vmatprep.subr.bf16.mxu0 0
      %740 = vmatpush2.bf16.msra.mxu0 0
      %741 = vmatprep.subr.bf16.mxu0 0
      %742 = vmatpush2.bf16.msra.mxu0 0
      %743 = vmatprep.subr.bf16.mxu0 0
      %744 = vmatpush2.bf16.msra.mxu0 0
      %745 = vmatprep.subr.bf16.mxu0 0
      %746 = vmatpush2.bf16.msra.mxu0 0
      %747 = vmatprep.subr.bf16.mxu0 0
      %748 = vmatpush2.bf16.msra.mxu0 0
      %749 = vmatprep.subr.bf16.mxu0 0
      %750 = vmatpush2.bf16.msra.mxu0 0
      %751 = vmatprep.subr.bf16.mxu0 0
      %752 = vmatpush2.bf16.msra.mxu0 0
      %753 = vmatprep.mubr.bf16.mxu0 0
      %754 = vmatmul.mubr.bf16.gmra.mxu0 %v719
      %v755 = vpop.f32.mrf.mxu0
      %v756 = vadd.f32 0.0, %v755
      %v757 = vpop.f32.mrf.mxu0
      %v758 = vpop.f32.mrf.mxu0
      %v759 = vadd.f32 0.0, %v758
      %v760 = vpop.f32.mrf.mxu0
      %761 = vdwg.mxu0
      %v762 = vadd.f32 %v626, %v756
      %v763 = vadd.f32 %v629, %v759
      %v764 = vld [vmem:[%s3] sm:$0x1]
      %v766 = vlaneseq
      %v767 = vshrl.u32 %v766, 7
      %v768 = vsub.s32 0, %v767
      %v769 = vrot.slane %v764, %v768
      %v771 = vadd.f32 %v762, %v769
      %v772 = vadd.f32 %v763, %v769
      %v773 = vmax.f32 %v771, 0.0
      %v774 = vmax.f32 %v772, 0.0
      %v775 = vpack.c.bf16 %v774, %v773
      %v776 = vld [vmem:[%s8] sm:$0x1]
      %v778 = vsel %vm379, %v776, 0
      %780 = vmatprep.subr.bf16.mxu0 0
      %781 = vmatpush1.bf16.msra.mxu0 0
      %782 = vmatprep.subr.bf16.mxu0 0
      %783 = vmatpush1.bf16.msra.mxu0 0
      %784 = vmatprep.subr.bf16.mxu0 0
      %785 = vmatpush1.bf16.msra.mxu0 0
      %786 = vmatprep.subr.bf16.mxu0 0
      %787 = vmatpush1.bf16.msra.mxu0 0
      %788 = vmatprep.subr.bf16.mxu0 0
      %789 = vmatpush1.bf16.msra.mxu0 0
      %790 = vmatprep.subr.bf16.mxu0 0
      %791 = vmatpush1.bf16.msra.mxu0 0
      %792 = vmatprep.subr.bf16.mxu0 0
      %793 = vmatpush1.bf16.msra.mxu0 0
      %794 = vmatprep.subr.bf16.mxu0 0
      %795 = vmatpush1.bf16.msra.mxu0 %v775
      %796 = vmatprep.subr.bf16.mxu0 0
      %797 = vmatpush2.bf16.msra.mxu0 0
      %798 = vmatprep.subr.bf16.mxu0 0
      %799 = vmatpush2.bf16.msra.mxu0 0
      %800 = vmatprep.subr.bf16.mxu0 0
      %801 = vmatpush2.bf16.msra.mxu0 0
      %802 = vmatprep.subr.bf16.mxu0 0
      %803 = vmatpush2.bf16.msra.mxu0 0
      %804 = vmatprep.subr.bf16.mxu0 0
      %805 = vmatpush2.bf16.msra.mxu0 0
      %806 = vmatprep.subr.bf16.mxu0 0
      %807 = vmatpush2.bf16.msra.mxu0 0
      %808 = vmatprep.subr.bf16.mxu0 0
      %809 = vmatpush2.bf16.msra.mxu0 0
      %810 = vmatprep.subr.bf16.mxu0 0
      %811 = vmatpush2.bf16.msra.mxu0 0
      %812 = vmatprep.mubr.bf16.mxu0 0
      %813 = vmatmul.mubr.bf16.gmra.mxu0 %v778
      %v814 = vpop.f32.mrf.mxu0
      %v815 = vadd.f32 0.0, %v814
      %v816 = vpop.f32.mrf.mxu0
      %v817 = vpop.f32.mrf.mxu0
      %v818 = vpop.f32.mrf.mxu0
      %819 = vdwg.mxu0
      %v820 = vpack.c.bf16 %v815, %v815
      %v821 = vld [vmem:[%s4] sm:$0xf]
      %v822 = vld [vmem:[%s4 + $0x4] sm:$0xf]
      %v823 = vld [vmem:[%s4 + $0x8] sm:$0xf]
      %v824 = vld [vmem:[%s4 + $0xc] sm:$0xf]
      %v825 = vld [vmem:[%s4 + $0x10] sm:$0xf]
      %v826 = vld [vmem:[%s4 + $0x14] sm:$0xf]
      %v827 = vld [vmem:[%s4 + $0x18] sm:$0xf]
      %v828 = vld [vmem:[%s4 + $0x1c] sm:$0xf]
      %v829 = vld [vmem:[%s4 + $0x20] sm:$0xf]
      %v830 = vld [vmem:[%s4 + $0x24] sm:$0xf]
      %v831 = vld [vmem:[%s4 + $0x28] sm:$0xf]
      %v832 = vld [vmem:[%s4 + $0x2c] sm:$0xf]
      %v833 = vld [vmem:[%s4 + $0x30] sm:$0xf]
      %v834 = vld [vmem:[%s4 + $0x34] sm:$0xf]
      %v835 = vld [vmem:[%s4 + $0x38] sm:$0xf]
      %v836 = vld [vmem:[%s4 + $0x3c] sm:$0xf]
      %v853 = vunpack.c.l.b16 %v821
      %v854 = vunpack.c.l.b16 %v822
      %v855 = vunpack.c.l.b16 %v823
      %v856 = vunpack.c.l.b16 %v824
      %v857 = vunpack.c.l.b16 %v825
      %v858 = vunpack.c.l.b16 %v826
      %v859 = vunpack.c.l.b16 %v827
      %v860 = vunpack.c.l.b16 %v828
      %v861 = vunpack.c.l.b16 %v829
      %v862 = vunpack.c.l.b16 %v830
      %v863 = vunpack.c.l.b16 %v831
      %v864 = vunpack.c.l.b16 %v832
      %v865 = vunpack.c.l.b16 %v833
      %v866 = vunpack.c.l.b16 %v834
      %v867 = vunpack.c.l.b16 %v835
      %v868 = vunpack.c.l.b16 %v836
      %v869 = vpack.c.b16 %v854, %v853
      %v870 = vpack.c.b16 %v856, %v855
      %v871 = vpack.c.b16 %v858, %v857
      %v872 = vpack.c.b16 %v860, %v859
      %v873 = vpack.c.b16 %v862, %v861
      %v874 = vpack.c.b16 %v864, %v863
      %v875 = vpack.c.b16 %v866, %v865
      %v876 = vpack.c.b16 %v868, %v867
      %885 = vmatprep.subr.bf16.mxu0 0
      %886 = vmatpush1.bf16.msra.mxu0 %v876
      %887 = vmatprep.subr.bf16.mxu0 0
      %888 = vmatpush1.bf16.msra.mxu0 %v875
      %889 = vmatprep.subr.bf16.mxu0 0
      %890 = vmatpush1.bf16.msra.mxu0 %v874
      %891 = vmatprep.subr.bf16.mxu0 0
      %892 = vmatpush1.bf16.msra.mxu0 %v873
      %893 = vmatprep.subr.bf16.mxu0 0
      %894 = vmatpush1.bf16.msra.mxu0 %v872
      %895 = vmatprep.subr.bf16.mxu0 0
      %896 = vmatpush1.bf16.msra.mxu0 %v871
      %897 = vmatprep.subr.bf16.mxu0 0
      %898 = vmatpush1.bf16.msra.mxu0 %v870
      %899 = vmatprep.subr.bf16.mxu0 0
      %900 = vmatpush1.bf16.msra.mxu0 %v869
      %901 = vmatprep.subr.bf16.mxu0 0
      %902 = vmatpush2.bf16.msra.mxu0 0
      %903 = vmatprep.subr.bf16.mxu0 0
      %904 = vmatpush2.bf16.msra.mxu0 0
      %905 = vmatprep.subr.bf16.mxu0 0
      %906 = vmatpush2.bf16.msra.mxu0 0
      %907 = vmatprep.subr.bf16.mxu0 0
      %908 = vmatpush2.bf16.msra.mxu0 0
      %909 = vmatprep.subr.bf16.mxu0 0
      %910 = vmatpush2.bf16.msra.mxu0 0
      %911 = vmatprep.subr.bf16.mxu0 0
      %912 = vmatpush2.bf16.msra.mxu0 0
      %913 = vmatprep.subr.bf16.mxu0 0
      %914 = vmatpush2.bf16.msra.mxu0 0
      %915 = vmatprep.subr.bf16.mxu0 0
      %916 = vmatpush2.bf16.msra.mxu0 0
      %917 = vmatprep.mubr.bf16.mxu0 0
      %918 = vmatmul.mubr.bf16.gmra.mxu0 %v820
      %v919 = vpop.f32.mrf.mxu0
      %v920 = vadd.f32 0.0, %v919
      %v921 = vpop.f32.mrf.mxu0
      %v922 = vpop.f32.mrf.mxu0
      %v923 = vpop.f32.mrf.mxu0
      %924 = vdwg.mxu0
      %v925 = vmul.f32 %v920, 0.00390625
      %v926 = vld [vmem:[%s5] sm:$0x1]
      %v927 = vadd.f32 %v925, %v926
      %v928 = vmax.f32 %v927, 0.0
      %v929 = vpack.c.bf16 %v928, %v928
      %v930 = vld [vmem:[%s6] sm:$0x1]
      %v931 = vld [vmem:[%s7] sm:$0x1]
      %vm932 = vcmask 15360
      %v934 = vsel %vm932, %v929, 0
      %vm936 = vcmask 1040384
      %v938 = vsel %vm936, %v930, 0
      %940 = vmatprep.subr.bf16.mxu0 0
      %941 = vmatpush1.bf16.msra.mxu0 0
      %942 = vmatprep.subr.bf16.mxu0 0
      %943 = vmatpush1.bf16.msra.mxu0 0
      %944 = vmatprep.subr.bf16.mxu0 0
      %945 = vmatpush1.bf16.msra.mxu0 0
      %946 = vmatprep.subr.bf16.mxu0 0
      %947 = vmatpush1.bf16.msra.mxu0 0
      %948 = vmatprep.subr.bf16.mxu0 0
      %949 = vmatpush1.bf16.msra.mxu0 0
      %950 = vmatprep.subr.bf16.mxu0 0
      %951 = vmatpush1.bf16.msra.mxu0 0
      %952 = vmatprep.subr.bf16.mxu0 0
      %953 = vmatpush1.bf16.msra.mxu0 0
      %954 = vmatprep.subr.bf16.mxu0 0
      %955 = vmatpush1.bf16.msra.mxu0 %v938
      %956 = vmatprep.subr.bf16.mxu0 0
      %957 = vmatpush2.bf16.msra.mxu0 0
      %958 = vmatprep.subr.bf16.mxu0 0
      %959 = vmatpush2.bf16.msra.mxu0 0
      %960 = vmatprep.subr.bf16.mxu0 0
      %961 = vmatpush2.bf16.msra.mxu0 0
      %962 = vmatprep.subr.bf16.mxu0 0
      %963 = vmatpush2.bf16.msra.mxu0 0
      %964 = vmatprep.subr.bf16.mxu0 0
      %965 = vmatpush2.bf16.msra.mxu0 0
      %966 = vmatprep.subr.bf16.mxu0 0
      %967 = vmatpush2.bf16.msra.mxu0 0
      %968 = vmatprep.subr.bf16.mxu0 0
      %969 = vmatpush2.bf16.msra.mxu0 0
      %970 = vmatprep.subr.bf16.mxu0 0
      %971 = vmatpush2.bf16.msra.mxu0 0
      %972 = vmatprep.mubr.bf16.mxu0 0
      %973 = vmatmul.mubr.bf16.gmra.mxu0 %v934
      %v974 = vpop.f32.mrf.mxu0
      %v975 = vadd.f32 %v931, %v974
      %v976 = vpop.f32.mrf.mxu0
      %v977 = vpop.f32.mrf.mxu0
      %v978 = vpop.f32.mrf.mxu0
      %979 = vdwg.mxu0
      %v980 = vxor.u32 %v975, 2147483648
      %v981 = vmul.f32 %v980, 1.442695
      %v982 = vpow.pop %v981
      %v983 = vadd.f32 %v982, 1.0
      %v984 = vrcp.pop %v983
      %v985 = vmul.f32 1.0, %v984
      %v986 = vlaneseq
      %v987 = vshrl.u32 %v986, 7
      %v988 = vsub.s32 0, %v987
      %v989 = vrot.slane %v985, %v988
      %v990 = vmul.f32 %v773, %v989
      %v991 = vmul.f32 %v774, %v989
      %992 = vst [vmem:[%s361] sm:$0xff] %v990
      %993 = vst [vmem:[%s361 + $0x8] sm:$0xff] %v991
      %s994 = smul.u32 2, %s21
      %p995 = scmp.lt.s32.totalorder %s994, 3
      %s996 = scalar_select %p995, %s994, 3
      %s997 = smul.addr %s996, 8
      %s998 = scalar_lea.vmem %s10, %s997
      // Predicated region
      $region61: #{depthwise_forward_nhwc.1} parent=59 // pred_check
        %p999 = pneg %p254
      $region62: #{depthwise_forward_nhwc.1} parent=59 // pred_check_branch
        %1001 = sbr.rel (%p999) target = $region64
      $region63: #{depthwise_forward_nhwc.1} parent=59 // pred_region
        %s1002 = smul.u32 2, %s21
      $region64: #{depthwise_forward_nhwc.1} parent=59 // pred_fallthru
        _
    $region60: #{depthwise_forward_nhwc.1} parent=5 // pred_fallthru
      _
    %p1003 = scmp.le.s32.totalorder 2, %s16
    // Predicated region
    $region65: #{depthwise_forward_nhwc.1} parent=5 // pred_check
      %p1004 = pneg %p1003
    $region66: #{depthwise_forward_nhwc.1} parent=5 // pred_check_branch
      %1006 = sbr.rel (%p1004) target = $region68
    $region67: #{depthwise_forward_nhwc.1} parent=5 // pred_region
      %s1007 = ssub.s32 %s16, 2
      // Predicated region
      $region69: #{depthwise_forward_nhwc.1} parent=67 // pred_check
        %p1008 = pneg %p260
      $region70: #{depthwise_forward_nhwc.1} parent=67 // pred_check_branch
        %1010 = sbr.rel (%p1008) target = $region72
      $region71: #{depthwise_forward_nhwc.1} parent=67 // pred_region
        %s1011 = smul.u32 2, %s22
        %p1012 = scmp.lt.s32.totalorder %s1011, 3
        %s1013 = scalar_select %p1012, %s1011, 3
        %s1014 = smul.addr %s1013, 8
        %s1015 = scalar_lea.vmem %s10, %s1014
      $region72: #{depthwise_forward_nhwc.1} parent=67 // pred_fallthru
        _
    $region68: #{depthwise_forward_nhwc.1} parent=5 // pred_fallthru
      _
  $region6: #{depthwise_forward_nhwc.1} parent=0 // loop_footer
    %s20 = sadd.s32 1, %s16
  $region7: #{depthwise_forward_nhwc.1} parent=0 // loop_footer_branch
    %15 = sbr.rel target = $region3
  $region8: #{depthwise_forward_nhwc.1} parent=0 // loop_exit
    _

</llo_original>
